<compile_context>
chip_gen: v5e
topology: v5e:2x2
jax: 0.10.0
libtpu: 0.0.40
codegen_flags: <defaults>
</compile_context>

<pallas_src>
import functools
import math

import jax
import jax.numpy as jnp
from jax import lax
from jax.experimental import pallas as pl
from jax.experimental.pallas import tpu as pltpu

K = 15             # kernel size used by every conv in WavEncoder
BN_EPS = 1e-5      # PyTorch BatchNorm1d default
NEG_SLOPE = 0.01   # PyTorch LeakyReLU default
HALO = 8           # conv1 rows recomputed on each side of a tile (>= K//2)
R_MAX = 256        # output rows per grid step (sized for v7x 64 MiB VMEM)

# (in_ch, out_ch, stride, padding) for the six BasicBlocks
CONFIGS = [
    (1, 32, 5, 1600),
    (32, 32, 6, 0),
    (32, 32, 1, 7),
    (32, 64, 6, 0),
    (64, 64, 1, 7),
    (64, 128, 6, 0),
]


def _round_up(a, b):
    return ((a + b - 1) // b) * b


def _leaky(y):
    return jnp.where(y >= 0, y, NEG_SLOPE * y)


# ----------------------------------------------------------------------------
# Pallas kernel: one fused BasicBlock for one (batch, row-tile) grid point
# ----------------------------------------------------------------------------
def _block_kernel(x_ref, w1_ref, s1_ref, w2_ref, s2_ref, o_ref, h_ref,
                  *, planes, l_h, R, grouped):
    """Fused conv1+bn1+act1, optional downsample conv+bn, conv2+bn2+res+act2.

    grouped=True  (strided blocks 1,2,4,6; downsample shortcut):
      x_ref : (G, stride*Cin) zero-padded input, rows grouped by stride
      w1_ref: (3, stride*Cin, 2*planes) conv1 || downsample (BN-folded)
      s1_ref: (1, 2*planes)             bn1 shift || ds-bn shift
    grouped=False (stride-1 blocks 3,5; identity shortcut):
      x_ref : (G, planes);  w1_ref: (K, planes, planes);  s1_ref: (1, planes)
    w2_ref: (K, planes, planes) conv2 (BN-folded);  s2_ref: (1, planes)
    o_ref : (R, planes);  h_ref: (R + 2*HALO, planes) bf16 VMEM scratch
    """
    t = pl.program_id(1)
    row0 = pl.multiple_of(t * R, 8)
    RH = R + 2 * HALO

    # ---- conv1 (+ downsample) over output rows [t*R - HALO, t*R + R + HALO) --
    if grouped:
        acc = jnp.zeros((RH, 2 * planes), jnp.float32)
        for j in range(3):            # 3 stride-row groups cover all 15 taps
            xj = x_ref[pl.ds(row0 + j, RH), :]
            acc = acc + jnp.dot(xj, w1_ref[j], preferred_element_type=jnp.float32)
        acc = acc + s1_ref[...]
        h_pre = acc[:, :planes]                     # conv1 + bn1
        shortcut = acc[HALO:HALO + R, planes:]      # downsample conv + bn
    else:
        acc = jnp.zeros((RH, planes), jnp.float32)
        for k in range(K):
            xk = x_ref[pl.ds(row0 + k, RH), :]
            acc = acc + jnp.dot(xk, w1_ref[k], preferred_element_type=jnp.float32)
        h_pre = acc + s1_ref[...]
        # identity shortcut: the original input rows of this tile
        shortcut = x_ref[pl.ds(row0 + HALO + K // 2, R), :].astype(jnp.float32)

    # zero h rows outside [0, l_h): conv2's zero-padding semantics at the edges
    gi = (row0 - HALO) + lax.broadcasted_iota(jnp.int32, (RH, 1), 0)
    h = jnp.where(jnp.logical_and(gi >= 0, gi < l_h), _leaky(h_pre), 0.0)
    h_ref[...] = h.astype(h_ref.dtype)

    # ---- conv2 (stride 1, padding K//2) + bn2 + residual + act2 --------------
    acc2 = jnp.zeros((R, planes), jnp.float32)
    for k in range(K):
        acc2 = acc2 + jnp.dot(h_ref[k + HALO - K // 2:k + HALO - K // 2 + R, :],
                              w2_ref[k], preferred_element_type=jnp.float32)
    out = _leaky(acc2 + s2_ref[...] + shortcut)

    # zero padded tail rows (m >= l_h) so no garbage can ever flow downstream
    oi = row0 + lax.broadcasted_iota(jnp.int32, (R, 1), 0)
    o_ref[...] = jnp.where(oi < l_h, out, 0.0).astype(o_ref.dtype)


# ----------------------------------------------------------------------------
# Wrapper: padding + free stride-grouping reshape + pallas_call per BasicBlock
# ----------------------------------------------------------------------------
def _const_index(ndim):
    return lambda b, t: (0,) * ndim


def _run_block(x, blk, *, out_dtype):
    """x: (B, L_in, Cin) channels-last, true channel width. -> (B, l_out, planes)."""
    B, L_in, cin = x.shape
    s, pad1, planes = blk["stride"], blk["pad"], blk["planes"]
    grouped = "wg" in blk

    l_h = (L_in + 2 * pad1 - K) // s + 1          # block output length
    assert l_h >= 1
    R = min(_round_up(l_h, 8), R_MAX)             # output rows per grid step
    n_tiles = int(pl.cdiv(l_h, R))
    RH = R + 2 * HALO
    # groups read per step: RH rows x (3 stride-groups | 15 taps) start offsets
    win = _round_up(RH + (2 if grouped else K - 1), 8)
    G = (n_tiles - 1) * R + win                   # stored input row-groups
    front = HALO * s + pad1                       # leading zeros: halo + conv pad

    xs = jnp.pad(x, ((0, 0), (front, G * s - front - L_in), (0, 0)))
    xg = xs.reshape(B, G, s * cin)                # free row-major regrouping

    if grouped:
        w_args = (blk["wg"], blk["sg"], blk["w2"], blk["s2"])
    else:
        w_args = (blk["w1"], blk["s1"], blk["w2"], blk["s2"])

    kernel = functools.partial(_block_kernel, planes=planes, l_h=l_h, R=R,
                               grouped=grouped)
    out = pl.pallas_call(
        kernel,
        out_shape=jax.ShapeDtypeStruct((B, n_tiles * R, planes), out_dtype),
        grid=(B, n_tiles),
        in_specs=[pl.BlockSpec((None, G, s * cin), lambda b, t: (b, 0, 0))]
        + [pl.BlockSpec(w.shape, _const_index(w.ndim)) for w in w_args],
        out_specs=pl.BlockSpec((None, R, planes), lambda b, t: (b, t, 0)),
        scratch_shapes=[pltpu.VMEM((RH, planes), jnp.bfloat16)],
        compiler_params=pltpu.CompilerParams(
            dimension_semantics=("parallel", "parallel"),
            vmem_limit_bytes=48 * 1024 * 1024),
    )(xg, *w_args)
    return out[:, :l_h, :]


def wav_encoder_forward(wav, blocks):
    # wav: (B, T).  PyTorch unsqueeze(1) == channels-last (B, T, 1) here.
    x = wav[:, :, None].astype(jnp.float32)
    for i, blk in enumerate(blocks):
        last = i == len(blocks) - 1
        x = _run_block(x, blk, out_dtype=jnp.float32 if last else jnp.bfloat16)
    # PyTorch: out.transpose(1, 2) -> (B, L_out, 128).  Already in that layout.
    return x


# ----------------------------------------------------------------------------
# Parameter preparation: fold eval-mode BN, group taps by stride, fuse conv1||ds
# ----------------------------------------------------------------------------
def _fold_conv_bn(w, b, gamma, beta, mean, var):
    """(Cout, Cin, K) torch conv + eval-mode BN -> ((K, Cin, Cout), (Cout,))."""
    scale = gamma / jnp.sqrt(var + BN_EPS)
    shift = (b - mean) * scale + beta
    wf = jnp.transpose(w, (2, 1, 0)) * scale[None, None, :]
    return wf, shift


def prepare_blocks(params):
    blocks = []
    for (cin, cout, stride, pad), p in zip(CONFIGS, params):
        has_ds = stride != 1 or cin != cout
        assert has_ds == (stride != 1), "stride-1 blocks must use identity shortcut"
        mm_dtype = jnp.float32 if cin == 1 else jnp.bfloat16
        w1, s1 = _fold_conv_bn(*p["conv1"], *p["bn1"])
        w2, s2 = _fold_conv_bn(*p["conv2"], *p["bn2"])
        blk = {"stride": stride, "pad": pad, "planes": cout}
        if has_ds:
            wd, sd = _fold_conv_bn(*p["ds_conv"], *p["ds_bn"])
            # group the K taps by stride and fuse conv1 || downsample along lanes
            wg = jnp.zeros((3, stride * cin, 2 * cout), jnp.float32)
            for k in range(K):
                j, r = divmod(k, stride)
                wg = wg.at[j, r * cin:(r + 1) * cin, :cout].set(w1[k])
                wg = wg.at[j, r * cin:(r + 1) * cin, cout:].set(wd[k])
            blk["wg"] = wg.astype(mm_dtype)
            blk["sg"] = (jnp.concatenate([s1, sd]).reshape(1, 2 * cout)
                         .astype(jnp.float32))
        else:
            assert pad == K // 2 and cin == cout
            blk["w1"] = w1.astype(mm_dtype)                 # (K, cin, cout)
            blk["s1"] = s1.reshape(1, cout).astype(jnp.float32)
        blk["w2"] = w2.astype(jnp.bfloat16)                 # (K, cout, cout)
        blk["s2"] = s2.reshape(1, cout).astype(jnp.float32)
        blocks.append(blk)
    return blocks


# ----------------------------------------------------------------------------
# Deterministic parameter initialisation (PyTorch-style uniform init)
# ----------------------------------------------------------------------------
def _init_conv(key, cout, cin):
    k1, k2 = jax.random.split(key)
    bound = 1.0 / math.sqrt(cin * K)
    w = jax.random.uniform(k1, (cout, cin, K), jnp.float32, -bound, bound)
    b = jax.random.uniform(k2, (cout,), jnp.float32, -bound, bound)
    return w, b


def _init_bn(key, c):
    k1, k2, k3, k4 = jax.random.split(key, 4)
    gamma = 1.0 + 0.1 * jax.random.normal(k1, (c,), jnp.float32)
    beta = 0.1 * jax.random.normal(k2, (c,), jnp.float32)
    mean = 0.1 * jax.random.normal(k3, (c,), jnp.float32)
    var = jax.random.uniform(k4, (c,), jnp.float32, 0.5, 1.5)
    return gamma, beta, mean, var


def init_wav_encoder_params(key):
    params = []
    for cin, cout, stride, pad in CONFIGS:
        key, *ks = jax.random.split(key, 7)
        p = {
            "conv1": _init_conv(ks[0], cout, cin),
            "bn1": _init_bn(ks[1], cout),
            "conv2": _init_conv(ks[2], cout, cout),
            "bn2": _init_bn(ks[3], cout),
        }
        if stride != 1 or cin != cout:
            p["ds_conv"] = _init_conv(ks[4], cout, cin)
            p["ds_bn"] = _init_bn(ks[5], cout)
        params.append(p)
    return params


# ----------------------------------------------------------------------------
if __name__ == "__main__":
    B, T = 2, 1000
    wav = jax.random.normal(jax.random.PRNGKey(0), (B, T), dtype=jnp.float32)
    params = init_wav_encoder_params(jax.random.PRNGKey(1))
    blocks = prepare_blocks(params)

    out = wav_encoder_forward(wav, blocks)
    out = jax.block_until_ready(out)

    # Expected: T=1000 -> 838 -> 138 -> 138 -> 21 -> 21 -> 2 frames, 128 channels.
    assert out.shape == (B, 2, 128), out.shape
    assert bool(jnp.all(jnp.isfinite(out)))
    print("KERNEL_OK")
</pallas_src>

<mosaic_0001>
module attributes {stable_mosaic.version = 11 : i64} {
  func.func @_block_kernel(%arg0: i32, %arg1: i32, %arg2: memref<1x1048x5xf32, #tpu.memory_space<vmem>>, %arg3: memref<3x5x64xf32, #tpu.memory_space<vmem>>, %arg4: memref<1x64xf32, #tpu.memory_space<vmem>>, %arg5: memref<15x32x32xbf16, #tpu.memory_space<vmem>>, %arg6: memref<1x32xf32, #tpu.memory_space<vmem>>, %arg7: memref<1x256x32xbf16, #tpu.memory_space<vmem>>, %arg8: memref<272x32xbf16, #tpu.memory_space<vmem>>) attributes {dimension_semantics = [#tpu.dimension_semantics<parallel>, #tpu.dimension_semantics<parallel>], iteration_bounds = array<i64: 2, 4>, scalar_prefetch = 0 : i64, scratch_operands = 1 : i64, tpu.core_type = #tpu.core_type<tc>, window_params = [{transform_indices = @transform_0, window_bounds = array<i64: 1, 1048, 5>}, {pipeline_mode = #tpu.pipeline_mode<synchronous>, transform_indices = @transform_1, window_bounds = array<i64: 3, 5, 64>}, {pipeline_mode = #tpu.pipeline_mode<synchronous>, transform_indices = @transform_2, window_bounds = array<i64: 1, 64>}, {pipeline_mode = #tpu.pipeline_mode<synchronous>, transform_indices = @transform_3, window_bounds = array<i64: 15, 32, 32>}, {pipeline_mode = #tpu.pipeline_mode<synchronous>, transform_indices = @transform_4, window_bounds = array<i64: 1, 32>}, {transform_indices = @transform_5, window_bounds = array<i64: 1, 256, 32>}]} {
    %c256_i32 = arith.constant 256 : i32
    %0 = arith.muli %arg1, %c256_i32 : i32
    %1 = tpu.assume_multiple %0, 8 : i32
    %cst = arith.constant 0.000000e+00 : f32
    %2 = vector.broadcast %cst : f32 to vector<272x64xf32>
    %c0_i32 = arith.constant 0 : i32
    %3 = arith.addi %1, %c0_i32 : i32
    %c0 = arith.constant 0 : index
    %4 = arith.index_cast %3 : i32 to index
    %c0_0 = arith.constant 0 : index
    %5 = vector.load %arg2[%c0, %4, %c0_0] : memref<1x1048x5xf32, #tpu.memory_space<vmem>>, vector<1x272x5xf32>
    %6 = vector.shape_cast %5 : vector<1x272x5xf32> to vector<272x5xf32>
    %c0_1 = arith.constant 0 : index
    %c0_2 = arith.constant 0 : index
    %c0_3 = arith.constant 0 : index
    %7 = vector.load %arg3[%c0_1, %c0_2, %c0_3] : memref<3x5x64xf32, #tpu.memory_space<vmem>>, vector<1x5x64xf32>
    %8 = vector.shape_cast %7 : vector<1x5x64xf32> to vector<5x64xf32>
    %cst_4 = arith.constant dense<0.000000e+00> : vector<272x64xf32>
    %9 = tpu.matmul %6, %8, %cst_4 {dimension_numbers = #tpu.dot_dimension_numbers<[1], [0], [0], [1], [0, 0, 1, 1], [], []>} : vector<272x5xf32>, vector<5x64xf32>, vector<272x64xf32> -> vector<272x64xf32>
    %10 = arith.addf %2, %9 : vector<272x64xf32>
    %c1_i32 = arith.constant 1 : i32
    %11 = arith.addi %1, %c1_i32 : i32
    %c0_5 = arith.constant 0 : index
    %12 = arith.index_cast %11 : i32 to index
    %c0_6 = arith.constant 0 : index
    %13 = vector.load %arg2[%c0_5, %12, %c0_6] : memref<1x1048x5xf32, #tpu.memory_space<vmem>>, vector<1x272x5xf32>
    %14 = vector.shape_cast %13 : vector<1x272x5xf32> to vector<272x5xf32>
    %c1 = arith.constant 1 : index
    %c0_7 = arith.constant 0 : index
    %c0_8 = arith.constant 0 : index
    %15 = vector.load %arg3[%c1, %c0_7, %c0_8] : memref<3x5x64xf32, #tpu.memory_space<vmem>>, vector<1x5x64xf32>
    %16 = vector.shape_cast %15 : vector<1x5x64xf32> to vector<5x64xf32>
    %cst_9 = arith.constant dense<0.000000e+00> : vector<272x64xf32>
    %17 = tpu.matmul %14, %16, %cst_9 {dimension_numbers = #tpu.dot_dimension_numbers<[1], [0], [0], [1], [0, 0, 1, 1], [], []>} : vector<272x5xf32>, vector<5x64xf32>, vector<272x64xf32> -> vector<272x64xf32>
    %18 = arith.addf %10, %17 : vector<272x64xf32>
    %c2_i32 = arith.constant 2 : i32
    %19 = arith.addi %1, %c2_i32 : i32
    %c0_10 = arith.constant 0 : index
    %20 = arith.index_cast %19 : i32 to index
    %c0_11 = arith.constant 0 : index
    %21 = vector.load %arg2[%c0_10, %20, %c0_11] : memref<1x1048x5xf32, #tpu.memory_space<vmem>>, vector<1x272x5xf32>
    %22 = vector.shape_cast %21 : vector<1x272x5xf32> to vector<272x5xf32>
    %c2 = arith.constant 2 : index
    %c0_12 = arith.constant 0 : index
    %c0_13 = arith.constant 0 : index
    %23 = vector.load %arg3[%c2, %c0_12, %c0_13] : memref<3x5x64xf32, #tpu.memory_space<vmem>>, vector<1x5x64xf32>
    %24 = vector.shape_cast %23 : vector<1x5x64xf32> to vector<5x64xf32>
    %cst_14 = arith.constant dense<0.000000e+00> : vector<272x64xf32>
    %25 = tpu.matmul %22, %24, %cst_14 {dimension_numbers = #tpu.dot_dimension_numbers<[1], [0], [0], [1], [0, 0, 1, 1], [], []>} : vector<272x5xf32>, vector<5x64xf32>, vector<272x64xf32> -> vector<272x64xf32>
    %26 = arith.addf %18, %25 : vector<272x64xf32>
    %c0_15 = arith.constant 0 : index
    %c0_16 = arith.constant 0 : index
    %27 = vector.load %arg4[%c0_15, %c0_16] : memref<1x64xf32, #tpu.memory_space<vmem>>, vector<1x64xf32>
    %28 = vector.broadcast %27 : vector<1x64xf32> to vector<272x64xf32>
    %29 = arith.addf %26, %28 : vector<272x64xf32>
    %30 = vector.extract_strided_slice %29 {offsets = [0, 0], sizes = [272, 32], strides = [1, 1]} : vector<272x64xf32> to vector<272x32xf32>
    %31 = vector.extract_strided_slice %29 {offsets = [8, 32], sizes = [256, 32], strides = [1, 1]} : vector<272x64xf32> to vector<256x32xf32>
    %c8_i32 = arith.constant 8 : i32
    %32 = arith.subi %1, %c8_i32 : i32
    %33 = tpu.iota {dimensions = array<i32: 0>} : vector<272x1xi32>
    %34 = vector.broadcast %32 : i32 to vector<272x1xi32>
    %35 = arith.addi %34, %33 : vector<272x1xi32>
    %c0_i32_17 = arith.constant 0 : i32
    %36 = vector.broadcast %c0_i32_17 : i32 to vector<272x1xi32>
    %37 = arith.cmpi sge, %35, %36 : vector<272x1xi32>
    %c838_i32 = arith.constant 838 : i32
    %38 = vector.broadcast %c838_i32 : i32 to vector<272x1xi32>
    %39 = arith.cmpi slt, %35, %38 : vector<272x1xi32>
    %40 = arith.andi %37, %39 : vector<272x1xi1>
    %cst_18 = arith.constant 0.000000e+00 : f32
    %41 = vector.broadcast %cst_18 : f32 to vector<272x32xf32>
    %42 = arith.cmpf oge, %30, %41 : vector<272x32xf32>
    %cst_19 = arith.constant 0.00999999977 : f32
    %43 = vector.broadcast %cst_19 : f32 to vector<272x32xf32>
    %44 = arith.mulf %43, %30 : vector<272x32xf32>
    %45 = arith.select %42, %30, %44 : vector<272x32xi1>, vector<272x32xf32>
    %cst_20 = arith.constant 0.000000e+00 : f32
    %46 = vector.shape_cast %40 : vector<272x1xi1> to vector<272x1xi1>
    %47 = vector.broadcast %46 : vector<272x1xi1> to vector<272x32xi1>
    %48 = vector.broadcast %cst_20 : f32 to vector<272x32xf32>
    %49 = arith.select %47, %45, %48 : vector<272x32xi1>, vector<272x32xf32>
    %50 = arith.truncf %49 : vector<272x32xf32> to vector<272x32xbf16>
    %c0_21 = arith.constant 0 : index
    %c0_22 = arith.constant 0 : index
    %51 = vector.load %arg8[%c0_21, %c0_22] : memref<272x32xbf16, #tpu.memory_space<vmem>>, vector<272x32xbf16>
    tpu.vector_store %arg8[%c0_21, %c0_22], %50 {strides = array<i32>} : memref<272x32xbf16, #tpu.memory_space<vmem>>, vector<272x32xbf16>,
    %cst_23 = arith.constant 0.000000e+00 : f32
    %52 = vector.broadcast %cst_23 : f32 to vector<256x32xf32>
    %c1_24 = arith.constant 1 : index
    %c0_25 = arith.constant 0 : index
    %53 = vector.load %arg8[%c1_24, %c0_25] : memref<272x32xbf16, #tpu.memory_space<vmem>>, vector<256x32xbf16>
    %c0_26 = arith.constant 0 : index
    %c0_27 = arith.constant 0 : index
    %c0_28 = arith.constant 0 : index
    %54 = vector.load %arg5[%c0_26, %c0_27, %c0_28] : memref<15x32x32xbf16, #tpu.memory_space<vmem>>, vector<1x32x32xbf16>
    %55 = vector.shape_cast %54 : vector<1x32x32xbf16> to vector<32x32xbf16>
    %cst_29 = arith.constant dense<0.000000e+00> : vector<256x32xf32>
    %56 = tpu.matmul %53, %55, %cst_29 {dimension_numbers = #tpu.dot_dimension_numbers<[1], [0], [0], [1], [0, 0, 1, 1], [], []>} : vector<256x32xbf16>, vector<32x32xbf16>, vector<256x32xf32> -> vector<256x32xf32>
    %57 = arith.addf %52, %56 : vector<256x32xf32>
    %c2_30 = arith.constant 2 : index
    %c0_31 = arith.constant 0 : index
    %58 = vector.load %arg8[%c2_30, %c0_31] : memref<272x32xbf16, #tpu.memory_space<vmem>>, vector<256x32xbf16>
    %c1_32 = arith.constant 1 : index
    %c0_33 = arith.constant 0 : index
    %c0_34 = arith.constant 0 : index
    %59 = vector.load %arg5[%c1_32, %c0_33, %c0_34] : memref<15x32x32xbf16, #tpu.memory_space<vmem>>, vector<1x32x32xbf16>
    %60 = vector.shape_cast %59 : vector<1x32x32xbf16> to vector<32x32xbf16>
    %cst_35 = arith.constant dense<0.000000e+00> : vector<256x32xf32>
    %61 = tpu.matmul %58, %60, %cst_35 {dimension_numbers = #tpu.dot_dimension_numbers<[1], [0], [0], [1], [0, 0, 1, 1], [], []>} : vector<256x32xbf16>, vector<32x32xbf16>, vector<256x32xf32> -> vector<256x32xf32>
    %62 = arith.addf %57, %61 : vector<256x32xf32>
    %c3 = arith.constant 3 : index
    %c0_36 = arith.constant 0 : index
    %63 = vector.load %arg8[%c3, %c0_36] : memref<272x32xbf16, #tpu.memory_space<vmem>>, vector<256x32xbf16>
    %c2_37 = arith.constant 2 : index
    %c0_38 = arith.constant 0 : index
    %c0_39 = arith.constant 0 : index
    %64 = vector.load %arg5[%c2_37, %c0_38, %c0_39] : memref<15x32x32xbf16, #tpu.memory_space<vmem>>, vector<1x32x32xbf16>
    %65 = vector.shape_cast %64 : vector<1x32x32xbf16> to vector<32x32xbf16>
    %cst_40 = arith.constant dense<0.000000e+00> : vector<256x32xf32>
    %66 = tpu.matmul %63, %65, %cst_40 {dimension_numbers = #tpu.dot_dimension_numbers<[1], [0], [0], [1], [0, 0, 1, 1], [], []>} : vector<256x32xbf16>, vector<32x32xbf16>, vector<256x32xf32> -> vector<256x32xf32>
    %67 = arith.addf %62, %66 : vector<256x32xf32>
    %c4 = arith.constant 4 : index
    %c0_41 = arith.constant 0 : index
    %68 = vector.load %arg8[%c4, %c0_41] : memref<272x32xbf16, #tpu.memory_space<vmem>>, vector<256x32xbf16>
    %c3_42 = arith.constant 3 : index
    %c0_43 = arith.constant 0 : index
    %c0_44 = arith.constant 0 : index
    %69 = vector.load %arg5[%c3_42, %c0_43, %c0_44] : memref<15x32x32xbf16, #tpu.memory_space<vmem>>, vector<1x32x32xbf16>
    %70 = vector.shape_cast %69 : vector<1x32x32xbf16> to vector<32x32xbf16>
    %cst_45 = arith.constant dense<0.000000e+00> : vector<256x32xf32>
    %71 = tpu.matmul %68, %70, %cst_45 {dimension_numbers = #tpu.dot_dimension_numbers<[1], [0], [0], [1], [0, 0, 1, 1], [], []>} : vector<256x32xbf16>, vector<32x32xbf16>, vector<256x32xf32> -> vector<256x32xf32>
    %72 = arith.addf %67, %71 : vector<256x32xf32>
    %c5 = arith.constant 5 : index
    %c0_46 = arith.constant 0 : index
    %73 = vector.load %arg8[%c5, %c0_46] : memref<272x32xbf16, #tpu.memory_space<vmem>>, vector<256x32xbf16>
    %c4_47 = arith.constant 4 : index
    %c0_48 = arith.constant 0 : index
    %c0_49 = arith.constant 0 : index
    %74 = vector.load %arg5[%c4_47, %c0_48, %c0_49] : memref<15x32x32xbf16, #tpu.memory_space<vmem>>, vector<1x32x32xbf16>
    %75 = vector.shape_cast %74 : vector<1x32x32xbf16> to vector<32x32xbf16>
    %cst_50 = arith.constant dense<0.000000e+00> : vector<256x32xf32>
    %76 = tpu.matmul %73, %75, %cst_50 {dimension_numbers = #tpu.dot_dimension_numbers<[1], [0], [0], [1], [0, 0, 1, 1], [], []>} : vector<256x32xbf16>, vector<32x32xbf16>, vector<256x32xf32> -> vector<256x32xf32>
    %77 = arith.addf %72, %76 : vector<256x32xf32>
    %c6 = arith.constant 6 : index
    %c0_51 = arith.constant 0 : index
    %78 = vector.load %arg8[%c6, %c0_51] : memref<272x32xbf16, #tpu.memory_space<vmem>>, vector<256x32xbf16>
    %c5_52 = arith.constant 5 : index
    %c0_53 = arith.constant 0 : index
    %c0_54 = arith.constant 0 : index
    %79 = vector.load %arg5[%c5_52, %c0_53, %c0_54] : memref<15x32x32xbf16, #tpu.memory_space<vmem>>, vector<1x32x32xbf16>
    %80 = vector.shape_cast %79 : vector<1x32x32xbf16> to vector<32x32xbf16>
    %cst_55 = arith.constant dense<0.000000e+00> : vector<256x32xf32>
    %81 = tpu.matmul %78, %80, %cst_55 {dimension_numbers = #tpu.dot_dimension_numbers<[1], [0], [0], [1], [0, 0, 1, 1], [], []>} : vector<256x32xbf16>, vector<32x32xbf16>, vector<256x32xf32> -> vector<256x32xf32>
    %82 = arith.addf %77, %81 : vector<256x32xf32>
    %c7 = arith.constant 7 : index
    %c0_56 = arith.constant 0 : index
    %83 = vector.load %arg8[%c7, %c0_56] : memref<272x32xbf16, #tpu.memory_space<vmem>>, vector<256x32xbf16>
    %c6_57 = arith.constant 6 : index
    %c0_58 = arith.constant 0 : index
    %c0_59 = arith.constant 0 : index
    %84 = vector.load %arg5[%c6_57, %c0_58, %c0_59] : memref<15x32x32xbf16, #tpu.memory_space<vmem>>, vector<1x32x32xbf16>
    %85 = vector.shape_cast %84 : vector<1x32x32xbf16> to vector<32x32xbf16>
    %cst_60 = arith.constant dense<0.000000e+00> : vector<256x32xf32>
    %86 = tpu.matmul %83, %85, %cst_60 {dimension_numbers = #tpu.dot_dimension_numbers<[1], [0], [0], [1], [0, 0, 1, 1], [], []>} : vector<256x32xbf16>, vector<32x32xbf16>, vector<256x32xf32> -> vector<256x32xf32>
    %87 = arith.addf %82, %86 : vector<256x32xf32>
    %c8 = arith.constant 8 : index
    %c0_61 = arith.constant 0 : index
    %88 = vector.load %arg8[%c8, %c0_61] : memref<272x32xbf16, #tpu.memory_space<vmem>>, vector<256x32xbf16>
    %c7_62 = arith.constant 7 : index
    %c0_63 = arith.constant 0 : index
    %c0_64 = arith.constant 0 : index
    %89 = vector.load %arg5[%c7_62, %c0_63, %c0_64] : memref<15x32x32xbf16, #tpu.memory_space<vmem>>, vector<1x32x32xbf16>
    %90 = vector.shape_cast %89 : vector<1x32x32xbf16> to vector<32x32xbf16>
    %cst_65 = arith.constant dense<0.000000e+00> : vector<256x32xf32>
    %91 = tpu.matmul %88, %90, %cst_65 {dimension_numbers = #tpu.dot_dimension_numbers<[1], [0], [0], [1], [0, 0, 1, 1], [], []>} : vector<256x32xbf16>, vector<32x32xbf16>, vector<256x32xf32> -> vector<256x32xf32>
    %92 = arith.addf %87, %91 : vector<256x32xf32>
    %c9 = arith.constant 9 : index
    %c0_66 = arith.constant 0 : index
    %93 = vector.load %arg8[%c9, %c0_66] : memref<272x32xbf16, #tpu.memory_space<vmem>>, vector<256x32xbf16>
    %c8_67 = arith.constant 8 : index
    %c0_68 = arith.constant 0 : index
    %c0_69 = arith.constant 0 : index
    %94 = vector.load %arg5[%c8_67, %c0_68, %c0_69] : memref<15x32x32xbf16, #tpu.memory_space<vmem>>, vector<1x32x32xbf16>
    %95 = vector.shape_cast %94 : vector<1x32x32xbf16> to vector<32x32xbf16>
    %cst_70 = arith.constant dense<0.000000e+00> : vector<256x32xf32>
    %96 = tpu.matmul %93, %95, %cst_70 {dimension_numbers = #tpu.dot_dimension_numbers<[1], [0], [0], [1], [0, 0, 1, 1], [], []>} : vector<256x32xbf16>, vector<32x32xbf16>, vector<256x32xf32> -> vector<256x32xf32>
    %97 = arith.addf %92, %96 : vector<256x32xf32>
    %c10 = arith.constant 10 : index
    %c0_71 = arith.constant 0 : index
    %98 = vector.load %arg8[%c10, %c0_71] : memref<272x32xbf16, #tpu.memory_space<vmem>>, vector<256x32xbf16>
    %c9_72 = arith.constant 9 : index
    %c0_73 = arith.constant 0 : index
    %c0_74 = arith.constant 0 : index
    %99 = vector.load %arg5[%c9_72, %c0_73, %c0_74] : memref<15x32x32xbf16, #tpu.memory_space<vmem>>, vector<1x32x32xbf16>
    %100 = vector.shape_cast %99 : vector<1x32x32xbf16> to vector<32x32xbf16>
    %cst_75 = arith.constant dense<0.000000e+00> : vector<256x32xf32>
    %101 = tpu.matmul %98, %100, %cst_75 {dimension_numbers = #tpu.dot_dimension_numbers<[1], [0], [0], [1], [0, 0, 1, 1], [], []>} : vector<256x32xbf16>, vector<32x32xbf16>, vector<256x32xf32> -> vector<256x32xf32>
    %102 = arith.addf %97, %101 : vector<256x32xf32>
    %c11 = arith.constant 11 : index
    %c0_76 = arith.constant 0 : index
    %103 = vector.load %arg8[%c11, %c0_76] : memref<272x32xbf16, #tpu.memory_space<vmem>>, vector<256x32xbf16>
    %c10_77 = arith.constant 10 : index
    %c0_78 = arith.constant 0 : index
    %c0_79 = arith.constant 0 : index
    %104 = vector.load %arg5[%c10_77, %c0_78, %c0_79] : memref<15x32x32xbf16, #tpu.memory_space<vmem>>, vector<1x32x32xbf16>
    %105 = vector.shape_cast %104 : vector<1x32x32xbf16> to vector<32x32xbf16>
    %cst_80 = arith.constant dense<0.000000e+00> : vector<256x32xf32>
    %106 = tpu.matmul %103, %105, %cst_80 {dimension_numbers = #tpu.dot_dimension_numbers<[1], [0], [0], [1], [0, 0, 1, 1], [], []>} : vector<256x32xbf16>, vector<32x32xbf16>, vector<256x32xf32> -> vector<256x32xf32>
    %107 = arith.addf %102, %106 : vector<256x32xf32>
    %c12 = arith.constant 12 : index
    %c0_81 = arith.constant 0 : index
    %108 = vector.load %arg8[%c12, %c0_81] : memref<272x32xbf16, #tpu.memory_space<vmem>>, vector<256x32xbf16>
    %c11_82 = arith.constant 11 : index
    %c0_83 = arith.constant 0 : index
    %c0_84 = arith.constant 0 : index
    %109 = vector.load %arg5[%c11_82, %c0_83, %c0_84] : memref<15x32x32xbf16, #tpu.memory_space<vmem>>, vector<1x32x32xbf16>
    %110 = vector.shape_cast %109 : vector<1x32x32xbf16> to vector<32x32xbf16>
    %cst_85 = arith.constant dense<0.000000e+00> : vector<256x32xf32>
    %111 = tpu.matmul %108, %110, %cst_85 {dimension_numbers = #tpu.dot_dimension_numbers<[1], [0], [0], [1], [0, 0, 1, 1], [], []>} : vector<256x32xbf16>, vector<32x32xbf16>, vector<256x32xf32> -> vector<256x32xf32>
    %112 = arith.addf %107, %111 : vector<256x32xf32>
    %c13 = arith.constant 13 : index
    %c0_86 = arith.constant 0 : index
    %113 = vector.load %arg8[%c13, %c0_86] : memref<272x32xbf16, #tpu.memory_space<vmem>>, vector<256x32xbf16>
    %c12_87 = arith.constant 12 : index
    %c0_88 = arith.constant 0 : index
    %c0_89 = arith.constant 0 : index
    %114 = vector.load %arg5[%c12_87, %c0_88, %c0_89] : memref<15x32x32xbf16, #tpu.memory_space<vmem>>, vector<1x32x32xbf16>
    %115 = vector.shape_cast %114 : vector<1x32x32xbf16> to vector<32x32xbf16>
    %cst_90 = arith.constant dense<0.000000e+00> : vector<256x32xf32>
    %116 = tpu.matmul %113, %115, %cst_90 {dimension_numbers = #tpu.dot_dimension_numbers<[1], [0], [0], [1], [0, 0, 1, 1], [], []>} : vector<256x32xbf16>, vector<32x32xbf16>, vector<256x32xf32> -> vector<256x32xf32>
    %117 = arith.addf %112, %116 : vector<256x32xf32>
    %c14 = arith.constant 14 : index
    %c0_91 = arith.constant 0 : index
    %118 = vector.load %arg8[%c14, %c0_91] : memref<272x32xbf16, #tpu.memory_space<vmem>>, vector<256x32xbf16>
    %c13_92 = arith.constant 13 : index
    %c0_93 = arith.constant 0 : index
    %c0_94 = arith.constant 0 : index
    %119 = vector.load %arg5[%c13_92, %c0_93, %c0_94] : memref<15x32x32xbf16, #tpu.memory_space<vmem>>, vector<1x32x32xbf16>
    %120 = vector.shape_cast %119 : vector<1x32x32xbf16> to vector<32x32xbf16>
    %cst_95 = arith.constant dense<0.000000e+00> : vector<256x32xf32>
    %121 = tpu.matmul %118, %120, %cst_95 {dimension_numbers = #tpu.dot_dimension_numbers<[1], [0], [0], [1], [0, 0, 1, 1], [], []>} : vector<256x32xbf16>, vector<32x32xbf16>, vector<256x32xf32> -> vector<256x32xf32>
    %122 = arith.addf %117, %121 : vector<256x32xf32>
    %c15 = arith.constant 15 : index
    %c0_96 = arith.constant 0 : index
    %123 = vector.load %arg8[%c15, %c0_96] : memref<272x32xbf16, #tpu.memory_space<vmem>>, vector<256x32xbf16>
    %c14_97 = arith.constant 14 : index
    %c0_98 = arith.constant 0 : index
    %c0_99 = arith.constant 0 : index
    %124 = vector.load %arg5[%c14_97, %c0_98, %c0_99] : memref<15x32x32xbf16, #tpu.memory_space<vmem>>, vector<1x32x32xbf16>
    %125 = vector.shape_cast %124 : vector<1x32x32xbf16> to vector<32x32xbf16>
    %cst_100 = arith.constant dense<0.000000e+00> : vector<256x32xf32>
    %126 = tpu.matmul %123, %125, %cst_100 {dimension_numbers = #tpu.dot_dimension_numbers<[1], [0], [0], [1], [0, 0, 1, 1], [], []>} : vector<256x32xbf16>, vector<32x32xbf16>, vector<256x32xf32> -> vector<256x32xf32>
    %127 = arith.addf %122, %126 : vector<256x32xf32>
    %c0_101 = arith.constant 0 : index
    %c0_102 = arith.constant 0 : index
    %128 = vector.load %arg6[%c0_101, %c0_102] : memref<1x32xf32, #tpu.memory_space<vmem>>, vector<1x32xf32>
    %129 = vector.broadcast %128 : vector<1x32xf32> to vector<256x32xf32>
    %130 = arith.addf %127, %129 : vector<256x32xf32>
    %131 = arith.addf %130, %31 : vector<256x32xf32>
    %cst_103 = arith.constant 0.000000e+00 : f32
    %132 = vector.broadcast %cst_103 : f32 to vector<256x32xf32>
    %133 = arith.cmpf oge, %131, %132 : vector<256x32xf32>
    %cst_104 = arith.constant 0.00999999977 : f32
    %134 = vector.broadcast %cst_104 : f32 to vector<256x32xf32>
    %135 = arith.mulf %134, %131 : vector<256x32xf32>
    %136 = arith.select %133, %131, %135 : vector<256x32xi1>, vector<256x32xf32>
    %137 = tpu.iota {dimensions = array<i32: 0>} : vector<256x1xi32>
    %138 = vector.broadcast %1 : i32 to vector<256x1xi32>
    %139 = arith.addi %138, %137 : vector<256x1xi32>
    %c838_i32_105 = arith.constant 838 : i32
    %140 = vector.broadcast %c838_i32_105 : i32 to vector<256x1xi32>
    %141 = arith.cmpi slt, %139, %140 : vector<256x1xi32>
    %cst_106 = arith.constant 0.000000e+00 : f32
    %142 = vector.shape_cast %141 : vector<256x1xi1> to vector<256x1xi1>
    %143 = vector.broadcast %142 : vector<256x1xi1> to vector<256x32xi1>
    %144 = vector.broadcast %cst_106 : f32 to vector<256x32xf32>
    %145 = arith.select %143, %136, %144 : vector<256x32xi1>, vector<256x32xf32>
    %146 = arith.truncf %145 : vector<256x32xf32> to vector<256x32xbf16>
    %c0_107 = arith.constant 0 : index
    %c0_108 = arith.constant 0 : index
    %c0_109 = arith.constant 0 : index
    %147 = vector.load %arg7[%c0_107, %c0_108, %c0_109] : memref<1x256x32xbf16, #tpu.memory_space<vmem>>, vector<1x256x32xbf16>
    %148 = vector.shape_cast %147 : vector<1x256x32xbf16> to vector<256x32xbf16>
    %149 = vector.shape_cast %146 : vector<256x32xbf16> to vector<1x256x32xbf16>
    tpu.vector_store %arg7[%c0_107, %c0_108, %c0_109], %149 {strides = array<i32>} : memref<1x256x32xbf16, #tpu.memory_space<vmem>>, vector<1x256x32xbf16>,
    return
  }
  func.func @transform_0(%arg0: i32, %arg1: i32) -> (i32, i32, i32) {
    %c0_i32 = arith.constant 0 : i32
    %c0_i32_0 = arith.constant 0 : i32
    %c0_i32_1 = arith.constant 0 : i32
    return %arg0, %c0_i32, %c0_i32_0 : i32, i32, i32
  }
  func.func @transform_1(%arg0: i32, %arg1: i32) -> (i32, i32, i32) {
    %c0_i32 = arith.constant 0 : i32
    %c0_i32_0 = arith.constant 0 : i32
    %c0_i32_1 = arith.constant 0 : i32
    %c0_i32_2 = arith.constant 0 : i32
    return %c0_i32, %c0_i32_0, %c0_i32_1 : i32, i32, i32
  }
  func.func @transform_2(%arg0: i32, %arg1: i32) -> (i32, i32) {
    %c0_i32 = arith.constant 0 : i32
    %c0_i32_0 = arith.constant 0 : i32
    %c0_i32_1 = arith.constant 0 : i32
    return %c0_i32, %c0_i32_0 : i32, i32
  }
  func.func @transform_3(%arg0: i32, %arg1: i32) -> (i32, i32, i32) {
    %c0_i32 = arith.constant 0 : i32
    %c0_i32_0 = arith.constant 0 : i32
    %c0_i32_1 = arith.constant 0 : i32
    %c0_i32_2 = arith.constant 0 : i32
    return %c0_i32, %c0_i32_0, %c0_i32_1 : i32, i32, i32
  }
  func.func @transform_4(%arg0: i32, %arg1: i32) -> (i32, i32) {
    %c0_i32 = arith.constant 0 : i32
    %c0_i32_0 = arith.constant 0 : i32
    %c0_i32_1 = arith.constant 0 : i32
    return %c0_i32, %c0_i32_0 : i32, i32
  }
  func.func @transform_5(%arg0: i32, %arg1: i32) -> (i32, i32, i32) {
    %c0_i32 = arith.constant 0 : i32
    %c0_i32_0 = arith.constant 0 : i32
    return %arg0, %arg1, %c0_i32 : i32, i32, i32
  }
}

</mosaic_0001>

<llo_original>
// kernel: tpu_custom_call.1
$region0: #{tpu_custom_call.1}
  #allocation0 [shape = 'u32[]', space=smem, size = 0x4, offset = 0x4, fixed_abs, tag = 'smem constant byte address 0x4 - core index']
  #allocation1 [shape = 'u32[72,128]{1,0:T(1,128)}', space=vmem, size = 0x9000, scoped, tag = 'internal scratch']
  #allocation2 [shape = 'bf16[272,32]{1,0:T(8,128)(2,1)}', space=vmem, size = 0x11000, scoped, tag = 'scratch operand']
  %s0 = inlined_call_operand.vmem [shape: f32[2,1048,5], index: 0, kind: input, shape index: {}]
  %s1 = inlined_call_operand.vmem [shape: f32[3,5,64], index: 1, kind: input, shape index: {}]
  %s2 = inlined_call_operand.vmem [shape: f32[1,64], index: 2, kind: input, shape index: {}]
  %s3 = inlined_call_operand.vmem [shape: bf16[15,32,32], index: 3, kind: input, shape index: {}]
  %s4 = inlined_call_operand.vmem [shape: f32[1,32], index: 4, kind: input, shape index: {}]
  %s5 = inlined_call_operand.vmem [shape: bf16[2,1024,32], index: 5, kind: output, shape index: {}]
  %s6 = sld [smem:[#allocation0]]
  $region53: #{tpu_custom_call.1} parent=0
    _
  %s8 = ssub.s32 1, %s6
  %s9 = scalar_select 0, %s8, %s6
  loop: start=0, step=1, limit=10
  $region2: #{tpu_custom_call.1} parent=0 // loop_pre_header
    _
  $region3: #{tpu_custom_call.1} parent=0 // loop_header
    %s11 = sphi 0, %s15
    %p12 = scmp.ge.s32.totalorder %s11, 10
    %s18 = sphi 0, %s30
    %s19 = sphi 0, %s26
    %s20 = sphi 0, %s18
    %s21 = sphi 0, %s19
    %s22 = sphi 0, %s20
    %s23 = sphi 0, %s21
    %s33 = sphi 0, %s35
    %s36 = sphi 0, %s33
    %s37 = sphi 0, %s36
    %s53 = sphi 0, %s37
    %s57 = sphi 0, %s57
    %s59 = sphi 0, %s57
    %s60 = sphi 0, %s59
    %s74 = sphi 0, %s60
    %s78 = sphi 0, %s78
    %s80 = sphi 0, %s78
    %s81 = sphi 0, %s80
    %s95 = sphi 0, %s81
    %s99 = sphi 0, %s99
    %s101 = sphi 0, %s99
    %s102 = sphi 0, %s101
    %s116 = sphi 0, %s102
    %s120 = sphi 0, %s120
    %s122 = sphi 0, %s120
    %s123 = sphi 0, %s122
    %s137 = sphi 0, %s123
    %s145 = sphi 0, %s147
    %s148 = sphi 0, %s145
    %s149 = sphi 0, %s148
    %s165 = sphi 0, %s149
  $region4: #{tpu_custom_call.1} parent=0 // loop_header_branch
    %14 = sbr.rel (%p12) target = $region8
  $region5: #{tpu_custom_call.1} parent=0 // loop_body
    %s16 = ssub.s32 %s11, 1
    %s17 = ssub.s32 %s11, 2
    %s24 = sadd.s32 1, %s19
    %p25 = scmp.ge.s32.totalorder %s24, 4
    %s26 = scalar_select %p25, 0, %s24
    %s27 = sadd.s32 1, %s18
    %s28 = scalar_select %p25, %s27, %s18
    %p29 = scmp.ge.s32.totalorder %s28, 2
    %s30 = scalar_select %p29, 0, %s28
    %s31 = ssub.s32 %s18, %s30
    %p32 = scmp.eq.s32.totalorder %s31, 0
    %s34 = sadd.s32 %s33, 1
    %s35 = scalar_select %p32, %s33, %s34
    %p38 = pneg %p32
    %p39 = scmp.eq.s32.totalorder %s11, 7
    %p40 = por %p38, %p39
    %p41 = scmp.ne.s32.totalorder %s33, %s36
    %p42 = scmp.eq.s32.totalorder %s11, 0
    %p43 = por %p41, %p42
    %p44 = scmp.ne.s32.totalorder %s33, %s36
    %p45 = scmp.eq.s32.totalorder %s16, 7
    %p46 = por %p44, %p45
    %p47 = scmp.ne.s32.totalorder %s36, %s37
    %p48 = scmp.eq.s32.totalorder %s16, 0
    %p49 = por %p47, %p48
    %p50 = scmp.ne.s32.totalorder %s36, %s37
    %p51 = scmp.eq.s32.totalorder %s17, 7
    %p52 = por %p50, %p51
    %p54 = scmp.ne.s32.totalorder %s37, %s53
    %p55 = scmp.eq.s32.totalorder %s17, 0
    %p56 = por %p54, %p55
    %s58 = sadd.s32 %s57, 1
    %p61 = scmp.eq.s32.totalorder %s11, 7
    %p62 = scmp.ne.s32.totalorder %s57, %s59
    %p63 = scmp.eq.s32.totalorder %s11, 0
    %p64 = por %p62, %p63
    %p65 = scmp.ne.s32.totalorder %s57, %s59
    %p66 = scmp.eq.s32.totalorder %s16, 7
    %p67 = por %p65, %p66
    %p68 = scmp.ne.s32.totalorder %s59, %s60
    %p69 = scmp.eq.s32.totalorder %s16, 0
    %p70 = por %p68, %p69
    %p71 = scmp.ne.s32.totalorder %s59, %s60
    %p72 = scmp.eq.s32.totalorder %s17, 7
    %p73 = por %p71, %p72
    %p75 = scmp.ne.s32.totalorder %s60, %s74
    %p76 = scmp.eq.s32.totalorder %s17, 0
    %p77 = por %p75, %p76
    %s79 = sadd.s32 %s78, 1
    %p82 = scmp.eq.s32.totalorder %s11, 7
    %p83 = scmp.ne.s32.totalorder %s78, %s80
    %p84 = scmp.eq.s32.totalorder %s11, 0
    %p85 = por %p83, %p84
    %p86 = scmp.ne.s32.totalorder %s78, %s80
    %p87 = scmp.eq.s32.totalorder %s16, 7
    %p88 = por %p86, %p87
    %p89 = scmp.ne.s32.totalorder %s80, %s81
    %p90 = scmp.eq.s32.totalorder %s16, 0
    %p91 = por %p89, %p90
    %p92 = scmp.ne.s32.totalorder %s80, %s81
    %p93 = scmp.eq.s32.totalorder %s17, 7
    %p94 = por %p92, %p93
    %p96 = scmp.ne.s32.totalorder %s81, %s95
    %p97 = scmp.eq.s32.totalorder %s17, 0
    %p98 = por %p96, %p97
    %s100 = sadd.s32 %s99, 1
    %p103 = scmp.eq.s32.totalorder %s11, 7
    %p104 = scmp.ne.s32.totalorder %s99, %s101
    %p105 = scmp.eq.s32.totalorder %s11, 0
    %p106 = por %p104, %p105
    %p107 = scmp.ne.s32.totalorder %s99, %s101
    %p108 = scmp.eq.s32.totalorder %s16, 7
    %p109 = por %p107, %p108
    %p110 = scmp.ne.s32.totalorder %s101, %s102
    %p111 = scmp.eq.s32.totalorder %s16, 0
    %p112 = por %p110, %p111
    %p113 = scmp.ne.s32.totalorder %s101, %s102
    %p114 = scmp.eq.s32.totalorder %s17, 7
    %p115 = por %p113, %p114
    %p117 = scmp.ne.s32.totalorder %s102, %s116
    %p118 = scmp.eq.s32.totalorder %s17, 0
    %p119 = por %p117, %p118
    %s121 = sadd.s32 %s120, 1
    %p124 = scmp.eq.s32.totalorder %s11, 7
    %p125 = scmp.ne.s32.totalorder %s120, %s122
    %p126 = scmp.eq.s32.totalorder %s11, 0
    %p127 = por %p125, %p126
    %p128 = scmp.ne.s32.totalorder %s120, %s122
    %p129 = scmp.eq.s32.totalorder %s16, 7
    %p130 = por %p128, %p129
    %p131 = scmp.ne.s32.totalorder %s122, %s123
    %p132 = scmp.eq.s32.totalorder %s16, 0
    %p133 = por %p131, %p132
    %p134 = scmp.ne.s32.totalorder %s122, %s123
    %p135 = scmp.eq.s32.totalorder %s17, 7
    %p136 = por %p134, %p135
    %p138 = scmp.ne.s32.totalorder %s123, %s137
    %p139 = scmp.eq.s32.totalorder %s17, 0
    %p140 = por %p138, %p139
    %s141 = ssub.s32 %s18, %s30
    %s142 = ssub.s32 %s19, %s26
    %s143 = sor.u32 %s141, %s142
    %p144 = scmp.eq.s32.totalorder %s143, 0
    %s146 = sadd.s32 %s145, 1
    %s147 = scalar_select %p144, %s145, %s146
    %p150 = pneg %p144
    %p151 = scmp.eq.s32.totalorder %s11, 7
    %p152 = por %p150, %p151
    %p153 = scmp.ne.s32.totalorder %s145, %s148
    %p154 = scmp.eq.s32.totalorder %s11, 0
    %p155 = por %p153, %p154
    %p156 = scmp.ne.s32.totalorder %s145, %s148
    %p157 = scmp.eq.s32.totalorder %s16, 7
    %p158 = por %p156, %p157
    %p159 = scmp.ne.s32.totalorder %s148, %s149
    %p160 = scmp.eq.s32.totalorder %s16, 0
    %p161 = por %p159, %p160
    %p162 = scmp.ne.s32.totalorder %s148, %s149
    %p163 = scmp.eq.s32.totalorder %s17, 7
    %p164 = por %p162, %p163
    %p166 = scmp.ne.s32.totalorder %s149, %s165
    %p167 = scmp.eq.s32.totalorder %s17, 0
    %p168 = por %p166, %p167
    %p169 = scmp.le.s32.totalorder 1, %s11
    %p170 = scmp.lt.s32.totalorder %s11, 9
    %p171 = pnand %p169, %p170
    %p172 = pneg %p171
    // Predicated region
    $region9: #{tpu_custom_call.1} parent=5 // pred_check
      _
    $region10: #{tpu_custom_call.1} parent=5 // pred_check_branch
      %174 = sbr.rel (%p171) target = $region12
    $region11: #{tpu_custom_call.1} parent=5 // pred_region
      %s175 = ssub.s32 %s11, 1
      // Predicated region
      $region13: #{tpu_custom_call.1} parent=11 // pred_check
        %p176 = pneg %p70
      $region14: #{tpu_custom_call.1} parent=11 // pred_check_branch
        %178 = sbr.rel (%p176) target = $region16
      $region15: #{tpu_custom_call.1} parent=11 // pred_region
        _
      $region16: #{tpu_custom_call.1} parent=11 // pred_fallthru
        _
      // Predicated region
      $region17: #{tpu_custom_call.1} parent=11 // pred_check
        %p179 = pneg %p91
      $region18: #{tpu_custom_call.1} parent=11 // pred_check_branch
        %181 = sbr.rel (%p179) target = $region20
      $region19: #{tpu_custom_call.1} parent=11 // pred_region
        _
      $region20: #{tpu_custom_call.1} parent=11 // pred_fallthru
        _
      // Predicated region
      $region21: #{tpu_custom_call.1} parent=11 // pred_check
        %p182 = pneg %p112
      $region22: #{tpu_custom_call.1} parent=11 // pred_check_branch
        %184 = sbr.rel (%p182) target = $region24
      $region23: #{tpu_custom_call.1} parent=11 // pred_region
        _
      $region24: #{tpu_custom_call.1} parent=11 // pred_fallthru
        _
      // Predicated region
      $region25: #{tpu_custom_call.1} parent=11 // pred_check
        %p185 = pneg %p133
      $region26: #{tpu_custom_call.1} parent=11 // pred_check_branch
        %187 = sbr.rel (%p185) target = $region28
      $region27: #{tpu_custom_call.1} parent=11 // pred_region
        _
      $region28: #{tpu_custom_call.1} parent=11 // pred_fallthru
        _
    $region12: #{tpu_custom_call.1} parent=5 // pred_fallthru
      _
    %p188 = scmp.lt.s32.totalorder %s11, 8
    // Predicated region
    $region29: #{tpu_custom_call.1} parent=5 // pred_check
      %p189 = pneg %p188
    $region30: #{tpu_custom_call.1} parent=5 // pred_check_branch
      %191 = sbr.rel (%p189) target = $region32
    $region31: #{tpu_custom_call.1} parent=5 // pred_region
      // Predicated region
      $region33: #{tpu_custom_call.1} parent=31 // pred_check
        %p192 = pneg %p43
      $region34: #{tpu_custom_call.1} parent=31 // pred_check_branch
        %194 = sbr.rel (%p192) target = $region36
      $region35: #{tpu_custom_call.1} parent=31 // pred_region
        %p195 = scmp.lt.s32.totalorder %s18, 1
        %s196 = scalar_select %p195, %s18, 1
        %s197 = smul.addr %s196, 131
        %s198 = smul.addr %s197, 8
        %s199 = scalar_lea.vmem %s0, %s198
      $region36: #{tpu_custom_call.1} parent=31 // pred_fallthru
        _
    $region32: #{tpu_custom_call.1} parent=5 // pred_fallthru
      _
    %p200 = scmp.le.s32.totalorder 1, %s11
    %p201 = scmp.lt.s32.totalorder %s11, 9
    %p202 = pnand %p200, %p201
    %p203 = pneg %p202
    // Predicated region
    $region37: #{tpu_custom_call.1} parent=5 // pred_check
      _
    $region38: #{tpu_custom_call.1} parent=5 // pred_check_branch
      %205 = sbr.rel (%p202) target = $region40
    $region39: #{tpu_custom_call.1} parent=5 // pred_region
      %s206 = ssub.s32 %s11, 1
      %p207 = scmp.lt.s32.totalorder %s20, 1
      %s208 = scalar_select %p207, %s20, 1
      %s209 = smul.addr %s208, 131
      %s210 = smul.addr %s209, 8
      %s211 = scalar_lea.vmem %s0, %s210
      %p212 = pneg %p49
      %p213 = pneg %p46
      %p214 = pneg %p70
      %p215 = pneg %p67
      %p216 = pneg %p91
      %p217 = pneg %p88
      %p218 = pneg %p112
      %p219 = pneg %p109
      %p220 = pneg %p133
      %p221 = pneg %p130
      %p222 = pneg %p161
      %p223 = pneg %p158
      %s224 = smul.u32 32, %s21
      %p225 = scmp.lt.s32.totalorder %s20, 1
      %s226 = scalar_select %p225, %s20, 1
      %p227 = scmp.lt.s32.totalorder %s224, 127
      %s228 = scalar_select %p227, %s224, 127
      %s229 = smul.addr %s226, 128
      %s230 = sadd.s32 %s228, %s229
      %s231 = smul.addr %s230, 4
      %s232 = scalar_lea.vmem %s5, %s231
      %p233 = scmp.lt.s32.totalorder %s20, 1
      %s234 = scalar_select %p233, %s20, 1
      %s235 = smul.addr %s234, 131
      %s236 = smul.addr %s235, 8
      %s237 = scalar_lea.vmem %s0, %s236
      %s238 = smul.u32 32, %s21
      %p239 = scmp.lt.s32.totalorder %s20, 1
      %s240 = scalar_select %p239, %s20, 1
      %p241 = scmp.lt.s32.totalorder %s238, 127
      %s242 = scalar_select %p241, %s238, 127
      %s243 = smul.addr %s240, 128
      %s244 = sadd.s32 %s242, %s243
      %s245 = smul.addr %s244, 4
      %s246 = scalar_lea.vmem %s5, %s245
      %s247 = smul.u32 32, %s21
      %s249 = smul.u32 %s21, 256
      %s250 = scalar_lea.vmem %s237, %s249
      %v251 = vld [vmem:[%s250] sm:$0xff]
      %v252 = vld [vmem:[%s250 + $0x8] sm:$0xff]
      %v253 = vld [vmem:[%s250 + $0x10] sm:$0xff]
      %v254 = vld [vmem:[%s250 + $0x18] sm:$0xff]
      %v255 = vld [vmem:[%s250 + $0x20] sm:$0xff]
      %v256 = vld [vmem:[%s250 + $0x28] sm:$0xff]
      %v257 = vld [vmem:[%s250 + $0x30] sm:$0xff]
      %v258 = vld [vmem:[%s250 + $0x38] sm:$0xff]
      %v259 = vld [vmem:[%s250 + $0x40] sm:$0xff]
      %v260 = vld [vmem:[%s250 + $0x48] sm:$0xff]
      %v261 = vld [vmem:[%s250 + $0x50] sm:$0xff]
      %v262 = vld [vmem:[%s250 + $0x58] sm:$0xff]
      %v263 = vld [vmem:[%s250 + $0x60] sm:$0xff]
      %v264 = vld [vmem:[%s250 + $0x68] sm:$0xff]
      %v265 = vld [vmem:[%s250 + $0x70] sm:$0xff]
      %v266 = vld [vmem:[%s250 + $0x78] sm:$0xff]
      %v267 = vld [vmem:[%s250 + $0x80] sm:$0xff]
      %v268 = vld [vmem:[%s250 + $0x88] sm:$0xff]
      %v269 = vld [vmem:[%s250 + $0x90] sm:$0xff]
      %v270 = vld [vmem:[%s250 + $0x98] sm:$0xff]
      %v271 = vld [vmem:[%s250 + $0xa0] sm:$0xff]
      %v272 = vld [vmem:[%s250 + $0xa8] sm:$0xff]
      %v273 = vld [vmem:[%s250 + $0xb0] sm:$0xff]
      %v274 = vld [vmem:[%s250 + $0xb8] sm:$0xff]
      %v275 = vld [vmem:[%s250 + $0xc0] sm:$0xff]
      %v276 = vld [vmem:[%s250 + $0xc8] sm:$0xff]
      %v277 = vld [vmem:[%s250 + $0xd0] sm:$0xff]
      %v278 = vld [vmem:[%s250 + $0xd8] sm:$0xff]
      %v279 = vld [vmem:[%s250 + $0xe0] sm:$0xff]
      %v280 = vld [vmem:[%s250 + $0xe8] sm:$0xff]
      %v281 = vld [vmem:[%s250 + $0xf0] sm:$0xff]
      %v282 = vld [vmem:[%s250 + $0xf8] sm:$0xff]
      %v283 = vld [vmem:[%s250 + $0x100] sm:$0xff]
      %v284 = vld [vmem:[%s250 + $0x108] sm:$0xff]
      %v285 = vld [vmem:[%s1] sm:$0x1f]
      %s286 = sadd.s32 %s249, 1
      %s287 = scalar_lea.vmem %s237, %s286
      %v288 = vld [vmem:[%s287] sm:$0xff]
      %v289 = vld [vmem:[%s287 + $0x8] sm:$0xff]
      %v290 = vld [vmem:[%s287 + $0x10] sm:$0xff]
      %v291 = vld [vmem:[%s287 + $0x18] sm:$0xff]
      %v292 = vld [vmem:[%s287 + $0x20] sm:$0xff]
      %v293 = vld [vmem:[%s287 + $0x28] sm:$0xff]
      %v294 = vld [vmem:[%s287 + $0x30] sm:$0xff]
      %v295 = vld [vmem:[%s287 + $0x38] sm:$0xff]
      %v296 = vld [vmem:[%s287 + $0x40] sm:$0xff]
      %v297 = vld [vmem:[%s287 + $0x48] sm:$0xff]
      %v298 = vld [vmem:[%s287 + $0x50] sm:$0xff]
      %v299 = vld [vmem:[%s287 + $0x58] sm:$0xff]
      %v300 = vld [vmem:[%s287 + $0x60] sm:$0xff]
      %v301 = vld [vmem:[%s287 + $0x68] sm:$0xff]
      %v302 = vld [vmem:[%s287 + $0x70] sm:$0xff]
      %v303 = vld [vmem:[%s287 + $0x78] sm:$0xff]
      %v304 = vld [vmem:[%s287 + $0x80] sm:$0xff]
      %v305 = vld [vmem:[%s287 + $0x88] sm:$0xff]
      %v306 = vld [vmem:[%s287 + $0x90] sm:$0xff]
      %v307 = vld [vmem:[%s287 + $0x98] sm:$0xff]
      %v308 = vld [vmem:[%s287 + $0xa0] sm:$0xff]
      %v309 = vld [vmem:[%s287 + $0xa8] sm:$0xff]
      %v310 = vld [vmem:[%s287 + $0xb0] sm:$0xff]
      %v311 = vld [vmem:[%s287 + $0xb8] sm:$0xff]
      %v312 = vld [vmem:[%s287 + $0xc0] sm:$0xff]
      %v313 = vld [vmem:[%s287 + $0xc8] sm:$0xff]
      %v314 = vld [vmem:[%s287 + $0xd0] sm:$0xff]
      %v315 = vld [vmem:[%s287 + $0xd8] sm:$0xff]
      %v316 = vld [vmem:[%s287 + $0xe0] sm:$0xff]
      %v317 = vld [vmem:[%s287 + $0xe8] sm:$0xff]
      %v318 = vld [vmem:[%s287 + $0xf0] sm:$0xff]
      %v319 = vld [vmem:[%s287 + $0xf8] sm:$0xff]
      %v320 = vld [vmem:[%s287 + $0x100] sm:$0xff]
      %v321 = vld [vmem:[%s287 + $0x108] sm:$0xff]
      %s322 = scalar_lea.vmem %s1, 8
      %v323 = vld [vmem:[%s322] sm:$0x1f]
      %vm324 = vcmask 39936
      %v326 = vsel %vm324, %v288, 0
      %v329 = vsel %vm324, %v289, 0
      %v332 = vsel %vm324, %v290, 0
      %v335 = vsel %vm324, %v291, 0
      %v338 = vsel %vm324, %v292, 0
      %v341 = vsel %vm324, %v293, 0
      %v344 = vsel %vm324, %v294, 0
      %v347 = vsel %vm324, %v295, 0
      %v350 = vsel %vm324, %v296, 0
      %v353 = vsel %vm324, %v297, 0
      %v356 = vsel %vm324, %v298, 0
      %v359 = vsel %vm324, %v299, 0
      %v362 = vsel %vm324, %v300, 0
      %v365 = vsel %vm324, %v301, 0
      %v368 = vsel %vm324, %v302, 0
      %v371 = vsel %vm324, %v303, 0
      %v374 = vsel %vm324, %v304, 0
      %v377 = vsel %vm324, %v305, 0
      %v380 = vsel %vm324, %v306, 0
      %v383 = vsel %vm324, %v307, 0
      %v386 = vsel %vm324, %v308, 0
      %v389 = vsel %vm324, %v309, 0
      %v392 = vsel %vm324, %v310, 0
      %v395 = vsel %vm324, %v311, 0
      %v398 = vsel %vm324, %v312, 0
      %v401 = vsel %vm324, %v313, 0
      %v404 = vsel %vm324, %v314, 0
      %v407 = vsel %vm324, %v315, 0
      %v410 = vsel %vm324, %v316, 0
      %v413 = vsel %vm324, %v317, 0
      %v416 = vsel %vm324, %v318, 0
      %v419 = vsel %vm324, %v319, 0
      %v422 = vsel %vm324, %v320, 0
      %v425 = vsel %vm324, %v321, 0
      %vm427 = vcmask 1044480
      %v429 = vsel %vm427, %v323, 0
      %431 = vmatpush.msra.mxu0 0.0
      %432 = vmatpush.msra.mxu0 0.0
      %433 = vmatpush.msra.mxu0 0.0
      %434 = vmatpush.msra.mxu0 0.0
      %435 = vmatpush.msra.mxu0 0.0
      %436 = vmatpush.msra.mxu0 0.0
      %437 = vmatpush.msra.mxu0 0.0
      %438 = vmatpush.msra.mxu0 0.0
      %439 = vmatpush.msra.mxu0 0.0
      %440 = vmatpush.msra.mxu0 0.0
      %441 = vmatpush.msra.mxu0 0.0
      %442 = vmatpush.msra.mxu0 0.0
      %443 = vmatpush.msra.mxu0 0.0
      %444 = vmatpush.msra.mxu0 0.0
      %445 = vmatpush.msra.mxu0 0.0
      %446 = vmatpush.msra.mxu0 %v429
      %447 = vmatmul.f32.gmra.mxu0 %v326
      %v448 = vpop.f32.mrf.mxu0
      %v449 = vadd.f32 0.0, %v448
      %450 = vmatmul.f32.gmra.mxu0 %v329
      %v451 = vpop.f32.mrf.mxu0
      %v452 = vadd.f32 0.0, %v451
      %453 = vmatmul.f32.gmra.mxu0 %v332
      %v454 = vpop.f32.mrf.mxu0
      %v455 = vadd.f32 0.0, %v454
      %456 = vmatmul.f32.gmra.mxu0 %v335
      %v457 = vpop.f32.mrf.mxu0
      %v458 = vadd.f32 0.0, %v457
      %459 = vmatmul.f32.gmra.mxu0 %v338
      %v460 = vpop.f32.mrf.mxu0
      %v461 = vadd.f32 0.0, %v460
      %462 = vmatmul.f32.gmra.mxu0 %v341
      %v463 = vpop.f32.mrf.mxu0
      %v464 = vadd.f32 0.0, %v463
      %465 = vmatmul.f32.gmra.mxu0 %v344
      %v466 = vpop.f32.mrf.mxu0
      %v467 = vadd.f32 0.0, %v466
      %468 = vmatmul.f32.gmra.mxu0 %v347
      %v469 = vpop.f32.mrf.mxu0
      %v470 = vadd.f32 0.0, %v469
      %471 = vmatmul.f32.gmra.mxu0 %v350
      %v472 = vpop.f32.mrf.mxu0
      %v473 = vadd.f32 0.0, %v472
      %474 = vmatmul.f32.gmra.mxu0 %v353
      %v475 = vpop.f32.mrf.mxu0
      %v476 = vadd.f32 0.0, %v475
      %477 = vmatmul.f32.gmra.mxu0 %v356
      %v478 = vpop.f32.mrf.mxu0
      %v479 = vadd.f32 0.0, %v478
      %480 = vmatmul.f32.gmra.mxu0 %v359
      %v481 = vpop.f32.mrf.mxu0
      %v482 = vadd.f32 0.0, %v481
      %483 = vmatmul.f32.gmra.mxu0 %v362
      %v484 = vpop.f32.mrf.mxu0
      %v485 = vadd.f32 0.0, %v484
      %486 = vmatmul.f32.gmra.mxu0 %v365
      %v487 = vpop.f32.mrf.mxu0
      %v488 = vadd.f32 0.0, %v487
      %489 = vmatmul.f32.gmra.mxu0 %v368
      %v490 = vpop.f32.mrf.mxu0
      %v491 = vadd.f32 0.0, %v490
      %492 = vmatmul.f32.gmra.mxu0 %v371
      %v493 = vpop.f32.mrf.mxu0
      %v494 = vadd.f32 0.0, %v493
      %495 = vmatmul.f32.gmra.mxu0 %v374
      %v496 = vpop.f32.mrf.mxu0
      %v497 = vadd.f32 0.0, %v496
      %498 = vmatmul.f32.gmra.mxu0 %v377
      %v499 = vpop.f32.mrf.mxu0
      %v500 = vadd.f32 0.0, %v499
      %501 = vmatmul.f32.gmra.mxu0 %v380
      %v502 = vpop.f32.mrf.mxu0
      %v503 = vadd.f32 0.0, %v502
      %504 = vmatmul.f32.gmra.mxu0 %v383
      %v505 = vpop.f32.mrf.mxu0
      %v506 = vadd.f32 0.0, %v505
      %507 = vmatmul.f32.gmra.mxu0 %v386
      %v508 = vpop.f32.mrf.mxu0
      %v509 = vadd.f32 0.0, %v508
      %510 = vmatmul.f32.gmra.mxu0 %v389
      %v511 = vpop.f32.mrf.mxu0
      %v512 = vadd.f32 0.0, %v511
      %513 = vmatmul.f32.gmra.mxu0 %v392
      %v514 = vpop.f32.mrf.mxu0
      %v515 = vadd.f32 0.0, %v514
      %516 = vmatmul.f32.gmra.mxu0 %v395
      %v517 = vpop.f32.mrf.mxu0
      %v518 = vadd.f32 0.0, %v517
      %519 = vmatmul.f32.gmra.mxu0 %v398
      %v520 = vpop.f32.mrf.mxu0
      %v521 = vadd.f32 0.0, %v520
      %522 = vmatmul.f32.gmra.mxu0 %v401
      %v523 = vpop.f32.mrf.mxu0
      %v524 = vadd.f32 0.0, %v523
      %525 = vmatmul.f32.gmra.mxu0 %v404
      %v526 = vpop.f32.mrf.mxu0
      %v527 = vadd.f32 0.0, %v526
      %528 = vmatmul.f32.gmra.mxu0 %v407
      %v529 = vpop.f32.mrf.mxu0
      %v530 = vadd.f32 0.0, %v529
      %531 = vmatmul.f32.gmra.mxu0 %v410
      %v532 = vpop.f32.mrf.mxu0
      %v533 = vadd.f32 0.0, %v532
      %534 = vmatmul.f32.gmra.mxu0 %v413
      %v535 = vpop.f32.mrf.mxu0
      %v536 = vadd.f32 0.0, %v535
      %537 = vmatmul.f32.gmra.mxu0 %v416
      %v538 = vpop.f32.mrf.mxu0
      %v539 = vadd.f32 0.0, %v538
      %540 = vmatmul.f32.gmra.mxu0 %v419
      %v541 = vpop.f32.mrf.mxu0
      %v542 = vadd.f32 0.0, %v541
      %543 = vmatmul.f32.gmra.mxu0 %v422
      %v544 = vpop.f32.mrf.mxu0
      %v545 = vadd.f32 0.0, %v544
      %546 = vmatmul.f32.gmra.mxu0 %v425
      %v547 = vpop.f32.mrf.mxu0
      %v548 = vadd.f32 0.0, %v547
      %549 = vdwg.mxu0
      %v551 = vsel %vm324, %v251, 0
      %v554 = vsel %vm324, %v252, 0
      %v557 = vsel %vm324, %v253, 0
      %v560 = vsel %vm324, %v254, 0
      %v563 = vsel %vm324, %v255, 0
      %v566 = vsel %vm324, %v256, 0
      %v569 = vsel %vm324, %v257, 0
      %v572 = vsel %vm324, %v258, 0
      %v575 = vsel %vm324, %v259, 0
      %v578 = vsel %vm324, %v260, 0
      %v581 = vsel %vm324, %v261, 0
      %v584 = vsel %vm324, %v262, 0
      %v587 = vsel %vm324, %v263, 0
      %v590 = vsel %vm324, %v264, 0
      %v593 = vsel %vm324, %v265, 0
      %v596 = vsel %vm324, %v266, 0
      %v599 = vsel %vm324, %v267, 0
      %v602 = vsel %vm324, %v268, 0
      %v605 = vsel %vm324, %v269, 0
      %v608 = vsel %vm324, %v270, 0
      %v611 = vsel %vm324, %v271, 0
      %v614 = vsel %vm324, %v272, 0
      %v617 = vsel %vm324, %v273, 0
      %v620 = vsel %vm324, %v274, 0
      %v623 = vsel %vm324, %v275, 0
      %v626 = vsel %vm324, %v276, 0
      %v629 = vsel %vm324, %v277, 0
      %v632 = vsel %vm324, %v278, 0
      %v635 = vsel %vm324, %v279, 0
      %v638 = vsel %vm324, %v280, 0
      %v641 = vsel %vm324, %v281, 0
      %v644 = vsel %vm324, %v282, 0
      %v647 = vsel %vm324, %v283, 0
      %v650 = vsel %vm324, %v284, 0
      %v653 = vsel %vm427, %v285, 0
      %655 = vmatpush.msra.mxu0 0.0
      %656 = vmatpush.msra.mxu0 0.0
      %657 = vmatpush.msra.mxu0 0.0
      %658 = vmatpush.msra.mxu0 0.0
      %659 = vmatpush.msra.mxu0 0.0
      %660 = vmatpush.msra.mxu0 0.0
      %661 = vmatpush.msra.mxu0 0.0
      %662 = vmatpush.msra.mxu0 0.0
      %663 = vmatpush.msra.mxu0 0.0
      %664 = vmatpush.msra.mxu0 0.0
      %665 = vmatpush.msra.mxu0 0.0
      %666 = vmatpush.msra.mxu0 0.0
      %667 = vmatpush.msra.mxu0 0.0
      %668 = vmatpush.msra.mxu0 0.0
      %669 = vmatpush.msra.mxu0 0.0
      %670 = vmatpush.msra.mxu0 %v653
      %671 = vmatmul.f32.gmra.mxu0 %v551
      %v672 = vpop.f32.mrf.mxu0
      %v673 = vadd.f32 %v449, %v672
      %674 = vmatmul.f32.gmra.mxu0 %v554
      %v675 = vpop.f32.mrf.mxu0
      %v676 = vadd.f32 %v452, %v675
      %677 = vmatmul.f32.gmra.mxu0 %v557
      %v678 = vpop.f32.mrf.mxu0
      %v679 = vadd.f32 %v455, %v678
      %680 = vmatmul.f32.gmra.mxu0 %v560
      %v681 = vpop.f32.mrf.mxu0
      %v682 = vadd.f32 %v458, %v681
      %683 = vmatmul.f32.gmra.mxu0 %v563
      %v684 = vpop.f32.mrf.mxu0
      %v685 = vadd.f32 %v461, %v684
      %686 = vmatmul.f32.gmra.mxu0 %v566
      %v687 = vpop.f32.mrf.mxu0
      %v688 = vadd.f32 %v464, %v687
      %689 = vmatmul.f32.gmra.mxu0 %v569
      %v690 = vpop.f32.mrf.mxu0
      %v691 = vadd.f32 %v467, %v690
      %692 = vmatmul.f32.gmra.mxu0 %v572
      %v693 = vpop.f32.mrf.mxu0
      %v694 = vadd.f32 %v470, %v693
      %695 = vmatmul.f32.gmra.mxu0 %v575
      %v696 = vpop.f32.mrf.mxu0
      %v697 = vadd.f32 %v473, %v696
      %698 = vmatmul.f32.gmra.mxu0 %v578
      %v699 = vpop.f32.mrf.mxu0
      %v700 = vadd.f32 %v476, %v699
      %701 = vmatmul.f32.gmra.mxu0 %v581
      %v702 = vpop.f32.mrf.mxu0
      %v703 = vadd.f32 %v479, %v702
      %704 = vmatmul.f32.gmra.mxu0 %v584
      %v705 = vpop.f32.mrf.mxu0
      %v706 = vadd.f32 %v482, %v705
      %707 = vmatmul.f32.gmra.mxu0 %v587
      %v708 = vpop.f32.mrf.mxu0
      %v709 = vadd.f32 %v485, %v708
      %710 = vmatmul.f32.gmra.mxu0 %v590
      %v711 = vpop.f32.mrf.mxu0
      %v712 = vadd.f32 %v488, %v711
      %713 = vmatmul.f32.gmra.mxu0 %v593
      %v714 = vpop.f32.mrf.mxu0
      %v715 = vadd.f32 %v491, %v714
      %716 = vmatmul.f32.gmra.mxu0 %v596
      %v717 = vpop.f32.mrf.mxu0
      %v718 = vadd.f32 %v494, %v717
      %719 = vmatmul.f32.gmra.mxu0 %v599
      %v720 = vpop.f32.mrf.mxu0
      %v721 = vadd.f32 %v497, %v720
      %722 = vmatmul.f32.gmra.mxu0 %v602
      %v723 = vpop.f32.mrf.mxu0
      %v724 = vadd.f32 %v500, %v723
      %725 = vmatmul.f32.gmra.mxu0 %v605
      %v726 = vpop.f32.mrf.mxu0
      %v727 = vadd.f32 %v503, %v726
      %728 = vmatmul.f32.gmra.mxu0 %v608
      %v729 = vpop.f32.mrf.mxu0
      %v730 = vadd.f32 %v506, %v729
      %731 = vmatmul.f32.gmra.mxu0 %v611
      %v732 = vpop.f32.mrf.mxu0
      %v733 = vadd.f32 %v509, %v732
      %734 = vmatmul.f32.gmra.mxu0 %v614
      %v735 = vpop.f32.mrf.mxu0
      %v736 = vadd.f32 %v512, %v735
      %737 = vmatmul.f32.gmra.mxu0 %v617
      %v738 = vpop.f32.mrf.mxu0
      %v739 = vadd.f32 %v515, %v738
      %740 = vmatmul.f32.gmra.mxu0 %v620
      %v741 = vpop.f32.mrf.mxu0
      %v742 = vadd.f32 %v518, %v741
      %743 = vmatmul.f32.gmra.mxu0 %v623
      %v744 = vpop.f32.mrf.mxu0
      %v745 = vadd.f32 %v521, %v744
      %746 = vmatmul.f32.gmra.mxu0 %v626
      %v747 = vpop.f32.mrf.mxu0
      %v748 = vadd.f32 %v524, %v747
      %749 = vmatmul.f32.gmra.mxu0 %v629
      %v750 = vpop.f32.mrf.mxu0
      %v751 = vadd.f32 %v527, %v750
      %752 = vmatmul.f32.gmra.mxu0 %v632
      %v753 = vpop.f32.mrf.mxu0
      %v754 = vadd.f32 %v530, %v753
      %755 = vmatmul.f32.gmra.mxu0 %v635
      %v756 = vpop.f32.mrf.mxu0
      %v757 = vadd.f32 %v533, %v756
      %758 = vmatmul.f32.gmra.mxu0 %v638
      %v759 = vpop.f32.mrf.mxu0
      %v760 = vadd.f32 %v536, %v759
      %761 = vmatmul.f32.gmra.mxu0 %v641
      %v762 = vpop.f32.mrf.mxu0
      %v763 = vadd.f32 %v539, %v762
      %764 = vmatmul.f32.gmra.mxu0 %v644
      %v765 = vpop.f32.mrf.mxu0
      %v766 = vadd.f32 %v542, %v765
      %767 = vmatmul.f32.gmra.mxu0 %v647
      %v768 = vpop.f32.mrf.mxu0
      %v769 = vadd.f32 %v545, %v768
      %770 = vmatmul.f32.gmra.mxu0 %v650
      %v771 = vpop.f32.mrf.mxu0
      %v772 = vadd.f32 %v548, %v771
      %773 = vdwg.mxu0
      %s774 = sadd.s32 %s249, 2
      %s775 = scalar_lea.vmem %s237, %s774
      %v776 = vld [vmem:[%s775] sm:$0xff]
      %v777 = vld [vmem:[%s775 + $0x8] sm:$0xff]
      %v778 = vld [vmem:[%s775 + $0x10] sm:$0xff]
      %v779 = vld [vmem:[%s775 + $0x18] sm:$0xff]
      %v780 = vld [vmem:[%s775 + $0x20] sm:$0xff]
      %v781 = vld [vmem:[%s775 + $0x28] sm:$0xff]
      %v782 = vld [vmem:[%s775 + $0x30] sm:$0xff]
      %v783 = vld [vmem:[%s775 + $0x38] sm:$0xff]
      %v784 = vld [vmem:[%s775 + $0x40] sm:$0xff]
      %v785 = vld [vmem:[%s775 + $0x48] sm:$0xff]
      %v786 = vld [vmem:[%s775 + $0x50] sm:$0xff]
      %v787 = vld [vmem:[%s775 + $0x58] sm:$0xff]
      %v788 = vld [vmem:[%s775 + $0x60] sm:$0xff]
      %v789 = vld [vmem:[%s775 + $0x68] sm:$0xff]
      %v790 = vld [vmem:[%s775 + $0x70] sm:$0xff]
      %v791 = vld [vmem:[%s775 + $0x78] sm:$0xff]
      %v792 = vld [vmem:[%s775 + $0x80] sm:$0xff]
      %v793 = vld [vmem:[%s775 + $0x88] sm:$0xff]
      %v794 = vld [vmem:[%s775 + $0x90] sm:$0xff]
      %v795 = vld [vmem:[%s775 + $0x98] sm:$0xff]
      %v796 = vld [vmem:[%s775 + $0xa0] sm:$0xff]
      %v797 = vld [vmem:[%s775 + $0xa8] sm:$0xff]
      %v798 = vld [vmem:[%s775 + $0xb0] sm:$0xff]
      %v799 = vld [vmem:[%s775 + $0xb8] sm:$0xff]
      %v800 = vld [vmem:[%s775 + $0xc0] sm:$0xff]
      %v801 = vld [vmem:[%s775 + $0xc8] sm:$0xff]
      %v802 = vld [vmem:[%s775 + $0xd0] sm:$0xff]
      %v803 = vld [vmem:[%s775 + $0xd8] sm:$0xff]
      %v804 = vld [vmem:[%s775 + $0xe0] sm:$0xff]
      %v805 = vld [vmem:[%s775 + $0xe8] sm:$0xff]
      %v806 = vld [vmem:[%s775 + $0xf0] sm:$0xff]
      %v807 = vld [vmem:[%s775 + $0xf8] sm:$0xff]
      %v808 = vld [vmem:[%s775 + $0x100] sm:$0xff]
      %v809 = vld [vmem:[%s775 + $0x108] sm:$0xff]
      %s810 = scalar_lea.vmem %s1, 16
      %v811 = vld [vmem:[%s810] sm:$0x1f]
      %v813 = vsel %vm324, %v776, 0
      %v816 = vsel %vm324, %v777, 0
      %v819 = vsel %vm324, %v778, 0
      %v822 = vsel %vm324, %v779, 0
      %v825 = vsel %vm324, %v780, 0
      %v828 = vsel %vm324, %v781, 0
      %v831 = vsel %vm324, %v782, 0
      %v834 = vsel %vm324, %v783, 0
      %v837 = vsel %vm324, %v784, 0
      %v840 = vsel %vm324, %v785, 0
      %v843 = vsel %vm324, %v786, 0
      %v846 = vsel %vm324, %v787, 0
      %v849 = vsel %vm324, %v788, 0
      %v852 = vsel %vm324, %v789, 0
      %v855 = vsel %vm324, %v790, 0
      %v858 = vsel %vm324, %v791, 0
      %v861 = vsel %vm324, %v792, 0
      %v864 = vsel %vm324, %v793, 0
      %v867 = vsel %vm324, %v794, 0
      %v870 = vsel %vm324, %v795, 0
      %v873 = vsel %vm324, %v796, 0
      %v876 = vsel %vm324, %v797, 0
      %v879 = vsel %vm324, %v798, 0
      %v882 = vsel %vm324, %v799, 0
      %v885 = vsel %vm324, %v800, 0
      %v888 = vsel %vm324, %v801, 0
      %v891 = vsel %vm324, %v802, 0
      %v894 = vsel %vm324, %v803, 0
      %v897 = vsel %vm324, %v804, 0
      %v900 = vsel %vm324, %v805, 0
      %v903 = vsel %vm324, %v806, 0
      %v906 = vsel %vm324, %v807, 0
      %v909 = vsel %vm324, %v808, 0
      %v912 = vsel %vm324, %v809, 0
      %v915 = vsel %vm427, %v811, 0
      %917 = vmatpush.msra.mxu0 0.0
      %918 = vmatpush.msra.mxu0 0.0
      %919 = vmatpush.msra.mxu0 0.0
      %920 = vmatpush.msra.mxu0 0.0
      %921 = vmatpush.msra.mxu0 0.0
      %922 = vmatpush.msra.mxu0 0.0
      %923 = vmatpush.msra.mxu0 0.0
      %924 = vmatpush.msra.mxu0 0.0
      %925 = vmatpush.msra.mxu0 0.0
      %926 = vmatpush.msra.mxu0 0.0
      %927 = vmatpush.msra.mxu0 0.0
      %928 = vmatpush.msra.mxu0 0.0
      %929 = vmatpush.msra.mxu0 0.0
      %930 = vmatpush.msra.mxu0 0.0
      %931 = vmatpush.msra.mxu0 0.0
      %932 = vmatpush.msra.mxu0 %v915
      %933 = vmatmul.f32.gmra.mxu0 %v813
      %v934 = vpop.f32.mrf.mxu0
      %v935 = vadd.f32 0.0, %v934
      %936 = vmatmul.f32.gmra.mxu0 %v816
      %v937 = vpop.f32.mrf.mxu0
      %v938 = vadd.f32 0.0, %v937
      %939 = vmatmul.f32.gmra.mxu0 %v819
      %v940 = vpop.f32.mrf.mxu0
      %v941 = vadd.f32 0.0, %v940
      %942 = vmatmul.f32.gmra.mxu0 %v822
      %v943 = vpop.f32.mrf.mxu0
      %v944 = vadd.f32 0.0, %v943
      %945 = vmatmul.f32.gmra.mxu0 %v825
      %v946 = vpop.f32.mrf.mxu0
      %v947 = vadd.f32 0.0, %v946
      %948 = vmatmul.f32.gmra.mxu0 %v828
      %v949 = vpop.f32.mrf.mxu0
      %v950 = vadd.f32 0.0, %v949
      %951 = vmatmul.f32.gmra.mxu0 %v831
      %v952 = vpop.f32.mrf.mxu0
      %v953 = vadd.f32 0.0, %v952
      %954 = vmatmul.f32.gmra.mxu0 %v834
      %v955 = vpop.f32.mrf.mxu0
      %v956 = vadd.f32 0.0, %v955
      %957 = vmatmul.f32.gmra.mxu0 %v837
      %v958 = vpop.f32.mrf.mxu0
      %v959 = vadd.f32 0.0, %v958
      %960 = vmatmul.f32.gmra.mxu0 %v840
      %v961 = vpop.f32.mrf.mxu0
      %v962 = vadd.f32 0.0, %v961
      %963 = vmatmul.f32.gmra.mxu0 %v843
      %v964 = vpop.f32.mrf.mxu0
      %v965 = vadd.f32 0.0, %v964
      %966 = vmatmul.f32.gmra.mxu0 %v846
      %v967 = vpop.f32.mrf.mxu0
      %v968 = vadd.f32 0.0, %v967
      %969 = vmatmul.f32.gmra.mxu0 %v849
      %v970 = vpop.f32.mrf.mxu0
      %v971 = vadd.f32 0.0, %v970
      %972 = vmatmul.f32.gmra.mxu0 %v852
      %v973 = vpop.f32.mrf.mxu0
      %v974 = vadd.f32 0.0, %v973
      %975 = vmatmul.f32.gmra.mxu0 %v855
      %v976 = vpop.f32.mrf.mxu0
      %v977 = vadd.f32 0.0, %v976
      %978 = vmatmul.f32.gmra.mxu0 %v858
      %v979 = vpop.f32.mrf.mxu0
      %v980 = vadd.f32 0.0, %v979
      %981 = vmatmul.f32.gmra.mxu0 %v861
      %v982 = vpop.f32.mrf.mxu0
      %v983 = vadd.f32 0.0, %v982
      %984 = vmatmul.f32.gmra.mxu0 %v864
      %v985 = vpop.f32.mrf.mxu0
      %v986 = vadd.f32 0.0, %v985
      %987 = vmatmul.f32.gmra.mxu0 %v867
      %v988 = vpop.f32.mrf.mxu0
      %v989 = vadd.f32 0.0, %v988
      %990 = vmatmul.f32.gmra.mxu0 %v870
      %v991 = vpop.f32.mrf.mxu0
      %v992 = vadd.f32 0.0, %v991
      %993 = vmatmul.f32.gmra.mxu0 %v873
      %v994 = vpop.f32.mrf.mxu0
      %v995 = vadd.f32 0.0, %v994
      %996 = vmatmul.f32.gmra.mxu0 %v876
      %v997 = vpop.f32.mrf.mxu0
      %v998 = vadd.f32 0.0, %v997
      %999 = vmatmul.f32.gmra.mxu0 %v879
      %v1000 = vpop.f32.mrf.mxu0
      %v1001 = vadd.f32 0.0, %v1000
      %1002 = vmatmul.f32.gmra.mxu0 %v882
      %v1003 = vpop.f32.mrf.mxu0
      %v1004 = vadd.f32 0.0, %v1003
      %1005 = vmatmul.f32.gmra.mxu0 %v885
      %v1006 = vpop.f32.mrf.mxu0
      %v1007 = vadd.f32 0.0, %v1006
      %1008 = vmatmul.f32.gmra.mxu0 %v888
      %v1009 = vpop.f32.mrf.mxu0
      %v1010 = vadd.f32 0.0, %v1009
      %1011 = vmatmul.f32.gmra.mxu0 %v891
      %v1012 = vpop.f32.mrf.mxu0
      %v1013 = vadd.f32 0.0, %v1012
      %1014 = vmatmul.f32.gmra.mxu0 %v894
      %v1015 = vpop.f32.mrf.mxu0
      %v1016 = vadd.f32 0.0, %v1015
      %1017 = vmatmul.f32.gmra.mxu0 %v897
      %v1018 = vpop.f32.mrf.mxu0
      %v1019 = vadd.f32 0.0, %v1018
      %1020 = vmatmul.f32.gmra.mxu0 %v900
      %v1021 = vpop.f32.mrf.mxu0
      %v1022 = vadd.f32 0.0, %v1021
      %1023 = vmatmul.f32.gmra.mxu0 %v903
      %v1024 = vpop.f32.mrf.mxu0
      %v1025 = vadd.f32 0.0, %v1024
      %1026 = vmatmul.f32.gmra.mxu0 %v906
      %v1027 = vpop.f32.mrf.mxu0
      %v1028 = vadd.f32 0.0, %v1027
      %1029 = vmatmul.f32.gmra.mxu0 %v909
      %v1030 = vpop.f32.mrf.mxu0
      %v1031 = vadd.f32 0.0, %v1030
      %1032 = vmatmul.f32.gmra.mxu0 %v912
      %v1033 = vpop.f32.mrf.mxu0
      %v1034 = vadd.f32 0.0, %v1033
      %1035 = vdwg.mxu0
      %v1036 = vadd.f32 %v673, %v935
      %v1037 = vadd.f32 %v676, %v938
      %v1038 = vadd.f32 %v679, %v941
      %v1039 = vadd.f32 %v682, %v944
      %v1040 = vadd.f32 %v685, %v947
      %v1041 = vadd.f32 %v688, %v950
      %v1042 = vadd.f32 %v691, %v953
      %v1043 = vadd.f32 %v694, %v956
      %v1044 = vadd.f32 %v697, %v959
      %v1045 = vadd.f32 %v700, %v962
      %v1046 = vadd.f32 %v703, %v965
      %v1047 = vadd.f32 %v706, %v968
      %v1048 = vadd.f32 %v709, %v971
      %v1049 = vadd.f32 %v712, %v974
      %v1050 = vadd.f32 %v715, %v977
      %v1051 = vadd.f32 %v718, %v980
      %v1052 = vadd.f32 %v721, %v983
      %v1053 = vadd.f32 %v724, %v986
      %v1054 = vadd.f32 %v727, %v989
      %v1055 = vadd.f32 %v730, %v992
      %v1056 = vadd.f32 %v733, %v995
      %v1057 = vadd.f32 %v736, %v998
      %v1058 = vadd.f32 %v739, %v1001
      %v1059 = vadd.f32 %v742, %v1004
      %v1060 = vadd.f32 %v745, %v1007
      %v1061 = vadd.f32 %v748, %v1010
      %v1062 = vadd.f32 %v751, %v1013
      %v1063 = vadd.f32 %v754, %v1016
      %v1064 = vadd.f32 %v757, %v1019
      %v1065 = vadd.f32 %v760, %v1022
      %v1066 = vadd.f32 %v763, %v1025
      %v1067 = vadd.f32 %v766, %v1028
      %v1068 = vadd.f32 %v769, %v1031
      %v1069 = vadd.f32 %v772, %v1034
      %v1070 = vld [vmem:[%s2] sm:$0x1]
      %v1072 = vperm.slane %v1070, 0
      %v1074 = vadd.f32 %v1036, %v1072
      %v1075 = vadd.f32 %v1037, %v1072
      %v1076 = vadd.f32 %v1038, %v1072
      %v1077 = vadd.f32 %v1039, %v1072
      %v1078 = vadd.f32 %v1040, %v1072
      %v1079 = vadd.f32 %v1041, %v1072
      %v1080 = vadd.f32 %v1042, %v1072
      %v1081 = vadd.f32 %v1043, %v1072
      %v1082 = vadd.f32 %v1044, %v1072
      %v1083 = vadd.f32 %v1045, %v1072
      %v1084 = vadd.f32 %v1046, %v1072
      %v1085 = vadd.f32 %v1047, %v1072
      %v1086 = vadd.f32 %v1048, %v1072
      %v1087 = vadd.f32 %v1049, %v1072
      %v1088 = vadd.f32 %v1050, %v1072
      %v1089 = vadd.f32 %v1051, %v1072
      %v1090 = vadd.f32 %v1052, %v1072
      %v1091 = vadd.f32 %v1053, %v1072
      %v1092 = vadd.f32 %v1054, %v1072
      %v1093 = vadd.f32 %v1055, %v1072
      %v1094 = vadd.f32 %v1056, %v1072
      %v1095 = vadd.f32 %v1057, %v1072
      %v1096 = vadd.f32 %v1058, %v1072
      %v1097 = vadd.f32 %v1059, %v1072
      %v1098 = vadd.f32 %v1060, %v1072
      %v1099 = vadd.f32 %v1061, %v1072
      %v1100 = vadd.f32 %v1062, %v1072
      %v1101 = vadd.f32 %v1063, %v1072
      %v1102 = vadd.f32 %v1064, %v1072
      %v1103 = vadd.f32 %v1065, %v1072
      %v1104 = vadd.f32 %v1066, %v1072
      %v1105 = vadd.f32 %v1067, %v1072
      %v1106 = vadd.f32 %v1068, %v1072
      %v1107 = vadd.f32 %v1069, %v1072
      %s1108 = ssub.s32 %s249, 8
      %v1109 = vlaneseq
      %v1110 = vshrl.u32 %v1109, 7
      %v1111 = vadd.s32 %v1110, 8
      %v1112 = vadd.s32 %v1110, 16
      %v1113 = vadd.s32 %v1110, 24
      %v1114 = vadd.s32 %v1110, 32
      %v1115 = vadd.s32 %v1110, 40
      %v1116 = vadd.s32 %v1110, 48
      %v1117 = vadd.s32 %v1110, 56
      %v1118 = vadd.s32 %v1110, 64
      %v1119 = vadd.s32 %v1110, 72
      %v1120 = vadd.s32 %v1110, 80
      %v1121 = vadd.s32 %v1110, 88
      %v1122 = vadd.s32 %v1110, 96
      %v1123 = vadd.s32 %v1110, 104
      %v1124 = vadd.s32 %v1110, 112
      %v1125 = vadd.s32 %v1110, 120
      %v1126 = vadd.s32 %v1110, 128
      %v1127 = vadd.s32 %v1110, 136
      %v1128 = vadd.s32 %v1110, 144
      %v1129 = vadd.s32 %v1110, 152
      %v1130 = vadd.s32 %v1110, 160
      %v1131 = vadd.s32 %v1110, 168
      %v1132 = vadd.s32 %v1110, 176
      %v1133 = vadd.s32 %v1110, 184
      %v1134 = vadd.s32 %v1110, 192
      %v1135 = vadd.s32 %v1110, 200
      %v1136 = vadd.s32 %v1110, 208
      %v1137 = vadd.s32 %v1110, 216
      %v1138 = vadd.s32 %v1110, 224
      %v1139 = vadd.s32 %v1110, 232
      %v1140 = vadd.s32 %v1110, 240
      %v1141 = vadd.s32 %v1110, 248
      %v1142 = vadd.s32 %v1110, 256
      %v1143 = vadd.s32 %v1110, 264
      %v1144 = vstv %s1108
      %v1145 = vadd.s32 %v1144, %v1110
      %v1146 = vadd.s32 %v1144, %v1111
      %v1147 = vadd.s32 %v1144, %v1112
      %v1148 = vadd.s32 %v1144, %v1113
      %v1149 = vadd.s32 %v1144, %v1114
      %v1150 = vadd.s32 %v1144, %v1115
      %v1151 = vadd.s32 %v1144, %v1116
      %v1152 = vadd.s32 %v1144, %v1117
      %v1153 = vadd.s32 %v1144, %v1118
      %v1154 = vadd.s32 %v1144, %v1119
      %v1155 = vadd.s32 %v1144, %v1120
      %v1156 = vadd.s32 %v1144, %v1121
      %v1157 = vadd.s32 %v1144, %v1122
      %v1158 = vadd.s32 %v1144, %v1123
      %v1159 = vadd.s32 %v1144, %v1124
      %v1160 = vadd.s32 %v1144, %v1125
      %v1161 = vadd.s32 %v1144, %v1126
      %v1162 = vadd.s32 %v1144, %v1127
      %v1163 = vadd.s32 %v1144, %v1128
      %v1164 = vadd.s32 %v1144, %v1129
      %v1165 = vadd.s32 %v1144, %v1130
      %v1166 = vadd.s32 %v1144, %v1131
      %v1167 = vadd.s32 %v1144, %v1132
      %v1168 = vadd.s32 %v1144, %v1133
      %v1169 = vadd.s32 %v1144, %v1134
      %v1170 = vadd.s32 %v1144, %v1135
      %v1171 = vadd.s32 %v1144, %v1136
      %v1172 = vadd.s32 %v1144, %v1137
      %v1173 = vadd.s32 %v1144, %v1138
      %v1174 = vadd.s32 %v1144, %v1139
      %v1175 = vadd.s32 %v1144, %v1140
      %v1176 = vadd.s32 %v1144, %v1141
      %v1177 = vadd.s32 %v1144, %v1142
      %v1178 = vadd.s32 %v1144, %v1143
      %vm1179 = vcmp.ge.s32.totalorder %v1145, 0
      %vm1180 = vcmp.ge.s32.totalorder %v1146, 0
      %vm1181 = vcmp.ge.s32.totalorder %v1147, 0
      %vm1182 = vcmp.ge.s32.totalorder %v1148, 0
      %vm1183 = vcmp.ge.s32.totalorder %v1149, 0
      %vm1184 = vcmp.ge.s32.totalorder %v1150, 0
      %vm1185 = vcmp.ge.s32.totalorder %v1151, 0
      %vm1186 = vcmp.ge.s32.totalorder %v1152, 0
      %vm1187 = vcmp.ge.s32.totalorder %v1153, 0
      %vm1188 = vcmp.ge.s32.totalorder %v1154, 0
      %vm1189 = vcmp.ge.s32.totalorder %v1155, 0
      %vm1190 = vcmp.ge.s32.totalorder %v1156, 0
      %vm1191 = vcmp.ge.s32.totalorder %v1157, 0
      %vm1192 = vcmp.ge.s32.totalorder %v1158, 0
      %vm1193 = vcmp.ge.s32.totalorder %v1159, 0
      %vm1194 = vcmp.ge.s32.totalorder %v1160, 0
      %vm1195 = vcmp.ge.s32.totalorder %v1161, 0
      %vm1196 = vcmp.ge.s32.totalorder %v1162, 0
      %vm1197 = vcmp.ge.s32.totalorder %v1163, 0
      %vm1198 = vcmp.ge.s32.totalorder %v1164, 0
      %vm1199 = vcmp.ge.s32.totalorder %v1165, 0
      %vm1200 = vcmp.ge.s32.totalorder %v1166, 0
      %vm1201 = vcmp.ge.s32.totalorder %v1167, 0
      %vm1202 = vcmp.ge.s32.totalorder %v1168, 0
      %vm1203 = vcmp.ge.s32.totalorder %v1169, 0
      %vm1204 = vcmp.ge.s32.totalorder %v1170, 0
      %vm1205 = vcmp.ge.s32.totalorder %v1171, 0
      %vm1206 = vcmp.ge.s32.totalorder %v1172, 0
      %vm1207 = vcmp.ge.s32.totalorder %v1173, 0
      %vm1208 = vcmp.ge.s32.totalorder %v1174, 0
      %vm1209 = vcmp.ge.s32.totalorder %v1175, 0
      %vm1210 = vcmp.ge.s32.totalorder %v1176, 0
      %vm1211 = vcmp.ge.s32.totalorder %v1177, 0
      %vm1212 = vcmp.ge.s32.totalorder %v1178, 0
      %vm1213 = vcmp.lt.s32.totalorder %v1145, 838
      %vm1214 = vcmp.lt.s32.totalorder %v1146, 838
      %vm1215 = vcmp.lt.s32.totalorder %v1147, 838
      %vm1216 = vcmp.lt.s32.totalorder %v1148, 838
      %vm1217 = vcmp.lt.s32.totalorder %v1149, 838
      %vm1218 = vcmp.lt.s32.totalorder %v1150, 838
      %vm1219 = vcmp.lt.s32.totalorder %v1151, 838
      %vm1220 = vcmp.lt.s32.totalorder %v1152, 838
      %vm1221 = vcmp.lt.s32.totalorder %v1153, 838
      %vm1222 = vcmp.lt.s32.totalorder %v1154, 838
      %vm1223 = vcmp.lt.s32.totalorder %v1155, 838
      %vm1224 = vcmp.lt.s32.totalorder %v1156, 838
      %vm1225 = vcmp.lt.s32.totalorder %v1157, 838
      %vm1226 = vcmp.lt.s32.totalorder %v1158, 838
      %vm1227 = vcmp.lt.s32.totalorder %v1159, 838
      %vm1228 = vcmp.lt.s32.totalorder %v1160, 838
      %vm1229 = vcmp.lt.s32.totalorder %v1161, 838
      %vm1230 = vcmp.lt.s32.totalorder %v1162, 838
      %vm1231 = vcmp.lt.s32.totalorder %v1163, 838
      %vm1232 = vcmp.lt.s32.totalorder %v1164, 838
      %vm1233 = vcmp.lt.s32.totalorder %v1165, 838
      %vm1234 = vcmp.lt.s32.totalorder %v1166, 838
      %vm1235 = vcmp.lt.s32.totalorder %v1167, 838
      %vm1236 = vcmp.lt.s32.totalorder %v1168, 838
      %vm1237 = vcmp.lt.s32.totalorder %v1169, 838
      %vm1238 = vcmp.lt.s32.totalorder %v1170, 838
      %vm1239 = vcmp.lt.s32.totalorder %v1171, 838
      %vm1240 = vcmp.lt.s32.totalorder %v1172, 838
      %vm1241 = vcmp.lt.s32.totalorder %v1173, 838
      %vm1242 = vcmp.lt.s32.totalorder %v1174, 838
      %vm1243 = vcmp.lt.s32.totalorder %v1175, 838
      %vm1244 = vcmp.lt.s32.totalorder %v1176, 838
      %vm1245 = vcmp.lt.s32.totalorder %v1177, 838
      %vm1246 = vcmp.lt.s32.totalorder %v1178, 838
      %vm1247 = vmand %vm1179, %vm1213
      %vm1248 = vmand %vm1180, %vm1214
      %vm1249 = vmand %vm1181, %vm1215
      %vm1250 = vmand %vm1182, %vm1216
      %vm1251 = vmand %vm1183, %vm1217
      %vm1252 = vmand %vm1184, %vm1218
      %vm1253 = vmand %vm1185, %vm1219
      %vm1254 = vmand %vm1186, %vm1220
      %vm1255 = vmand %vm1187, %vm1221
      %vm1256 = vmand %vm1188, %vm1222
      %vm1257 = vmand %vm1189, %vm1223
      %vm1258 = vmand %vm1190, %vm1224
      %vm1259 = vmand %vm1191, %vm1225
      %vm1260 = vmand %vm1192, %vm1226
      %vm1261 = vmand %vm1193, %vm1227
      %vm1262 = vmand %vm1194, %vm1228
      %vm1263 = vmand %vm1195, %vm1229
      %vm1264 = vmand %vm1196, %vm1230
      %vm1265 = vmand %vm1197, %vm1231
      %vm1266 = vmand %vm1198, %vm1232
      %vm1267 = vmand %vm1199, %vm1233
      %vm1268 = vmand %vm1200, %vm1234
      %vm1269 = vmand %vm1201, %vm1235
      %vm1270 = vmand %vm1202, %vm1236
      %vm1271 = vmand %vm1203, %vm1237
      %vm1272 = vmand %vm1204, %vm1238
      %vm1273 = vmand %vm1205, %vm1239
      %vm1274 = vmand %vm1206, %vm1240
      %vm1275 = vmand %vm1207, %vm1241
      %vm1276 = vmand %vm1208, %vm1242
      %vm1277 = vmand %vm1209, %vm1243
      %vm1278 = vmand %vm1210, %vm1244
      %vm1279 = vmand %vm1211, %vm1245
      %vm1280 = vmand %vm1212, %vm1246
      %vm1281 = vcmp.ge.f32.partialorder %v1074, 0.0
      %vm1282 = vcmp.ge.f32.partialorder %v1075, 0.0
      %vm1283 = vcmp.ge.f32.partialorder %v1076, 0.0
      %vm1284 = vcmp.ge.f32.partialorder %v1077, 0.0
      %vm1285 = vcmp.ge.f32.partialorder %v1078, 0.0
      %vm1286 = vcmp.ge.f32.partialorder %v1079, 0.0
      %vm1287 = vcmp.ge.f32.partialorder %v1080, 0.0
      %vm1288 = vcmp.ge.f32.partialorder %v1081, 0.0
      %vm1289 = vcmp.ge.f32.partialorder %v1082, 0.0
      %vm1290 = vcmp.ge.f32.partialorder %v1083, 0.0
      %vm1291 = vcmp.ge.f32.partialorder %v1084, 0.0
      %vm1292 = vcmp.ge.f32.partialorder %v1085, 0.0
      %vm1293 = vcmp.ge.f32.partialorder %v1086, 0.0
      %vm1294 = vcmp.ge.f32.partialorder %v1087, 0.0
      %vm1295 = vcmp.ge.f32.partialorder %v1088, 0.0
      %vm1296 = vcmp.ge.f32.partialorder %v1089, 0.0
      %vm1297 = vcmp.ge.f32.partialorder %v1090, 0.0
      %vm1298 = vcmp.ge.f32.partialorder %v1091, 0.0
      %vm1299 = vcmp.ge.f32.partialorder %v1092, 0.0
      %vm1300 = vcmp.ge.f32.partialorder %v1093, 0.0
      %vm1301 = vcmp.ge.f32.partialorder %v1094, 0.0
      %vm1302 = vcmp.ge.f32.partialorder %v1095, 0.0
      %vm1303 = vcmp.ge.f32.partialorder %v1096, 0.0
      %vm1304 = vcmp.ge.f32.partialorder %v1097, 0.0
      %vm1305 = vcmp.ge.f32.partialorder %v1098, 0.0
      %vm1306 = vcmp.ge.f32.partialorder %v1099, 0.0
      %vm1307 = vcmp.ge.f32.partialorder %v1100, 0.0
      %vm1308 = vcmp.ge.f32.partialorder %v1101, 0.0
      %vm1309 = vcmp.ge.f32.partialorder %v1102, 0.0
      %vm1310 = vcmp.ge.f32.partialorder %v1103, 0.0
      %vm1311 = vcmp.ge.f32.partialorder %v1104, 0.0
      %vm1312 = vcmp.ge.f32.partialorder %v1105, 0.0
      %vm1313 = vcmp.ge.f32.partialorder %v1106, 0.0
      %vm1314 = vcmp.ge.f32.partialorder %v1107, 0.0
      %v1315 = vmul.f32 %v1074, 0.01
      %v1316 = vmul.f32 %v1075, 0.01
      %v1317 = vmul.f32 %v1076, 0.01
      %v1318 = vmul.f32 %v1077, 0.01
      %v1319 = vmul.f32 %v1078, 0.01
      %v1320 = vmul.f32 %v1079, 0.01
      %v1321 = vmul.f32 %v1080, 0.01
      %v1322 = vmul.f32 %v1081, 0.01
      %v1323 = vmul.f32 %v1082, 0.01
      %v1324 = vmul.f32 %v1083, 0.01
      %v1325 = vmul.f32 %v1084, 0.01
      %v1326 = vmul.f32 %v1085, 0.01
      %v1327 = vmul.f32 %v1086, 0.01
      %v1328 = vmul.f32 %v1087, 0.01
      %v1329 = vmul.f32 %v1088, 0.01
      %v1330 = vmul.f32 %v1089, 0.01
      %v1331 = vmul.f32 %v1090, 0.01
      %v1332 = vmul.f32 %v1091, 0.01
      %v1333 = vmul.f32 %v1092, 0.01
      %v1334 = vmul.f32 %v1093, 0.01
      %v1335 = vmul.f32 %v1094, 0.01
      %v1336 = vmul.f32 %v1095, 0.01
      %v1337 = vmul.f32 %v1096, 0.01
      %v1338 = vmul.f32 %v1097, 0.01
      %v1339 = vmul.f32 %v1098, 0.01
      %v1340 = vmul.f32 %v1099, 0.01
      %v1341 = vmul.f32 %v1100, 0.01
      %v1342 = vmul.f32 %v1101, 0.01
      %v1343 = vmul.f32 %v1102, 0.01
      %v1344 = vmul.f32 %v1103, 0.01
      %v1345 = vmul.f32 %v1104, 0.01
      %v1346 = vmul.f32 %v1105, 0.01
      %v1347 = vmul.f32 %v1106, 0.01
      %v1348 = vmul.f32 %v1107, 0.01
      %v1349 = vsel %vm1281, %v1074, %v1315
      %v1350 = vsel %vm1282, %v1075, %v1316
      %v1351 = vsel %vm1283, %v1076, %v1317
      %v1352 = vsel %vm1284, %v1077, %v1318
      %v1353 = vsel %vm1285, %v1078, %v1319
      %v1354 = vsel %vm1286, %v1079, %v1320
      %v1355 = vsel %vm1287, %v1080, %v1321
      %v1356 = vsel %vm1288, %v1081, %v1322
      %v1357 = vsel %vm1289, %v1082, %v1323
      %v1358 = vsel %vm1290, %v1083, %v1324
      %v1359 = vsel %vm1291, %v1084, %v1325
      %v1360 = vsel %vm1292, %v1085, %v1326
      %v1361 = vsel %vm1293, %v1086, %v1327
      %v1362 = vsel %vm1294, %v1087, %v1328
      %v1363 = vsel %vm1295, %v1088, %v1329
      %v1364 = vsel %vm1296, %v1089, %v1330
      %v1365 = vsel %vm1297, %v1090, %v1331
      %v1366 = vsel %vm1298, %v1091, %v1332
      %v1367 = vsel %vm1299, %v1092, %v1333
      %v1368 = vsel %vm1300, %v1093, %v1334
      %v1369 = vsel %vm1301, %v1094, %v1335
      %v1370 = vsel %vm1302, %v1095, %v1336
      %v1371 = vsel %vm1303, %v1096, %v1337
      %v1372 = vsel %vm1304, %v1097, %v1338
      %v1373 = vsel %vm1305, %v1098, %v1339
      %v1374 = vsel %vm1306, %v1099, %v1340
      %v1375 = vsel %vm1307, %v1100, %v1341
      %v1376 = vsel %vm1308, %v1101, %v1342
      %v1377 = vsel %vm1309, %v1102, %v1343
      %v1378 = vsel %vm1310, %v1103, %v1344
      %v1379 = vsel %vm1311, %v1104, %v1345
      %v1380 = vsel %vm1312, %v1105, %v1346
      %v1381 = vsel %vm1313, %v1106, %v1347
      %v1382 = vsel %vm1314, %v1107, %v1348
      %v1383 = vsel %vm1247, 1, 0
      %v1384 = vsel %vm1248, 1, 0
      %v1385 = vsel %vm1249, 1, 0
      %v1386 = vsel %vm1250, 1, 0
      %v1387 = vsel %vm1251, 1, 0
      %v1388 = vsel %vm1252, 1, 0
      %v1389 = vsel %vm1253, 1, 0
      %v1390 = vsel %vm1254, 1, 0
      %v1391 = vsel %vm1255, 1, 0
      %v1392 = vsel %vm1256, 1, 0
      %v1393 = vsel %vm1257, 1, 0
      %v1394 = vsel %vm1258, 1, 0
      %v1395 = vsel %vm1259, 1, 0
      %v1396 = vsel %vm1260, 1, 0
      %v1397 = vsel %vm1261, 1, 0
      %v1398 = vsel %vm1262, 1, 0
      %v1399 = vsel %vm1263, 1, 0
      %v1400 = vsel %vm1264, 1, 0
      %v1401 = vsel %vm1265, 1, 0
      %v1402 = vsel %vm1266, 1, 0
      %v1403 = vsel %vm1267, 1, 0
      %v1404 = vsel %vm1268, 1, 0
      %v1405 = vsel %vm1269, 1, 0
      %v1406 = vsel %vm1270, 1, 0
      %v1407 = vsel %vm1271, 1, 0
      %v1408 = vsel %vm1272, 1, 0
      %v1409 = vsel %vm1273, 1, 0
      %v1410 = vsel %vm1274, 1, 0
      %v1411 = vsel %vm1275, 1, 0
      %v1412 = vsel %vm1276, 1, 0
      %v1413 = vsel %vm1277, 1, 0
      %v1414 = vsel %vm1278, 1, 0
      %v1415 = vsel %vm1279, 1, 0
      %v1416 = vsel %vm1280, 1, 0
      %vm1417 = vcmp.eq.s32.totalorder %v1383, 1
      %vm1418 = vcmp.eq.s32.totalorder %v1384, 1
      %vm1419 = vcmp.eq.s32.totalorder %v1385, 1
      %vm1420 = vcmp.eq.s32.totalorder %v1386, 1
      %vm1421 = vcmp.eq.s32.totalorder %v1387, 1
      %vm1422 = vcmp.eq.s32.totalorder %v1388, 1
      %vm1423 = vcmp.eq.s32.totalorder %v1389, 1
      %vm1424 = vcmp.eq.s32.totalorder %v1390, 1
      %vm1425 = vcmp.eq.s32.totalorder %v1391, 1
      %vm1426 = vcmp.eq.s32.totalorder %v1392, 1
      %vm1427 = vcmp.eq.s32.totalorder %v1393, 1
      %vm1428 = vcmp.eq.s32.totalorder %v1394, 1
      %vm1429 = vcmp.eq.s32.totalorder %v1395, 1
      %vm1430 = vcmp.eq.s32.totalorder %v1396, 1
      %vm1431 = vcmp.eq.s32.totalorder %v1397, 1
      %vm1432 = vcmp.eq.s32.totalorder %v1398, 1
      %vm1433 = vcmp.eq.s32.totalorder %v1399, 1
      %vm1434 = vcmp.eq.s32.totalorder %v1400, 1
      %vm1435 = vcmp.eq.s32.totalorder %v1401, 1
      %vm1436 = vcmp.eq.s32.totalorder %v1402, 1
      %vm1437 = vcmp.eq.s32.totalorder %v1403, 1
      %vm1438 = vcmp.eq.s32.totalorder %v1404, 1
      %vm1439 = vcmp.eq.s32.totalorder %v1405, 1
      %vm1440 = vcmp.eq.s32.totalorder %v1406, 1
      %vm1441 = vcmp.eq.s32.totalorder %v1407, 1
      %vm1442 = vcmp.eq.s32.totalorder %v1408, 1
      %vm1443 = vcmp.eq.s32.totalorder %v1409, 1
      %vm1444 = vcmp.eq.s32.totalorder %v1410, 1
      %vm1445 = vcmp.eq.s32.totalorder %v1411, 1
      %vm1446 = vcmp.eq.s32.totalorder %v1412, 1
      %vm1447 = vcmp.eq.s32.totalorder %v1413, 1
      %vm1448 = vcmp.eq.s32.totalorder %v1414, 1
      %vm1449 = vcmp.eq.s32.totalorder %v1415, 1
      %vm1450 = vcmp.eq.s32.totalorder %v1416, 1
      %v1451 = vsel %vm1417, %v1349, 0.0
      %v1452 = vsel %vm1418, %v1350, 0.0
      %v1453 = vsel %vm1419, %v1351, 0.0
      %v1454 = vsel %vm1420, %v1352, 0.0
      %v1455 = vsel %vm1421, %v1353, 0.0
      %v1456 = vsel %vm1422, %v1354, 0.0
      %v1457 = vsel %vm1423, %v1355, 0.0
      %v1458 = vsel %vm1424, %v1356, 0.0
      %v1459 = vsel %vm1425, %v1357, 0.0
      %v1460 = vsel %vm1426, %v1358, 0.0
      %v1461 = vsel %vm1427, %v1359, 0.0
      %v1462 = vsel %vm1428, %v1360, 0.0
      %v1463 = vsel %vm1429, %v1361, 0.0
      %v1464 = vsel %vm1430, %v1362, 0.0
      %v1465 = vsel %vm1431, %v1363, 0.0
      %v1466 = vsel %vm1432, %v1364, 0.0
      %v1467 = vsel %vm1433, %v1365, 0.0
      %v1468 = vsel %vm1434, %v1366, 0.0
      %v1469 = vsel %vm1435, %v1367, 0.0
      %v1470 = vsel %vm1436, %v1368, 0.0
      %v1471 = vsel %vm1437, %v1369, 0.0
      %v1472 = vsel %vm1438, %v1370, 0.0
      %v1473 = vsel %vm1439, %v1371, 0.0
      %v1474 = vsel %vm1440, %v1372, 0.0
      %v1475 = vsel %vm1441, %v1373, 0.0
      %v1476 = vsel %vm1442, %v1374, 0.0
      %v1477 = vsel %vm1443, %v1375, 0.0
      %v1478 = vsel %vm1444, %v1376, 0.0
      %v1479 = vsel %vm1445, %v1377, 0.0
      %v1480 = vsel %vm1446, %v1378, 0.0
      %v1481 = vsel %vm1447, %v1379, 0.0
      %v1482 = vsel %vm1448, %v1380, 0.0
      %v1483 = vsel %vm1449, %v1381, 0.0
      %v1484 = vsel %vm1450, %v1382, 0.0
      %v1485 = vpack.c.bf16 %v1451, %v1451
      %v1486 = vpack.c.bf16 %v1452, %v1452
      %v1487 = vpack.c.bf16 %v1453, %v1453
      %v1488 = vpack.c.bf16 %v1454, %v1454
      %v1489 = vpack.c.bf16 %v1455, %v1455
      %v1490 = vpack.c.bf16 %v1456, %v1456
      %v1491 = vpack.c.bf16 %v1457, %v1457
      %v1492 = vpack.c.bf16 %v1458, %v1458
      %v1493 = vpack.c.bf16 %v1459, %v1459
      %v1494 = vpack.c.bf16 %v1460, %v1460
      %v1495 = vpack.c.bf16 %v1461, %v1461
      %v1496 = vpack.c.bf16 %v1462, %v1462
      %v1497 = vpack.c.bf16 %v1463, %v1463
      %v1498 = vpack.c.bf16 %v1464, %v1464
      %v1499 = vpack.c.bf16 %v1465, %v1465
      %v1500 = vpack.c.bf16 %v1466, %v1466
      %v1501 = vpack.c.bf16 %v1467, %v1467
      %v1502 = vpack.c.bf16 %v1468, %v1468
      %v1503 = vpack.c.bf16 %v1469, %v1469
      %v1504 = vpack.c.bf16 %v1470, %v1470
      %v1505 = vpack.c.bf16 %v1471, %v1471
      %v1506 = vpack.c.bf16 %v1472, %v1472
      %v1507 = vpack.c.bf16 %v1473, %v1473
      %v1508 = vpack.c.bf16 %v1474, %v1474
      %v1509 = vpack.c.bf16 %v1475, %v1475
      %v1510 = vpack.c.bf16 %v1476, %v1476
      %v1511 = vpack.c.bf16 %v1477, %v1477
      %v1512 = vpack.c.bf16 %v1478, %v1478
      %v1513 = vpack.c.bf16 %v1479, %v1479
      %v1514 = vpack.c.bf16 %v1480, %v1480
      %v1515 = vpack.c.bf16 %v1481, %v1481
      %v1516 = vpack.c.bf16 %v1482, %v1482
      %v1517 = vpack.c.bf16 %v1483, %v1483
      %v1518 = vpack.c.bf16 %v1484, %v1484
      %vm1519 = vcmask 257024
      %1520 = vst.msk [vmem:[#allocation2] sm:$0xf] %vm1519, %v1485
      %1521 = vst.msk [vmem:[#allocation2 + $0x4] sm:$0xf] %vm1519, %v1486
      %1522 = vst.msk [vmem:[#allocation2 + $0x8] sm:$0xf] %vm1519, %v1487
      %1523 = vst.msk [vmem:[#allocation2 + $0xc] sm:$0xf] %vm1519, %v1488
      %1524 = vst.msk [vmem:[#allocation2 + $0x10] sm:$0xf] %vm1519, %v1489
      %1525 = vst.msk [vmem:[#allocation2 + $0x14] sm:$0xf] %vm1519, %v1490
      %1526 = vst.msk [vmem:[#allocation2 + $0x18] sm:$0xf] %vm1519, %v1491
      %1527 = vst.msk [vmem:[#allocation2 + $0x1c] sm:$0xf] %vm1519, %v1492
      %1528 = vst.msk [vmem:[#allocation2 + $0x20] sm:$0xf] %vm1519, %v1493
      %1529 = vst.msk [vmem:[#allocation2 + $0x24] sm:$0xf] %vm1519, %v1494
      %1530 = vst.msk [vmem:[#allocation2 + $0x28] sm:$0xf] %vm1519, %v1495
      %1531 = vst.msk [vmem:[#allocation2 + $0x2c] sm:$0xf] %vm1519, %v1496
      %1532 = vst.msk [vmem:[#allocation2 + $0x30] sm:$0xf] %vm1519, %v1497
      %1533 = vst.msk [vmem:[#allocation2 + $0x34] sm:$0xf] %vm1519, %v1498
      %1534 = vst.msk [vmem:[#allocation2 + $0x38] sm:$0xf] %vm1519, %v1499
      %1535 = vst.msk [vmem:[#allocation2 + $0x3c] sm:$0xf] %vm1519, %v1500
      %1536 = vst.msk [vmem:[#allocation2 + $0x40] sm:$0xf] %vm1519, %v1501
      %1537 = vst.msk [vmem:[#allocation2 + $0x44] sm:$0xf] %vm1519, %v1502
      %1538 = vst.msk [vmem:[#allocation2 + $0x48] sm:$0xf] %vm1519, %v1503
      %1539 = vst.msk [vmem:[#allocation2 + $0x4c] sm:$0xf] %vm1519, %v1504
      %1540 = vst.msk [vmem:[#allocation2 + $0x50] sm:$0xf] %vm1519, %v1505
      %1541 = vst.msk [vmem:[#allocation2 + $0x54] sm:$0xf] %vm1519, %v1506
      %1542 = vst.msk [vmem:[#allocation2 + $0x58] sm:$0xf] %vm1519, %v1507
      %1543 = vst.msk [vmem:[#allocation2 + $0x5c] sm:$0xf] %vm1519, %v1508
      %1544 = vst.msk [vmem:[#allocation2 + $0x60] sm:$0xf] %vm1519, %v1509
      %1545 = vst.msk [vmem:[#allocation2 + $0x64] sm:$0xf] %vm1519, %v1510
      %1546 = vst.msk [vmem:[#allocation2 + $0x68] sm:$0xf] %vm1519, %v1511
      %1547 = vst.msk [vmem:[#allocation2 + $0x6c] sm:$0xf] %vm1519, %v1512
      %1548 = vst.msk [vmem:[#allocation2 + $0x70] sm:$0xf] %vm1519, %v1513
      %1549 = vst.msk [vmem:[#allocation2 + $0x74] sm:$0xf] %vm1519, %v1514
      %1550 = vst.msk [vmem:[#allocation2 + $0x78] sm:$0xf] %vm1519, %v1515
      %1551 = vst.msk [vmem:[#allocation2 + $0x7c] sm:$0xf] %vm1519, %v1516
      %1552 = vst.msk [vmem:[#allocation2 + $0x80] sm:$0xf] %vm1519, %v1517
      %1553 = vst.msk [vmem:[#allocation2 + $0x84] sm:$0xf] %vm1519, %v1518
      %v1554 = vld [vmem:[#allocation2] sm:$0xf]
      %v1555 = vld [vmem:[#allocation2 + $0x4] sm:$0xf]
      %v1556 = vld [vmem:[#allocation2 + $0x8] sm:$0xf]
      %v1557 = vld [vmem:[#allocation2 + $0xc] sm:$0xf]
      %v1558 = vld [vmem:[#allocation2 + $0x10] sm:$0xf]
      %v1559 = vld [vmem:[#allocation2 + $0x14] sm:$0xf]
      %v1560 = vld [vmem:[#allocation2 + $0x18] sm:$0xf]
      %v1561 = vld [vmem:[#allocation2 + $0x1c] sm:$0xf]
      %v1562 = vld [vmem:[#allocation2 + $0x20] sm:$0xf]
      %v1563 = vld [vmem:[#allocation2 + $0x24] sm:$0xf]
      %v1564 = vld [vmem:[#allocation2 + $0x28] sm:$0xf]
      %v1565 = vld [vmem:[#allocation2 + $0x2c] sm:$0xf]
      %v1566 = vld [vmem:[#allocation2 + $0x30] sm:$0xf]
      %v1567 = vld [vmem:[#allocation2 + $0x34] sm:$0xf]
      %v1568 = vld [vmem:[#allocation2 + $0x38] sm:$0xf]
      %v1569 = vld [vmem:[#allocation2 + $0x3c] sm:$0xf]
      %v1570 = vld [vmem:[#allocation2 + $0x40] sm:$0xf]
      %v1571 = vld [vmem:[#allocation2 + $0x44] sm:$0xf]
      %v1572 = vld [vmem:[#allocation2 + $0x48] sm:$0xf]
      %v1573 = vld [vmem:[#allocation2 + $0x4c] sm:$0xf]
      %v1574 = vld [vmem:[#allocation2 + $0x50] sm:$0xf]
      %v1575 = vld [vmem:[#allocation2 + $0x54] sm:$0xf]
      %v1576 = vld [vmem:[#allocation2 + $0x58] sm:$0xf]
      %v1577 = vld [vmem:[#allocation2 + $0x5c] sm:$0xf]
      %v1578 = vld [vmem:[#allocation2 + $0x60] sm:$0xf]
      %v1579 = vld [vmem:[#allocation2 + $0x64] sm:$0xf]
      %v1580 = vld [vmem:[#allocation2 + $0x68] sm:$0xf]
      %v1581 = vld [vmem:[#allocation2 + $0x6c] sm:$0xf]
      %v1582 = vld [vmem:[#allocation2 + $0x70] sm:$0xf]
      %v1583 = vld [vmem:[#allocation2 + $0x74] sm:$0xf]
      %v1584 = vld [vmem:[#allocation2 + $0x78] sm:$0xf]
      %v1585 = vld [vmem:[#allocation2 + $0x7c] sm:$0xf]
      %v1586 = vld [vmem:[#allocation2 + $0x80] sm:$0x1]
      %v1587 = vld [vmem:[%s3] sm:$0xf]
      %v1588 = vld [vmem:[%s3 + $0x4] sm:$0xf]
      %v1589 = vld [vmem:[%s3 + $0x8] sm:$0xf]
      %v1590 = vld [vmem:[%s3 + $0xc] sm:$0xf]
      %v1591 = vld [vmem:[#allocation2] sm:$0xe]
      %s1592 = scalar_lea.vmem %s3, 16
      %v1593 = vld [vmem:[%s1592] sm:$0xf]
      %v1594 = vld [vmem:[%s1592 + $0x4] sm:$0xf]
      %v1595 = vld [vmem:[%s1592 + $0x8] sm:$0xf]
      %v1596 = vld [vmem:[%s1592 + $0xc] sm:$0xf]
      %v1630 = vunpack.c.l.b16 %v1591
      %v1631 = vunpack.c.l.b16 %v1555
      %v1632 = vunpack.c.l.b16 %v1556
      %v1633 = vunpack.c.l.b16 %v1557
      %v1634 = vunpack.c.l.b16 %v1558
      %v1635 = vunpack.c.l.b16 %v1559
      %v1636 = vunpack.c.l.b16 %v1560
      %v1637 = vunpack.c.l.b16 %v1561
      %v1638 = vunpack.c.l.b16 %v1562
      %v1639 = vunpack.c.l.b16 %v1563
      %v1640 = vunpack.c.l.b16 %v1564
      %v1641 = vunpack.c.l.b16 %v1565
      %v1642 = vunpack.c.l.b16 %v1566
      %v1643 = vunpack.c.l.b16 %v1567
      %v1644 = vunpack.c.l.b16 %v1568
      %v1645 = vunpack.c.l.b16 %v1569
      %v1646 = vunpack.c.l.b16 %v1570
      %v1647 = vunpack.c.l.b16 %v1571
      %v1648 = vunpack.c.l.b16 %v1572
      %v1649 = vunpack.c.l.b16 %v1573
      %v1650 = vunpack.c.l.b16 %v1574
      %v1651 = vunpack.c.l.b16 %v1575
      %v1652 = vunpack.c.l.b16 %v1576
      %v1653 = vunpack.c.l.b16 %v1577
      %v1654 = vunpack.c.l.b16 %v1578
      %v1655 = vunpack.c.l.b16 %v1579
      %v1656 = vunpack.c.l.b16 %v1580
      %v1657 = vunpack.c.l.b16 %v1581
      %v1658 = vunpack.c.l.b16 %v1582
      %v1659 = vunpack.c.l.b16 %v1583
      %v1660 = vunpack.c.l.b16 %v1584
      %v1661 = vunpack.c.l.b16 %v1585
      %v1662 = vunpack.c.l.b16 %v1586
      %v1663 = vpack.c.b16 %v1631, %v1630
      %v1664 = vpack.c.b16 %v1633, %v1632
      %v1665 = vpack.c.b16 %v1635, %v1634
      %v1666 = vpack.c.b16 %v1637, %v1636
      %v1667 = vpack.c.b16 %v1639, %v1638
      %v1668 = vpack.c.b16 %v1641, %v1640
      %v1669 = vpack.c.b16 %v1643, %v1642
      %v1670 = vpack.c.b16 %v1645, %v1644
      %v1671 = vpack.c.b16 %v1647, %v1646
      %v1672 = vpack.c.b16 %v1649, %v1648
      %v1673 = vpack.c.b16 %v1651, %v1650
      %v1674 = vpack.c.b16 %v1653, %v1652
      %v1675 = vpack.c.b16 %v1655, %v1654
      %v1676 = vpack.c.b16 %v1657, %v1656
      %v1677 = vpack.c.b16 %v1659, %v1658
      %v1678 = vpack.c.b16 %v1661, %v1660
      %v1679 = vpack.c.b16 %v1662, %v1662
      %vm1680 = vcmask 1046528
      %v1681 = vrot.slane %v1663, 1
      %v1682 = vrot.slane %v1664, 1
      %v1683 = vsel %vm1680, %v1681, %v1682
      %v1684 = vrot.slane %v1665, 1
      %v1685 = vsel %vm1680, %v1682, %v1684
      %v1686 = vrot.slane %v1666, 1
      %v1687 = vsel %vm1680, %v1684, %v1686
      %v1688 = vrot.slane %v1667, 1
      %v1689 = vsel %vm1680, %v1686, %v1688
      %v1690 = vrot.slane %v1668, 1
      %v1691 = vsel %vm1680, %v1688, %v1690
      %v1692 = vrot.slane %v1669, 1
      %v1693 = vsel %vm1680, %v1690, %v1692
      %v1694 = vrot.slane %v1670, 1
      %v1695 = vsel %vm1680, %v1692, %v1694
      %v1696 = vrot.slane %v1671, 1
      %v1697 = vsel %vm1680, %v1694, %v1696
      %v1698 = vrot.slane %v1672, 1
      %v1699 = vsel %vm1680, %v1696, %v1698
      %v1700 = vrot.slane %v1673, 1
      %v1701 = vsel %vm1680, %v1698, %v1700
      %v1702 = vrot.slane %v1674, 1
      %v1703 = vsel %vm1680, %v1700, %v1702
      %v1704 = vrot.slane %v1675, 1
      %v1705 = vsel %vm1680, %v1702, %v1704
      %v1706 = vrot.slane %v1676, 1
      %v1707 = vsel %vm1680, %v1704, %v1706
      %v1708 = vrot.slane %v1677, 1
      %v1709 = vsel %vm1680, %v1706, %v1708
      %v1710 = vrot.slane %v1678, 1
      %v1711 = vsel %vm1680, %v1708, %v1710
      %v1712 = vrot.slane %v1679, 1
      %v1713 = vsel %vm1680, %v1710, %v1712
      %v1718 = vunpack.c.l.b16 %v1593
      %v1719 = vunpack.c.l.b16 %v1594
      %v1720 = vunpack.c.l.b16 %v1595
      %v1721 = vunpack.c.l.b16 %v1596
      %v1722 = vpack.c.b16 %v1719, %v1718
      %v1723 = vpack.c.b16 %v1721, %v1720
      %vm1726 = vcmask 261120
      %v1728 = vsel %vm1726, %v1683, 0
      %v1731 = vsel %vm1726, %v1685, 0
      %v1734 = vsel %vm1726, %v1687, 0
      %v1737 = vsel %vm1726, %v1689, 0
      %v1740 = vsel %vm1726, %v1691, 0
      %v1743 = vsel %vm1726, %v1693, 0
      %v1746 = vsel %vm1726, %v1695, 0
      %v1749 = vsel %vm1726, %v1697, 0
      %v1752 = vsel %vm1726, %v1699, 0
      %v1755 = vsel %vm1726, %v1701, 0
      %v1758 = vsel %vm1726, %v1703, 0
      %v1761 = vsel %vm1726, %v1705, 0
      %v1764 = vsel %vm1726, %v1707, 0
      %v1767 = vsel %vm1726, %v1709, 0
      %v1770 = vsel %vm1726, %v1711, 0
      %v1773 = vsel %vm1726, %v1713, 0
      %1775 = vmatpush.bf16.msra.mxu0 0
      %1776 = vmatpush.bf16.msra.mxu0 0
      %1777 = vmatpush.bf16.msra.mxu0 0
      %1778 = vmatpush.bf16.msra.mxu0 0
      %1779 = vmatpush.bf16.msra.mxu0 0
      %1780 = vmatpush.bf16.msra.mxu0 0
      %1781 = vmatpush.bf16.msra.mxu0 %v1723
      %1782 = vmatpush.bf16.msra.mxu0 %v1722
      %1783 = vmatmul.bf16.gmra.mxu0 %v1728
      %v1784 = vpop.f32.mrf.mxu0
      %v1785 = vadd.f32 0.0, %v1784
      %v1786 = vpop.f32.mrf.mxu0
      %v1787 = vadd.f32 0.0, %v1786
      %1788 = vmatmul.bf16.gmra.mxu0 %v1731
      %v1789 = vpop.f32.mrf.mxu0
      %v1790 = vadd.f32 0.0, %v1789
      %v1791 = vpop.f32.mrf.mxu0
      %v1792 = vadd.f32 0.0, %v1791
      %1793 = vmatmul.bf16.gmra.mxu0 %v1734
      %v1794 = vpop.f32.mrf.mxu0
      %v1795 = vadd.f32 0.0, %v1794
      %v1796 = vpop.f32.mrf.mxu0
      %v1797 = vadd.f32 0.0, %v1796
      %1798 = vmatmul.bf16.gmra.mxu0 %v1737
      %v1799 = vpop.f32.mrf.mxu0
      %v1800 = vadd.f32 0.0, %v1799
      %v1801 = vpop.f32.mrf.mxu0
      %v1802 = vadd.f32 0.0, %v1801
      %1803 = vmatmul.bf16.gmra.mxu0 %v1740
      %v1804 = vpop.f32.mrf.mxu0
      %v1805 = vadd.f32 0.0, %v1804
      %v1806 = vpop.f32.mrf.mxu0
      %v1807 = vadd.f32 0.0, %v1806
      %1808 = vmatmul.bf16.gmra.mxu0 %v1743
      %v1809 = vpop.f32.mrf.mxu0
      %v1810 = vadd.f32 0.0, %v1809
      %v1811 = vpop.f32.mrf.mxu0
      %v1812 = vadd.f32 0.0, %v1811
      %1813 = vmatmul.bf16.gmra.mxu0 %v1746
      %v1814 = vpop.f32.mrf.mxu0
      %v1815 = vadd.f32 0.0, %v1814
      %v1816 = vpop.f32.mrf.mxu0
      %v1817 = vadd.f32 0.0, %v1816
      %1818 = vmatmul.bf16.gmra.mxu0 %v1749
      %v1819 = vpop.f32.mrf.mxu0
      %v1820 = vadd.f32 0.0, %v1819
      %v1821 = vpop.f32.mrf.mxu0
      %v1822 = vadd.f32 0.0, %v1821
      %1823 = vmatmul.bf16.gmra.mxu0 %v1752
      %v1824 = vpop.f32.mrf.mxu0
      %v1825 = vadd.f32 0.0, %v1824
      %v1826 = vpop.f32.mrf.mxu0
      %v1827 = vadd.f32 0.0, %v1826
      %1828 = vmatmul.bf16.gmra.mxu0 %v1755
      %v1829 = vpop.f32.mrf.mxu0
      %v1830 = vadd.f32 0.0, %v1829
      %v1831 = vpop.f32.mrf.mxu0
      %v1832 = vadd.f32 0.0, %v1831
      %1833 = vmatmul.bf16.gmra.mxu0 %v1758
      %v1834 = vpop.f32.mrf.mxu0
      %v1835 = vadd.f32 0.0, %v1834
      %v1836 = vpop.f32.mrf.mxu0
      %v1837 = vadd.f32 0.0, %v1836
      %1838 = vmatmul.bf16.gmra.mxu0 %v1761
      %v1839 = vpop.f32.mrf.mxu0
      %v1840 = vadd.f32 0.0, %v1839
      %v1841 = vpop.f32.mrf.mxu0
      %v1842 = vadd.f32 0.0, %v1841
      %1843 = vmatmul.bf16.gmra.mxu0 %v1764
      %v1844 = vpop.f32.mrf.mxu0
      %v1845 = vadd.f32 0.0, %v1844
      %v1846 = vpop.f32.mrf.mxu0
      %v1847 = vadd.f32 0.0, %v1846
      %1848 = vmatmul.bf16.gmra.mxu0 %v1767
      %v1849 = vpop.f32.mrf.mxu0
      %v1850 = vadd.f32 0.0, %v1849
      %v1851 = vpop.f32.mrf.mxu0
      %v1852 = vadd.f32 0.0, %v1851
      %1853 = vmatmul.bf16.gmra.mxu0 %v1770
      %v1854 = vpop.f32.mrf.mxu0
      %v1855 = vadd.f32 0.0, %v1854
      %v1856 = vpop.f32.mrf.mxu0
      %v1857 = vadd.f32 0.0, %v1856
      %1858 = vmatmul.bf16.gmra.mxu0 %v1773
      %v1859 = vpop.f32.mrf.mxu0
      %v1860 = vadd.f32 0.0, %v1859
      %v1861 = vpop.f32.mrf.mxu0
      %v1862 = vadd.f32 0.0, %v1861
      %1863 = vdwg.mxu0
      %v1865 = vunpack.c.l.b16 %v1554
      %v1866 = vpack.c.b16 %v1631, %v1865
      %vm1867 = vsmask.f32 7424
      %v1869 = vshrl.u32 %v1866, 16
      %v1871 = vshll.u32 %v1866, 16
      %v1873 = vrot.slane %v1871, 1
      %v1874 = vor.u32 %v1869, %v1873
      %v1876 = vshll.u32 %v1664, 16
      %v1878 = vrot.slane %v1876, 1
      %v1879 = vsel %vm1867, %v1874, %v1878
      %v1880 = vshrl.u32 %v1664, 16
      %v1882 = vor.u32 %v1880, %v1878
      %v1884 = vshll.u32 %v1665, 16
      %v1886 = vrot.slane %v1884, 1
      %v1887 = vsel %vm1867, %v1882, %v1886
      %v1888 = vshrl.u32 %v1665, 16
      %v1890 = vor.u32 %v1888, %v1886
      %v1892 = vshll.u32 %v1666, 16
      %v1894 = vrot.slane %v1892, 1
      %v1895 = vsel %vm1867, %v1890, %v1894
      %v1896 = vshrl.u32 %v1666, 16
      %v1898 = vor.u32 %v1896, %v1894
      %v1900 = vshll.u32 %v1667, 16
      %v1902 = vrot.slane %v1900, 1
      %v1903 = vsel %vm1867, %v1898, %v1902
      %v1904 = vshrl.u32 %v1667, 16
      %v1906 = vor.u32 %v1904, %v1902
      %v1908 = vshll.u32 %v1668, 16
      %v1910 = vrot.slane %v1908, 1
      %v1911 = vsel %vm1867, %v1906, %v1910
      %v1912 = vshrl.u32 %v1668, 16
      %v1914 = vor.u32 %v1912, %v1910
      %v1916 = vshll.u32 %v1669, 16
      %v1918 = vrot.slane %v1916, 1
      %v1919 = vsel %vm1867, %v1914, %v1918
      %v1920 = vshrl.u32 %v1669, 16
      %v1922 = vor.u32 %v1920, %v1918
      %v1924 = vshll.u32 %v1670, 16
      %v1926 = vrot.slane %v1924, 1
      %v1927 = vsel %vm1867, %v1922, %v1926
      %v1928 = vshrl.u32 %v1670, 16
      %v1930 = vor.u32 %v1928, %v1926
      %v1932 = vshll.u32 %v1671, 16
      %v1934 = vrot.slane %v1932, 1
      %v1935 = vsel %vm1867, %v1930, %v1934
      %v1936 = vshrl.u32 %v1671, 16
      %v1938 = vor.u32 %v1936, %v1934
      %v1940 = vshll.u32 %v1672, 16
      %v1942 = vrot.slane %v1940, 1
      %v1943 = vsel %vm1867, %v1938, %v1942
      %v1944 = vshrl.u32 %v1672, 16
      %v1946 = vor.u32 %v1944, %v1942
      %v1948 = vshll.u32 %v1673, 16
      %v1950 = vrot.slane %v1948, 1
      %v1951 = vsel %vm1867, %v1946, %v1950
      %v1952 = vshrl.u32 %v1673, 16
      %v1954 = vor.u32 %v1952, %v1950
      %v1956 = vshll.u32 %v1674, 16
      %v1958 = vrot.slane %v1956, 1
      %v1959 = vsel %vm1867, %v1954, %v1958
      %v1960 = vshrl.u32 %v1674, 16
      %v1962 = vor.u32 %v1960, %v1958
      %v1964 = vshll.u32 %v1675, 16
      %v1966 = vrot.slane %v1964, 1
      %v1967 = vsel %vm1867, %v1962, %v1966
      %v1968 = vshrl.u32 %v1675, 16
      %v1970 = vor.u32 %v1968, %v1966
      %v1972 = vshll.u32 %v1676, 16
      %v1974 = vrot.slane %v1972, 1
      %v1975 = vsel %vm1867, %v1970, %v1974
      %v1976 = vshrl.u32 %v1676, 16
      %v1978 = vor.u32 %v1976, %v1974
      %v1980 = vshll.u32 %v1677, 16
      %v1982 = vrot.slane %v1980, 1
      %v1983 = vsel %vm1867, %v1978, %v1982
      %v1984 = vshrl.u32 %v1677, 16
      %v1986 = vor.u32 %v1984, %v1982
      %v1988 = vshll.u32 %v1678, 16
      %v1990 = vrot.slane %v1988, 1
      %v1991 = vsel %vm1867, %v1986, %v1990
      %v1992 = vshrl.u32 %v1678, 16
      %v1994 = vor.u32 %v1992, %v1990
      %v1996 = vshll.u32 %v1679, 16
      %v1998 = vrot.slane %v1996, 1
      %v1999 = vsel %vm1867, %v1994, %v1998
      %v2004 = vunpack.c.l.b16 %v1587
      %v2005 = vunpack.c.l.b16 %v1588
      %v2006 = vunpack.c.l.b16 %v1589
      %v2007 = vunpack.c.l.b16 %v1590
      %v2008 = vpack.c.b16 %v2005, %v2004
      %v2009 = vpack.c.b16 %v2007, %v2006
      %v2013 = vsel %vm1726, %v1879, 0
      %v2016 = vsel %vm1726, %v1887, 0
      %v2019 = vsel %vm1726, %v1895, 0
      %v2022 = vsel %vm1726, %v1903, 0
      %v2025 = vsel %vm1726, %v1911, 0
      %v2028 = vsel %vm1726, %v1919, 0
      %v2031 = vsel %vm1726, %v1927, 0
      %v2034 = vsel %vm1726, %v1935, 0
      %v2037 = vsel %vm1726, %v1943, 0
      %v2040 = vsel %vm1726, %v1951, 0
      %v2043 = vsel %vm1726, %v1959, 0
      %v2046 = vsel %vm1726, %v1967, 0
      %v2049 = vsel %vm1726, %v1975, 0
      %v2052 = vsel %vm1726, %v1983, 0
      %v2055 = vsel %vm1726, %v1991, 0
      %v2058 = vsel %vm1726, %v1999, 0
      %2060 = vmatpush.bf16.msra.mxu0 0
      %2061 = vmatpush.bf16.msra.mxu0 0
      %2062 = vmatpush.bf16.msra.mxu0 0
      %2063 = vmatpush.bf16.msra.mxu0 0
      %2064 = vmatpush.bf16.msra.mxu0 0
      %2065 = vmatpush.bf16.msra.mxu0 0
      %2066 = vmatpush.bf16.msra.mxu0 %v2009
      %2067 = vmatpush.bf16.msra.mxu0 %v2008
      %2068 = vmatmul.bf16.gmra.mxu0 %v2013
      %v2069 = vpop.f32.mrf.mxu0
      %v2070 = vadd.f32 %v1785, %v2069
      %v2071 = vpop.f32.mrf.mxu0
      %v2072 = vadd.f32 %v1787, %v2071
      %2073 = vmatmul.bf16.gmra.mxu0 %v2016
      %v2074 = vpop.f32.mrf.mxu0
      %v2075 = vadd.f32 %v1790, %v2074
      %v2076 = vpop.f32.mrf.mxu0
      %v2077 = vadd.f32 %v1792, %v2076
      %2078 = vmatmul.bf16.gmra.mxu0 %v2019
      %v2079 = vpop.f32.mrf.mxu0
      %v2080 = vadd.f32 %v1795, %v2079
      %v2081 = vpop.f32.mrf.mxu0
      %v2082 = vadd.f32 %v1797, %v2081
      %2083 = vmatmul.bf16.gmra.mxu0 %v2022
      %v2084 = vpop.f32.mrf.mxu0
      %v2085 = vadd.f32 %v1800, %v2084
      %v2086 = vpop.f32.mrf.mxu0
      %v2087 = vadd.f32 %v1802, %v2086
      %2088 = vmatmul.bf16.gmra.mxu0 %v2025
      %v2089 = vpop.f32.mrf.mxu0
      %v2090 = vadd.f32 %v1805, %v2089
      %v2091 = vpop.f32.mrf.mxu0
      %v2092 = vadd.f32 %v1807, %v2091
      %2093 = vmatmul.bf16.gmra.mxu0 %v2028
      %v2094 = vpop.f32.mrf.mxu0
      %v2095 = vadd.f32 %v1810, %v2094
      %v2096 = vpop.f32.mrf.mxu0
      %v2097 = vadd.f32 %v1812, %v2096
      %2098 = vmatmul.bf16.gmra.mxu0 %v2031
      %v2099 = vpop.f32.mrf.mxu0
      %v2100 = vadd.f32 %v1815, %v2099
      %v2101 = vpop.f32.mrf.mxu0
      %v2102 = vadd.f32 %v1817, %v2101
      %2103 = vmatmul.bf16.gmra.mxu0 %v2034
      %v2104 = vpop.f32.mrf.mxu0
      %v2105 = vadd.f32 %v1820, %v2104
      %v2106 = vpop.f32.mrf.mxu0
      %v2107 = vadd.f32 %v1822, %v2106
      %2108 = vmatmul.bf16.gmra.mxu0 %v2037
      %v2109 = vpop.f32.mrf.mxu0
      %v2110 = vadd.f32 %v1825, %v2109
      %v2111 = vpop.f32.mrf.mxu0
      %v2112 = vadd.f32 %v1827, %v2111
      %2113 = vmatmul.bf16.gmra.mxu0 %v2040
      %v2114 = vpop.f32.mrf.mxu0
      %v2115 = vadd.f32 %v1830, %v2114
      %v2116 = vpop.f32.mrf.mxu0
      %v2117 = vadd.f32 %v1832, %v2116
      %2118 = vmatmul.bf16.gmra.mxu0 %v2043
      %v2119 = vpop.f32.mrf.mxu0
      %v2120 = vadd.f32 %v1835, %v2119
      %v2121 = vpop.f32.mrf.mxu0
      %v2122 = vadd.f32 %v1837, %v2121
      %2123 = vmatmul.bf16.gmra.mxu0 %v2046
      %v2124 = vpop.f32.mrf.mxu0
      %v2125 = vadd.f32 %v1840, %v2124
      %v2126 = vpop.f32.mrf.mxu0
      %v2127 = vadd.f32 %v1842, %v2126
      %2128 = vmatmul.bf16.gmra.mxu0 %v2049
      %v2129 = vpop.f32.mrf.mxu0
      %v2130 = vadd.f32 %v1845, %v2129
      %v2131 = vpop.f32.mrf.mxu0
      %v2132 = vadd.f32 %v1847, %v2131
      %2133 = vmatmul.bf16.gmra.mxu0 %v2052
      %v2134 = vpop.f32.mrf.mxu0
      %v2135 = vadd.f32 %v1850, %v2134
      %v2136 = vpop.f32.mrf.mxu0
      %v2137 = vadd.f32 %v1852, %v2136
      %2138 = vmatmul.bf16.gmra.mxu0 %v2055
      %v2139 = vpop.f32.mrf.mxu0
      %v2140 = vadd.f32 %v1855, %v2139
      %v2141 = vpop.f32.mrf.mxu0
      %v2142 = vadd.f32 %v1857, %v2141
      %2143 = vmatmul.bf16.gmra.mxu0 %v2058
      %v2144 = vpop.f32.mrf.mxu0
      %v2145 = vadd.f32 %v1860, %v2144
      %v2146 = vpop.f32.mrf.mxu0
      %v2147 = vadd.f32 %v1862, %v2146
      %2148 = vdwg.mxu0
      %v2149 = vld [vmem:[#allocation2 + $0x80] sm:$0x3]
      %s2150 = scalar_lea.vmem %s3, 32
      %v2151 = vld [vmem:[%s2150] sm:$0xf]
      %v2152 = vld [vmem:[%s2150 + $0x4] sm:$0xf]
      %v2153 = vld [vmem:[%s2150 + $0x8] sm:$0xf]
      %v2154 = vld [vmem:[%s2150 + $0xc] sm:$0xf]
      %v2156 = vunpack.c.l.b16 %v2149
      %v2157 = vpack.c.b16 %v2156, %v2156
      %vm2158 = vsmask.f32 6400
      %v2160 = vshrl.u32 %v1663, 16
      %v2162 = vrot.slane %v2160, 1
      %v2163 = vshll.u32 %v1663, 16
      %v2165 = vrot.slane %v2163, 2
      %v2166 = vor.u32 %v2162, %v2165
      %v2167 = vrot.slane %v1880, 1
      %v2168 = vrot.slane %v1876, 2
      %v2169 = vor.u32 %v2167, %v2168
      %v2170 = vsel %vm2158, %v2166, %v2169
      %v2171 = vrot.slane %v1888, 1
      %v2172 = vrot.slane %v1884, 2
      %v2173 = vor.u32 %v2171, %v2172
      %v2174 = vsel %vm2158, %v2169, %v2173
      %v2175 = vrot.slane %v1896, 1
      %v2176 = vrot.slane %v1892, 2
      %v2177 = vor.u32 %v2175, %v2176
      %v2178 = vsel %vm2158, %v2173, %v2177
      %v2179 = vrot.slane %v1904, 1
      %v2180 = vrot.slane %v1900, 2
      %v2181 = vor.u32 %v2179, %v2180
      %v2182 = vsel %vm2158, %v2177, %v2181
      %v2183 = vrot.slane %v1912, 1
      %v2184 = vrot.slane %v1908, 2
      %v2185 = vor.u32 %v2183, %v2184
      %v2186 = vsel %vm2158, %v2181, %v2185
      %v2187 = vrot.slane %v1920, 1
      %v2188 = vrot.slane %v1916, 2
      %v2189 = vor.u32 %v2187, %v2188
      %v2190 = vsel %vm2158, %v2185, %v2189
      %v2191 = vrot.slane %v1928, 1
      %v2192 = vrot.slane %v1924, 2
      %v2193 = vor.u32 %v2191, %v2192
      %v2194 = vsel %vm2158, %v2189, %v2193
      %v2195 = vrot.slane %v1936, 1
      %v2196 = vrot.slane %v1932, 2
      %v2197 = vor.u32 %v2195, %v2196
      %v2198 = vsel %vm2158, %v2193, %v2197
      %v2199 = vrot.slane %v1944, 1
      %v2200 = vrot.slane %v1940, 2
      %v2201 = vor.u32 %v2199, %v2200
      %v2202 = vsel %vm2158, %v2197, %v2201
      %v2203 = vrot.slane %v1952, 1
      %v2204 = vrot.slane %v1948, 2
      %v2205 = vor.u32 %v2203, %v2204
      %v2206 = vsel %vm2158, %v2201, %v2205
      %v2207 = vrot.slane %v1960, 1
      %v2208 = vrot.slane %v1956, 2
      %v2209 = vor.u32 %v2207, %v2208
      %v2210 = vsel %vm2158, %v2205, %v2209
      %v2211 = vrot.slane %v1968, 1
      %v2212 = vrot.slane %v1964, 2
      %v2213 = vor.u32 %v2211, %v2212
      %v2214 = vsel %vm2158, %v2209, %v2213
      %v2215 = vrot.slane %v1976, 1
      %v2216 = vrot.slane %v1972, 2
      %v2217 = vor.u32 %v2215, %v2216
      %v2218 = vsel %vm2158, %v2213, %v2217
      %v2219 = vrot.slane %v1984, 1
      %v2220 = vrot.slane %v1980, 2
      %v2221 = vor.u32 %v2219, %v2220
      %v2222 = vsel %vm2158, %v2217, %v2221
      %v2223 = vrot.slane %v1992, 1
      %v2224 = vrot.slane %v1988, 2
      %v2225 = vor.u32 %v2223, %v2224
      %v2226 = vsel %vm2158, %v2221, %v2225
      %v2228 = vshrl.u32 %v2157, 16
      %v2230 = vrot.slane %v2228, 1
      %v2231 = vshll.u32 %v2157, 16
      %v2233 = vrot.slane %v2231, 2
      %v2234 = vor.u32 %v2230, %v2233
      %v2235 = vsel %vm2158, %v2225, %v2234
      %v2240 = vunpack.c.l.b16 %v2151
      %v2241 = vunpack.c.l.b16 %v2152
      %v2242 = vunpack.c.l.b16 %v2153
      %v2243 = vunpack.c.l.b16 %v2154
      %v2244 = vpack.c.b16 %v2241, %v2240
      %v2245 = vpack.c.b16 %v2243, %v2242
      %v2249 = vsel %vm1726, %v2170, 0
      %v2252 = vsel %vm1726, %v2174, 0
      %v2255 = vsel %vm1726, %v2178, 0
      %v2258 = vsel %vm1726, %v2182, 0
      %v2261 = vsel %vm1726, %v2186, 0
      %v2264 = vsel %vm1726, %v2190, 0
      %v2267 = vsel %vm1726, %v2194, 0
      %v2270 = vsel %vm1726, %v2198, 0
      %v2273 = vsel %vm1726, %v2202, 0
      %v2276 = vsel %vm1726, %v2206, 0
      %v2279 = vsel %vm1726, %v2210, 0
      %v2282 = vsel %vm1726, %v2214, 0
      %v2285 = vsel %vm1726, %v2218, 0
      %v2288 = vsel %vm1726, %v2222, 0
      %v2291 = vsel %vm1726, %v2226, 0
      %v2294 = vsel %vm1726, %v2235, 0
      %2296 = vmatpush.bf16.msra.mxu0 0
      %2297 = vmatpush.bf16.msra.mxu0 0
      %2298 = vmatpush.bf16.msra.mxu0 0
      %2299 = vmatpush.bf16.msra.mxu0 0
      %2300 = vmatpush.bf16.msra.mxu0 0
      %2301 = vmatpush.bf16.msra.mxu0 0
      %2302 = vmatpush.bf16.msra.mxu0 %v2245
      %2303 = vmatpush.bf16.msra.mxu0 %v2244
      %2304 = vmatmul.bf16.gmra.mxu0 %v2249
      %v2305 = vpop.f32.mrf.mxu0
      %v2306 = vadd.f32 0.0, %v2305
      %v2307 = vpop.f32.mrf.mxu0
      %v2308 = vadd.f32 0.0, %v2307
      %2309 = vmatmul.bf16.gmra.mxu0 %v2252
      %v2310 = vpop.f32.mrf.mxu0
      %v2311 = vadd.f32 0.0, %v2310
      %v2312 = vpop.f32.mrf.mxu0
      %v2313 = vadd.f32 0.0, %v2312
      %2314 = vmatmul.bf16.gmra.mxu0 %v2255
      %v2315 = vpop.f32.mrf.mxu0
      %v2316 = vadd.f32 0.0, %v2315
      %v2317 = vpop.f32.mrf.mxu0
      %v2318 = vadd.f32 0.0, %v2317
      %2319 = vmatmul.bf16.gmra.mxu0 %v2258
      %v2320 = vpop.f32.mrf.mxu0
      %v2321 = vadd.f32 0.0, %v2320
      %v2322 = vpop.f32.mrf.mxu0
      %v2323 = vadd.f32 0.0, %v2322
      %2324 = vmatmul.bf16.gmra.mxu0 %v2261
      %v2325 = vpop.f32.mrf.mxu0
      %v2326 = vadd.f32 0.0, %v2325
      %v2327 = vpop.f32.mrf.mxu0
      %v2328 = vadd.f32 0.0, %v2327
      %2329 = vmatmul.bf16.gmra.mxu0 %v2264
      %v2330 = vpop.f32.mrf.mxu0
      %v2331 = vadd.f32 0.0, %v2330
      %v2332 = vpop.f32.mrf.mxu0
      %v2333 = vadd.f32 0.0, %v2332
      %2334 = vmatmul.bf16.gmra.mxu0 %v2267
      %v2335 = vpop.f32.mrf.mxu0
      %v2336 = vadd.f32 0.0, %v2335
      %v2337 = vpop.f32.mrf.mxu0
      %v2338 = vadd.f32 0.0, %v2337
      %2339 = vmatmul.bf16.gmra.mxu0 %v2270
      %v2340 = vpop.f32.mrf.mxu0
      %v2341 = vadd.f32 0.0, %v2340
      %v2342 = vpop.f32.mrf.mxu0
      %v2343 = vadd.f32 0.0, %v2342
      %2344 = vmatmul.bf16.gmra.mxu0 %v2273
      %v2345 = vpop.f32.mrf.mxu0
      %v2346 = vadd.f32 0.0, %v2345
      %v2347 = vpop.f32.mrf.mxu0
      %v2348 = vadd.f32 0.0, %v2347
      %2349 = vmatmul.bf16.gmra.mxu0 %v2276
      %v2350 = vpop.f32.mrf.mxu0
      %v2351 = vadd.f32 0.0, %v2350
      %v2352 = vpop.f32.mrf.mxu0
      %v2353 = vadd.f32 0.0, %v2352
      %2354 = vmatmul.bf16.gmra.mxu0 %v2279
      %v2355 = vpop.f32.mrf.mxu0
      %v2356 = vadd.f32 0.0, %v2355
      %v2357 = vpop.f32.mrf.mxu0
      %v2358 = vadd.f32 0.0, %v2357
      %2359 = vmatmul.bf16.gmra.mxu0 %v2282
      %v2360 = vpop.f32.mrf.mxu0
      %v2361 = vadd.f32 0.0, %v2360
      %v2362 = vpop.f32.mrf.mxu0
      %v2363 = vadd.f32 0.0, %v2362
      %2364 = vmatmul.bf16.gmra.mxu0 %v2285
      %v2365 = vpop.f32.mrf.mxu0
      %v2366 = vadd.f32 0.0, %v2365
      %v2367 = vpop.f32.mrf.mxu0
      %v2368 = vadd.f32 0.0, %v2367
      %2369 = vmatmul.bf16.gmra.mxu0 %v2288
      %v2370 = vpop.f32.mrf.mxu0
      %v2371 = vadd.f32 0.0, %v2370
      %v2372 = vpop.f32.mrf.mxu0
      %v2373 = vadd.f32 0.0, %v2372
      %2374 = vmatmul.bf16.gmra.mxu0 %v2291
      %v2375 = vpop.f32.mrf.mxu0
      %v2376 = vadd.f32 0.0, %v2375
      %v2377 = vpop.f32.mrf.mxu0
      %v2378 = vadd.f32 0.0, %v2377
      %2379 = vmatmul.bf16.gmra.mxu0 %v2294
      %v2380 = vpop.f32.mrf.mxu0
      %v2381 = vadd.f32 0.0, %v2380
      %v2382 = vpop.f32.mrf.mxu0
      %v2383 = vadd.f32 0.0, %v2382
      %2384 = vdwg.mxu0
      %v2385 = vadd.f32 %v2070, %v2306
      %v2386 = vadd.f32 %v2072, %v2308
      %v2387 = vadd.f32 %v2075, %v2311
      %v2388 = vadd.f32 %v2077, %v2313
      %v2389 = vadd.f32 %v2080, %v2316
      %v2390 = vadd.f32 %v2082, %v2318
      %v2391 = vadd.f32 %v2085, %v2321
      %v2392 = vadd.f32 %v2087, %v2323
      %v2393 = vadd.f32 %v2090, %v2326
      %v2394 = vadd.f32 %v2092, %v2328
      %v2395 = vadd.f32 %v2095, %v2331
      %v2396 = vadd.f32 %v2097, %v2333
      %v2397 = vadd.f32 %v2100, %v2336
      %v2398 = vadd.f32 %v2102, %v2338
      %v2399 = vadd.f32 %v2105, %v2341
      %v2400 = vadd.f32 %v2107, %v2343
      %v2401 = vadd.f32 %v2110, %v2346
      %v2402 = vadd.f32 %v2112, %v2348
      %v2403 = vadd.f32 %v2115, %v2351
      %v2404 = vadd.f32 %v2117, %v2353
      %v2405 = vadd.f32 %v2120, %v2356
      %v2406 = vadd.f32 %v2122, %v2358
      %v2407 = vadd.f32 %v2125, %v2361
      %v2408 = vadd.f32 %v2127, %v2363
      %v2409 = vadd.f32 %v2130, %v2366
      %v2410 = vadd.f32 %v2132, %v2368
      %v2411 = vadd.f32 %v2135, %v2371
      %v2412 = vadd.f32 %v2137, %v2373
      %v2413 = vadd.f32 %v2140, %v2376
      %v2414 = vadd.f32 %v2142, %v2378
      %v2415 = vadd.f32 %v2145, %v2381
      %v2416 = vadd.f32 %v2147, %v2383
      %v2417 = vld [vmem:[#allocation2] sm:$0xc]
      %s2418 = scalar_lea.vmem %s3, 48
      %v2419 = vld [vmem:[%s2418] sm:$0xf]
      %v2420 = vld [vmem:[%s2418 + $0x4] sm:$0xf]
      %v2421 = vld [vmem:[%s2418 + $0x8] sm:$0xf]
      %v2422 = vld [vmem:[%s2418 + $0xc] sm:$0xf]
      %v2424 = vunpack.c.l.b16 %v2417
      %v2425 = vpack.c.b16 %v1631, %v2424
      %vm2426 = vcmask 1045504
      %v2427 = vrot.slane %v2425, 2
      %v2428 = vrot.slane %v1664, 2
      %v2429 = vsel %vm2426, %v2427, %v2428
      %v2430 = vrot.slane %v1665, 2
      %v2431 = vsel %vm2426, %v2428, %v2430
      %v2432 = vrot.slane %v1666, 2
      %v2433 = vsel %vm2426, %v2430, %v2432
      %v2434 = vrot.slane %v1667, 2
      %v2435 = vsel %vm2426, %v2432, %v2434
      %v2436 = vrot.slane %v1668, 2
      %v2437 = vsel %vm2426, %v2434, %v2436
      %v2438 = vrot.slane %v1669, 2
      %v2439 = vsel %vm2426, %v2436, %v2438
      %v2440 = vrot.slane %v1670, 2
      %v2441 = vsel %vm2426, %v2438, %v2440
      %v2442 = vrot.slane %v1671, 2
      %v2443 = vsel %vm2426, %v2440, %v2442
      %v2444 = vrot.slane %v1672, 2
      %v2445 = vsel %vm2426, %v2442, %v2444
      %v2446 = vrot.slane %v1673, 2
      %v2447 = vsel %vm2426, %v2444, %v2446
      %v2448 = vrot.slane %v1674, 2
      %v2449 = vsel %vm2426, %v2446, %v2448
      %v2450 = vrot.slane %v1675, 2
      %v2451 = vsel %vm2426, %v2448, %v2450
      %v2452 = vrot.slane %v1676, 2
      %v2453 = vsel %vm2426, %v2450, %v2452
      %v2454 = vrot.slane %v1677, 2
      %v2455 = vsel %vm2426, %v2452, %v2454
      %v2456 = vrot.slane %v1678, 2
      %v2457 = vsel %vm2426, %v2454, %v2456
      %v2458 = vrot.slane %v2157, 2
      %v2459 = vsel %vm2426, %v2456, %v2458
      %v2464 = vunpack.c.l.b16 %v2419
      %v2465 = vunpack.c.l.b16 %v2420
      %v2466 = vunpack.c.l.b16 %v2421
      %v2467 = vunpack.c.l.b16 %v2422
      %v2468 = vpack.c.b16 %v2465, %v2464
      %v2469 = vpack.c.b16 %v2467, %v2466
      %v2473 = vsel %vm1726, %v2429, 0
      %v2476 = vsel %vm1726, %v2431, 0
      %v2479 = vsel %vm1726, %v2433, 0
      %v2482 = vsel %vm1726, %v2435, 0
      %v2485 = vsel %vm1726, %v2437, 0
      %v2488 = vsel %vm1726, %v2439, 0
      %v2491 = vsel %vm1726, %v2441, 0
      %v2494 = vsel %vm1726, %v2443, 0
      %v2497 = vsel %vm1726, %v2445, 0
      %v2500 = vsel %vm1726, %v2447, 0
      %v2503 = vsel %vm1726, %v2449, 0
      %v2506 = vsel %vm1726, %v2451, 0
      %v2509 = vsel %vm1726, %v2453, 0
      %v2512 = vsel %vm1726, %v2455, 0
      %v2515 = vsel %vm1726, %v2457, 0
      %v2518 = vsel %vm1726, %v2459, 0
      %2520 = vmatpush.bf16.msra.mxu0 0
      %2521 = vmatpush.bf16.msra.mxu0 0
      %2522 = vmatpush.bf16.msra.mxu0 0
      %2523 = vmatpush.bf16.msra.mxu0 0
      %2524 = vmatpush.bf16.msra.mxu0 0
      %2525 = vmatpush.bf16.msra.mxu0 0
      %2526 = vmatpush.bf16.msra.mxu0 %v2469
      %2527 = vmatpush.bf16.msra.mxu0 %v2468
      %2528 = vmatmul.bf16.gmra.mxu0 %v2473
      %v2529 = vpop.f32.mrf.mxu0
      %v2530 = vadd.f32 0.0, %v2529
      %v2531 = vpop.f32.mrf.mxu0
      %v2532 = vadd.f32 0.0, %v2531
      %2533 = vmatmul.bf16.gmra.mxu0 %v2476
      %v2534 = vpop.f32.mrf.mxu0
      %v2535 = vadd.f32 0.0, %v2534
      %v2536 = vpop.f32.mrf.mxu0
      %v2537 = vadd.f32 0.0, %v2536
      %2538 = vmatmul.bf16.gmra.mxu0 %v2479
      %v2539 = vpop.f32.mrf.mxu0
      %v2540 = vadd.f32 0.0, %v2539
      %v2541 = vpop.f32.mrf.mxu0
      %v2542 = vadd.f32 0.0, %v2541
      %2543 = vmatmul.bf16.gmra.mxu0 %v2482
      %v2544 = vpop.f32.mrf.mxu0
      %v2545 = vadd.f32 0.0, %v2544
      %v2546 = vpop.f32.mrf.mxu0
      %v2547 = vadd.f32 0.0, %v2546
      %2548 = vmatmul.bf16.gmra.mxu0 %v2485
      %v2549 = vpop.f32.mrf.mxu0
      %v2550 = vadd.f32 0.0, %v2549
      %v2551 = vpop.f32.mrf.mxu0
      %v2552 = vadd.f32 0.0, %v2551
      %2553 = vmatmul.bf16.gmra.mxu0 %v2488
      %v2554 = vpop.f32.mrf.mxu0
      %v2555 = vadd.f32 0.0, %v2554
      %v2556 = vpop.f32.mrf.mxu0
      %v2557 = vadd.f32 0.0, %v2556
      %2558 = vmatmul.bf16.gmra.mxu0 %v2491
      %v2559 = vpop.f32.mrf.mxu0
      %v2560 = vadd.f32 0.0, %v2559
      %v2561 = vpop.f32.mrf.mxu0
      %v2562 = vadd.f32 0.0, %v2561
      %2563 = vmatmul.bf16.gmra.mxu0 %v2494
      %v2564 = vpop.f32.mrf.mxu0
      %v2565 = vadd.f32 0.0, %v2564
      %v2566 = vpop.f32.mrf.mxu0
      %v2567 = vadd.f32 0.0, %v2566
      %2568 = vmatmul.bf16.gmra.mxu0 %v2497
      %v2569 = vpop.f32.mrf.mxu0
      %v2570 = vadd.f32 0.0, %v2569
      %v2571 = vpop.f32.mrf.mxu0
      %v2572 = vadd.f32 0.0, %v2571
      %2573 = vmatmul.bf16.gmra.mxu0 %v2500
      %v2574 = vpop.f32.mrf.mxu0
      %v2575 = vadd.f32 0.0, %v2574
      %v2576 = vpop.f32.mrf.mxu0
      %v2577 = vadd.f32 0.0, %v2576
      %2578 = vmatmul.bf16.gmra.mxu0 %v2503
      %v2579 = vpop.f32.mrf.mxu0
      %v2580 = vadd.f32 0.0, %v2579
      %v2581 = vpop.f32.mrf.mxu0
      %v2582 = vadd.f32 0.0, %v2581
      %2583 = vmatmul.bf16.gmra.mxu0 %v2506
      %v2584 = vpop.f32.mrf.mxu0
      %v2585 = vadd.f32 0.0, %v2584
      %v2586 = vpop.f32.mrf.mxu0
      %v2587 = vadd.f32 0.0, %v2586
      %2588 = vmatmul.bf16.gmra.mxu0 %v2509
      %v2589 = vpop.f32.mrf.mxu0
      %v2590 = vadd.f32 0.0, %v2589
      %v2591 = vpop.f32.mrf.mxu0
      %v2592 = vadd.f32 0.0, %v2591
      %2593 = vmatmul.bf16.gmra.mxu0 %v2512
      %v2594 = vpop.f32.mrf.mxu0
      %v2595 = vadd.f32 0.0, %v2594
      %v2596 = vpop.f32.mrf.mxu0
      %v2597 = vadd.f32 0.0, %v2596
      %2598 = vmatmul.bf16.gmra.mxu0 %v2515
      %v2599 = vpop.f32.mrf.mxu0
      %v2600 = vadd.f32 0.0, %v2599
      %v2601 = vpop.f32.mrf.mxu0
      %v2602 = vadd.f32 0.0, %v2601
      %2603 = vmatmul.bf16.gmra.mxu0 %v2518
      %v2604 = vpop.f32.mrf.mxu0
      %v2605 = vadd.f32 0.0, %v2604
      %v2606 = vpop.f32.mrf.mxu0
      %v2607 = vadd.f32 0.0, %v2606
      %2608 = vdwg.mxu0
      %v2609 = vadd.f32 %v2385, %v2530
      %v2610 = vadd.f32 %v2386, %v2532
      %v2611 = vadd.f32 %v2387, %v2535
      %v2612 = vadd.f32 %v2388, %v2537
      %v2613 = vadd.f32 %v2389, %v2540
      %v2614 = vadd.f32 %v2390, %v2542
      %v2615 = vadd.f32 %v2391, %v2545
      %v2616 = vadd.f32 %v2392, %v2547
      %v2617 = vadd.f32 %v2393, %v2550
      %v2618 = vadd.f32 %v2394, %v2552
      %v2619 = vadd.f32 %v2395, %v2555
      %v2620 = vadd.f32 %v2396, %v2557
      %v2621 = vadd.f32 %v2397, %v2560
      %v2622 = vadd.f32 %v2398, %v2562
      %v2623 = vadd.f32 %v2399, %v2565
      %v2624 = vadd.f32 %v2400, %v2567
      %v2625 = vadd.f32 %v2401, %v2570
      %v2626 = vadd.f32 %v2402, %v2572
      %v2627 = vadd.f32 %v2403, %v2575
      %v2628 = vadd.f32 %v2404, %v2577
      %v2629 = vadd.f32 %v2405, %v2580
      %v2630 = vadd.f32 %v2406, %v2582
      %v2631 = vadd.f32 %v2407, %v2585
      %v2632 = vadd.f32 %v2408, %v2587
      %v2633 = vadd.f32 %v2409, %v2590
      %v2634 = vadd.f32 %v2410, %v2592
      %v2635 = vadd.f32 %v2411, %v2595
      %v2636 = vadd.f32 %v2412, %v2597
      %v2637 = vadd.f32 %v2413, %v2600
      %v2638 = vadd.f32 %v2414, %v2602
      %v2639 = vadd.f32 %v2415, %v2605
      %v2640 = vadd.f32 %v2416, %v2607
      %v2641 = vld [vmem:[#allocation2 + $0x80] sm:$0x7]
      %s2642 = scalar_lea.vmem %s3, 64
      %v2643 = vld [vmem:[%s2642] sm:$0xf]
      %v2644 = vld [vmem:[%s2642 + $0x4] sm:$0xf]
      %v2645 = vld [vmem:[%s2642 + $0x8] sm:$0xf]
      %v2646 = vld [vmem:[%s2642 + $0xc] sm:$0xf]
      %v2648 = vunpack.c.l.b16 %v2641
      %v2649 = vpack.c.b16 %v2648, %v2648
      %vm2650 = vsmask.f32 5376
      %v2652 = vshrl.u32 %v2425, 16
      %v2654 = vrot.slane %v2652, 2
      %v2655 = vshll.u32 %v2425, 16
      %v2657 = vrot.slane %v2655, 3
      %v2658 = vor.u32 %v2654, %v2657
      %v2659 = vrot.slane %v1880, 2
      %v2660 = vrot.slane %v1876, 3
      %v2661 = vor.u32 %v2659, %v2660
      %v2662 = vsel %vm2650, %v2658, %v2661
      %v2663 = vrot.slane %v1888, 2
      %v2664 = vrot.slane %v1884, 3
      %v2665 = vor.u32 %v2663, %v2664
      %v2666 = vsel %vm2650, %v2661, %v2665
      %v2667 = vrot.slane %v1896, 2
      %v2668 = vrot.slane %v1892, 3
      %v2669 = vor.u32 %v2667, %v2668
      %v2670 = vsel %vm2650, %v2665, %v2669
      %v2671 = vrot.slane %v1904, 2
      %v2672 = vrot.slane %v1900, 3
      %v2673 = vor.u32 %v2671, %v2672
      %v2674 = vsel %vm2650, %v2669, %v2673
      %v2675 = vrot.slane %v1912, 2
      %v2676 = vrot.slane %v1908, 3
      %v2677 = vor.u32 %v2675, %v2676
      %v2678 = vsel %vm2650, %v2673, %v2677
      %v2679 = vrot.slane %v1920, 2
      %v2680 = vrot.slane %v1916, 3
      %v2681 = vor.u32 %v2679, %v2680
      %v2682 = vsel %vm2650, %v2677, %v2681
      %v2683 = vrot.slane %v1928, 2
      %v2684 = vrot.slane %v1924, 3
      %v2685 = vor.u32 %v2683, %v2684
      %v2686 = vsel %vm2650, %v2681, %v2685
      %v2687 = vrot.slane %v1936, 2
      %v2688 = vrot.slane %v1932, 3
      %v2689 = vor.u32 %v2687, %v2688
      %v2690 = vsel %vm2650, %v2685, %v2689
      %v2691 = vrot.slane %v1944, 2
      %v2692 = vrot.slane %v1940, 3
      %v2693 = vor.u32 %v2691, %v2692
      %v2694 = vsel %vm2650, %v2689, %v2693
      %v2695 = vrot.slane %v1952, 2
      %v2696 = vrot.slane %v1948, 3
      %v2697 = vor.u32 %v2695, %v2696
      %v2698 = vsel %vm2650, %v2693, %v2697
      %v2699 = vrot.slane %v1960, 2
      %v2700 = vrot.slane %v1956, 3
      %v2701 = vor.u32 %v2699, %v2700
      %v2702 = vsel %vm2650, %v2697, %v2701
      %v2703 = vrot.slane %v1968, 2
      %v2704 = vrot.slane %v1964, 3
      %v2705 = vor.u32 %v2703, %v2704
      %v2706 = vsel %vm2650, %v2701, %v2705
      %v2707 = vrot.slane %v1976, 2
      %v2708 = vrot.slane %v1972, 3
      %v2709 = vor.u32 %v2707, %v2708
      %v2710 = vsel %vm2650, %v2705, %v2709
      %v2711 = vrot.slane %v1984, 2
      %v2712 = vrot.slane %v1980, 3
      %v2713 = vor.u32 %v2711, %v2712
      %v2714 = vsel %vm2650, %v2709, %v2713
      %v2715 = vrot.slane %v1992, 2
      %v2716 = vrot.slane %v1988, 3
      %v2717 = vor.u32 %v2715, %v2716
      %v2718 = vsel %vm2650, %v2713, %v2717
      %v2720 = vshrl.u32 %v2649, 16
      %v2722 = vrot.slane %v2720, 2
      %v2723 = vshll.u32 %v2649, 16
      %v2725 = vrot.slane %v2723, 3
      %v2726 = vor.u32 %v2722, %v2725
      %v2727 = vsel %vm2650, %v2717, %v2726
      %v2732 = vunpack.c.l.b16 %v2643
      %v2733 = vunpack.c.l.b16 %v2644
      %v2734 = vunpack.c.l.b16 %v2645
      %v2735 = vunpack.c.l.b16 %v2646
      %v2736 = vpack.c.b16 %v2733, %v2732
      %v2737 = vpack.c.b16 %v2735, %v2734
      %v2741 = vsel %vm1726, %v2662, 0
      %v2744 = vsel %vm1726, %v2666, 0
      %v2747 = vsel %vm1726, %v2670, 0
      %v2750 = vsel %vm1726, %v2674, 0
      %v2753 = vsel %vm1726, %v2678, 0
      %v2756 = vsel %vm1726, %v2682, 0
      %v2759 = vsel %vm1726, %v2686, 0
      %v2762 = vsel %vm1726, %v2690, 0
      %v2765 = vsel %vm1726, %v2694, 0
      %v2768 = vsel %vm1726, %v2698, 0
      %v2771 = vsel %vm1726, %v2702, 0
      %v2774 = vsel %vm1726, %v2706, 0
      %v2777 = vsel %vm1726, %v2710, 0
      %v2780 = vsel %vm1726, %v2714, 0
      %v2783 = vsel %vm1726, %v2718, 0
      %v2786 = vsel %vm1726, %v2727, 0
      %2788 = vmatpush.bf16.msra.mxu0 0
      %2789 = vmatpush.bf16.msra.mxu0 0
      %2790 = vmatpush.bf16.msra.mxu0 0
      %2791 = vmatpush.bf16.msra.mxu0 0
      %2792 = vmatpush.bf16.msra.mxu0 0
      %2793 = vmatpush.bf16.msra.mxu0 0
      %2794 = vmatpush.bf16.msra.mxu0 %v2737
      %2795 = vmatpush.bf16.msra.mxu0 %v2736
      %2796 = vmatmul.bf16.gmra.mxu0 %v2741
      %v2797 = vpop.f32.mrf.mxu0
      %v2798 = vadd.f32 0.0, %v2797
      %v2799 = vpop.f32.mrf.mxu0
      %v2800 = vadd.f32 0.0, %v2799
      %2801 = vmatmul.bf16.gmra.mxu0 %v2744
      %v2802 = vpop.f32.mrf.mxu0
      %v2803 = vadd.f32 0.0, %v2802
      %v2804 = vpop.f32.mrf.mxu0
      %v2805 = vadd.f32 0.0, %v2804
      %2806 = vmatmul.bf16.gmra.mxu0 %v2747
      %v2807 = vpop.f32.mrf.mxu0
      %v2808 = vadd.f32 0.0, %v2807
      %v2809 = vpop.f32.mrf.mxu0
      %v2810 = vadd.f32 0.0, %v2809
      %2811 = vmatmul.bf16.gmra.mxu0 %v2750
      %v2812 = vpop.f32.mrf.mxu0
      %v2813 = vadd.f32 0.0, %v2812
      %v2814 = vpop.f32.mrf.mxu0
      %v2815 = vadd.f32 0.0, %v2814
      %2816 = vmatmul.bf16.gmra.mxu0 %v2753
      %v2817 = vpop.f32.mrf.mxu0
      %v2818 = vadd.f32 0.0, %v2817
      %v2819 = vpop.f32.mrf.mxu0
      %v2820 = vadd.f32 0.0, %v2819
      %2821 = vmatmul.bf16.gmra.mxu0 %v2756
      %v2822 = vpop.f32.mrf.mxu0
      %v2823 = vadd.f32 0.0, %v2822
      %v2824 = vpop.f32.mrf.mxu0
      %v2825 = vadd.f32 0.0, %v2824
      %2826 = vmatmul.bf16.gmra.mxu0 %v2759
      %v2827 = vpop.f32.mrf.mxu0
      %v2828 = vadd.f32 0.0, %v2827
      %v2829 = vpop.f32.mrf.mxu0
      %v2830 = vadd.f32 0.0, %v2829
      %2831 = vmatmul.bf16.gmra.mxu0 %v2762
      %v2832 = vpop.f32.mrf.mxu0
      %v2833 = vadd.f32 0.0, %v2832
      %v2834 = vpop.f32.mrf.mxu0
      %v2835 = vadd.f32 0.0, %v2834
      %2836 = vmatmul.bf16.gmra.mxu0 %v2765
      %v2837 = vpop.f32.mrf.mxu0
      %v2838 = vadd.f32 0.0, %v2837
      %v2839 = vpop.f32.mrf.mxu0
      %v2840 = vadd.f32 0.0, %v2839
      %2841 = vmatmul.bf16.gmra.mxu0 %v2768
      %v2842 = vpop.f32.mrf.mxu0
      %v2843 = vadd.f32 0.0, %v2842
      %v2844 = vpop.f32.mrf.mxu0
      %v2845 = vadd.f32 0.0, %v2844
      %2846 = vmatmul.bf16.gmra.mxu0 %v2771
      %v2847 = vpop.f32.mrf.mxu0
      %v2848 = vadd.f32 0.0, %v2847
      %v2849 = vpop.f32.mrf.mxu0
      %v2850 = vadd.f32 0.0, %v2849
      %2851 = vmatmul.bf16.gmra.mxu0 %v2774
      %v2852 = vpop.f32.mrf.mxu0
      %v2853 = vadd.f32 0.0, %v2852
      %v2854 = vpop.f32.mrf.mxu0
      %v2855 = vadd.f32 0.0, %v2854
      %2856 = vmatmul.bf16.gmra.mxu0 %v2777
      %v2857 = vpop.f32.mrf.mxu0
      %v2858 = vadd.f32 0.0, %v2857
      %v2859 = vpop.f32.mrf.mxu0
      %v2860 = vadd.f32 0.0, %v2859
      %2861 = vmatmul.bf16.gmra.mxu0 %v2780
      %v2862 = vpop.f32.mrf.mxu0
      %v2863 = vadd.f32 0.0, %v2862
      %v2864 = vpop.f32.mrf.mxu0
      %v2865 = vadd.f32 0.0, %v2864
      %2866 = vmatmul.bf16.gmra.mxu0 %v2783
      %v2867 = vpop.f32.mrf.mxu0
      %v2868 = vadd.f32 0.0, %v2867
      %v2869 = vpop.f32.mrf.mxu0
      %v2870 = vadd.f32 0.0, %v2869
      %2871 = vmatmul.bf16.gmra.mxu0 %v2786
      %v2872 = vpop.f32.mrf.mxu0
      %v2873 = vadd.f32 0.0, %v2872
      %v2874 = vpop.f32.mrf.mxu0
      %v2875 = vadd.f32 0.0, %v2874
      %2876 = vdwg.mxu0
      %v2877 = vadd.f32 %v2609, %v2798
      %v2878 = vadd.f32 %v2610, %v2800
      %v2879 = vadd.f32 %v2611, %v2803
      %v2880 = vadd.f32 %v2612, %v2805
      %v2881 = vadd.f32 %v2613, %v2808
      %v2882 = vadd.f32 %v2614, %v2810
      %v2883 = vadd.f32 %v2615, %v2813
      %v2884 = vadd.f32 %v2616, %v2815
      %v2885 = vadd.f32 %v2617, %v2818
      %v2886 = vadd.f32 %v2618, %v2820
      %v2887 = vadd.f32 %v2619, %v2823
      %v2888 = vadd.f32 %v2620, %v2825
      %v2889 = vadd.f32 %v2621, %v2828
      %v2890 = vadd.f32 %v2622, %v2830
      %v2891 = vadd.f32 %v2623, %v2833
      %v2892 = vadd.f32 %v2624, %v2835
      %v2893 = vadd.f32 %v2625, %v2838
      %v2894 = vadd.f32 %v2626, %v2840
      %v2895 = vadd.f32 %v2627, %v2843
      %v2896 = vadd.f32 %v2628, %v2845
      %v2897 = vadd.f32 %v2629, %v2848
      %v2898 = vadd.f32 %v2630, %v2850
      %v2899 = vadd.f32 %v2631, %v2853
      %v2900 = vadd.f32 %v2632, %v2855
      %v2901 = vadd.f32 %v2633, %v2858
      %v2902 = vadd.f32 %v2634, %v2860
      %v2903 = vadd.f32 %v2635, %v2863
      %v2904 = vadd.f32 %v2636, %v2865
      %v2905 = vadd.f32 %v2637, %v2868
      %v2906 = vadd.f32 %v2638, %v2870
      %v2907 = vadd.f32 %v2639, %v2873
      %v2908 = vadd.f32 %v2640, %v2875
      %v2909 = vld [vmem:[#allocation2] sm:$0x8]
      %s2910 = scalar_lea.vmem %s3, 80
      %v2911 = vld [vmem:[%s2910] sm:$0xf]
      %v2912 = vld [vmem:[%s2910 + $0x4] sm:$0xf]
      %v2913 = vld [vmem:[%s2910 + $0x8] sm:$0xf]
      %v2914 = vld [vmem:[%s2910 + $0xc] sm:$0xf]
      %v2916 = vunpack.c.l.b16 %v2909
      %v2917 = vpack.c.b16 %v1631, %v2916
      %vm2918 = vcmask 1044480
      %v2919 = vrot.slane %v2917, 3
      %v2920 = vrot.slane %v1664, 3
      %v2921 = vsel %vm2918, %v2919, %v2920
      %v2922 = vrot.slane %v1665, 3
      %v2923 = vsel %vm2918, %v2920, %v2922
      %v2924 = vrot.slane %v1666, 3
      %v2925 = vsel %vm2918, %v2922, %v2924
      %v2926 = vrot.slane %v1667, 3
      %v2927 = vsel %vm2918, %v2924, %v2926
      %v2928 = vrot.slane %v1668, 3
      %v2929 = vsel %vm2918, %v2926, %v2928
      %v2930 = vrot.slane %v1669, 3
      %v2931 = vsel %vm2918, %v2928, %v2930
      %v2932 = vrot.slane %v1670, 3
      %v2933 = vsel %vm2918, %v2930, %v2932
      %v2934 = vrot.slane %v1671, 3
      %v2935 = vsel %vm2918, %v2932, %v2934
      %v2936 = vrot.slane %v1672, 3
      %v2937 = vsel %vm2918, %v2934, %v2936
      %v2938 = vrot.slane %v1673, 3
      %v2939 = vsel %vm2918, %v2936, %v2938
      %v2940 = vrot.slane %v1674, 3
      %v2941 = vsel %vm2918, %v2938, %v2940
      %v2942 = vrot.slane %v1675, 3
      %v2943 = vsel %vm2918, %v2940, %v2942
      %v2944 = vrot.slane %v1676, 3
      %v2945 = vsel %vm2918, %v2942, %v2944
      %v2946 = vrot.slane %v1677, 3
      %v2947 = vsel %vm2918, %v2944, %v2946
      %v2948 = vrot.slane %v1678, 3
      %v2949 = vsel %vm2918, %v2946, %v2948
      %v2950 = vrot.slane %v2649, 3
      %v2951 = vsel %vm2918, %v2948, %v2950
      %v2956 = vunpack.c.l.b16 %v2911
      %v2957 = vunpack.c.l.b16 %v2912
      %v2958 = vunpack.c.l.b16 %v2913
      %v2959 = vunpack.c.l.b16 %v2914
      %v2960 = vpack.c.b16 %v2957, %v2956
      %v2961 = vpack.c.b16 %v2959, %v2958
      %v2965 = vsel %vm1726, %v2921, 0
      %v2968 = vsel %vm1726, %v2923, 0
      %v2971 = vsel %vm1726, %v2925, 0
      %v2974 = vsel %vm1726, %v2927, 0
      %v2977 = vsel %vm1726, %v2929, 0
      %v2980 = vsel %vm1726, %v2931, 0
      %v2983 = vsel %vm1726, %v2933, 0
      %v2986 = vsel %vm1726, %v2935, 0
      %v2989 = vsel %vm1726, %v2937, 0
      %v2992 = vsel %vm1726, %v2939, 0
      %v2995 = vsel %vm1726, %v2941, 0
      %v2998 = vsel %vm1726, %v2943, 0
      %v3001 = vsel %vm1726, %v2945, 0
      %v3004 = vsel %vm1726, %v2947, 0
      %v3007 = vsel %vm1726, %v2949, 0
      %v3010 = vsel %vm1726, %v2951, 0
      %3012 = vmatpush.bf16.msra.mxu0 0
      %3013 = vmatpush.bf16.msra.mxu0 0
      %3014 = vmatpush.bf16.msra.mxu0 0
      %3015 = vmatpush.bf16.msra.mxu0 0
      %3016 = vmatpush.bf16.msra.mxu0 0
      %3017 = vmatpush.bf16.msra.mxu0 0
      %3018 = vmatpush.bf16.msra.mxu0 %v2961
      %3019 = vmatpush.bf16.msra.mxu0 %v2960
      %3020 = vmatmul.bf16.gmra.mxu0 %v2965
      %v3021 = vpop.f32.mrf.mxu0
      %v3022 = vadd.f32 0.0, %v3021
      %v3023 = vpop.f32.mrf.mxu0
      %v3024 = vadd.f32 0.0, %v3023
      %3025 = vmatmul.bf16.gmra.mxu0 %v2968
      %v3026 = vpop.f32.mrf.mxu0
      %v3027 = vadd.f32 0.0, %v3026
      %v3028 = vpop.f32.mrf.mxu0
      %v3029 = vadd.f32 0.0, %v3028
      %3030 = vmatmul.bf16.gmra.mxu0 %v2971
      %v3031 = vpop.f32.mrf.mxu0
      %v3032 = vadd.f32 0.0, %v3031
      %v3033 = vpop.f32.mrf.mxu0
      %v3034 = vadd.f32 0.0, %v3033
      %3035 = vmatmul.bf16.gmra.mxu0 %v2974
      %v3036 = vpop.f32.mrf.mxu0
      %v3037 = vadd.f32 0.0, %v3036
      %v3038 = vpop.f32.mrf.mxu0
      %v3039 = vadd.f32 0.0, %v3038
      %3040 = vmatmul.bf16.gmra.mxu0 %v2977
      %v3041 = vpop.f32.mrf.mxu0
      %v3042 = vadd.f32 0.0, %v3041
      %v3043 = vpop.f32.mrf.mxu0
      %v3044 = vadd.f32 0.0, %v3043
      %3045 = vmatmul.bf16.gmra.mxu0 %v2980
      %v3046 = vpop.f32.mrf.mxu0
      %v3047 = vadd.f32 0.0, %v3046
      %v3048 = vpop.f32.mrf.mxu0
      %v3049 = vadd.f32 0.0, %v3048
      %3050 = vmatmul.bf16.gmra.mxu0 %v2983
      %v3051 = vpop.f32.mrf.mxu0
      %v3052 = vadd.f32 0.0, %v3051
      %v3053 = vpop.f32.mrf.mxu0
      %v3054 = vadd.f32 0.0, %v3053
      %3055 = vmatmul.bf16.gmra.mxu0 %v2986
      %v3056 = vpop.f32.mrf.mxu0
      %v3057 = vadd.f32 0.0, %v3056
      %v3058 = vpop.f32.mrf.mxu0
      %v3059 = vadd.f32 0.0, %v3058
      %3060 = vmatmul.bf16.gmra.mxu0 %v2989
      %v3061 = vpop.f32.mrf.mxu0
      %v3062 = vadd.f32 0.0, %v3061
      %v3063 = vpop.f32.mrf.mxu0
      %v3064 = vadd.f32 0.0, %v3063
      %3065 = vmatmul.bf16.gmra.mxu0 %v2992
      %v3066 = vpop.f32.mrf.mxu0
      %v3067 = vadd.f32 0.0, %v3066
      %v3068 = vpop.f32.mrf.mxu0
      %v3069 = vadd.f32 0.0, %v3068
      %3070 = vmatmul.bf16.gmra.mxu0 %v2995
      %v3071 = vpop.f32.mrf.mxu0
      %v3072 = vadd.f32 0.0, %v3071
      %v3073 = vpop.f32.mrf.mxu0
      %v3074 = vadd.f32 0.0, %v3073
      %3075 = vmatmul.bf16.gmra.mxu0 %v2998
      %v3076 = vpop.f32.mrf.mxu0
      %v3077 = vadd.f32 0.0, %v3076
      %v3078 = vpop.f32.mrf.mxu0
      %v3079 = vadd.f32 0.0, %v3078
      %3080 = vmatmul.bf16.gmra.mxu0 %v3001
      %v3081 = vpop.f32.mrf.mxu0
      %v3082 = vadd.f32 0.0, %v3081
      %v3083 = vpop.f32.mrf.mxu0
      %v3084 = vadd.f32 0.0, %v3083
      %3085 = vmatmul.bf16.gmra.mxu0 %v3004
      %v3086 = vpop.f32.mrf.mxu0
      %v3087 = vadd.f32 0.0, %v3086
      %v3088 = vpop.f32.mrf.mxu0
      %v3089 = vadd.f32 0.0, %v3088
      %3090 = vmatmul.bf16.gmra.mxu0 %v3007
      %v3091 = vpop.f32.mrf.mxu0
      %v3092 = vadd.f32 0.0, %v3091
      %v3093 = vpop.f32.mrf.mxu0
      %v3094 = vadd.f32 0.0, %v3093
      %3095 = vmatmul.bf16.gmra.mxu0 %v3010
      %v3096 = vpop.f32.mrf.mxu0
      %v3097 = vadd.f32 0.0, %v3096
      %v3098 = vpop.f32.mrf.mxu0
      %v3099 = vadd.f32 0.0, %v3098
      %3100 = vdwg.mxu0
      %v3101 = vadd.f32 %v2877, %v3022
      %v3102 = vadd.f32 %v2878, %v3024
      %v3103 = vadd.f32 %v2879, %v3027
      %v3104 = vadd.f32 %v2880, %v3029
      %v3105 = vadd.f32 %v2881, %v3032
      %v3106 = vadd.f32 %v2882, %v3034
      %v3107 = vadd.f32 %v2883, %v3037
      %v3108 = vadd.f32 %v2884, %v3039
      %v3109 = vadd.f32 %v2885, %v3042
      %v3110 = vadd.f32 %v2886, %v3044
      %v3111 = vadd.f32 %v2887, %v3047
      %v3112 = vadd.f32 %v2888, %v3049
      %v3113 = vadd.f32 %v2889, %v3052
      %v3114 = vadd.f32 %v2890, %v3054
      %v3115 = vadd.f32 %v2891, %v3057
      %v3116 = vadd.f32 %v2892, %v3059
      %v3117 = vadd.f32 %v2893, %v3062
      %v3118 = vadd.f32 %v2894, %v3064
      %v3119 = vadd.f32 %v2895, %v3067
      %v3120 = vadd.f32 %v2896, %v3069
      %v3121 = vadd.f32 %v2897, %v3072
      %v3122 = vadd.f32 %v2898, %v3074
      %v3123 = vadd.f32 %v2899, %v3077
      %v3124 = vadd.f32 %v2900, %v3079
      %v3125 = vadd.f32 %v2901, %v3082
      %v3126 = vadd.f32 %v2902, %v3084
      %v3127 = vadd.f32 %v2903, %v3087
      %v3128 = vadd.f32 %v2904, %v3089
      %v3129 = vadd.f32 %v2905, %v3092
      %v3130 = vadd.f32 %v2906, %v3094
      %v3131 = vadd.f32 %v2907, %v3097
      %v3132 = vadd.f32 %v2908, %v3099
      %v3133 = vld [vmem:[#allocation2 + $0x80] sm:$0xf]
      %s3134 = scalar_lea.vmem %s3, 96
      %v3135 = vld [vmem:[%s3134] sm:$0xf]
      %v3136 = vld [vmem:[%s3134 + $0x4] sm:$0xf]
      %v3137 = vld [vmem:[%s3134 + $0x8] sm:$0xf]
      %v3138 = vld [vmem:[%s3134 + $0xc] sm:$0xf]
      %v3140 = vunpack.c.l.b16 %v3133
      %v3141 = vpack.c.b16 %v3140, %v3140
      %vm3142 = vsmask.f32 4352
      %v3144 = vshrl.u32 %v2917, 16
      %v3146 = vrot.slane %v3144, 3
      %v3147 = vshll.u32 %v2917, 16
      %v3149 = vrot.slane %v3147, 4
      %v3150 = vor.u32 %v3146, %v3149
      %v3151 = vrot.slane %v1880, 3
      %v3152 = vrot.slane %v1876, 4
      %v3153 = vor.u32 %v3151, %v3152
      %v3154 = vsel %vm3142, %v3150, %v3153
      %v3155 = vrot.slane %v1888, 3
      %v3156 = vrot.slane %v1884, 4
      %v3157 = vor.u32 %v3155, %v3156
      %v3158 = vsel %vm3142, %v3153, %v3157
      %v3159 = vrot.slane %v1896, 3
      %v3160 = vrot.slane %v1892, 4
      %v3161 = vor.u32 %v3159, %v3160
      %v3162 = vsel %vm3142, %v3157, %v3161
      %v3163 = vrot.slane %v1904, 3
      %v3164 = vrot.slane %v1900, 4
      %v3165 = vor.u32 %v3163, %v3164
      %v3166 = vsel %vm3142, %v3161, %v3165
      %v3167 = vrot.slane %v1912, 3
      %v3168 = vrot.slane %v1908, 4
      %v3169 = vor.u32 %v3167, %v3168
      %v3170 = vsel %vm3142, %v3165, %v3169
      %v3171 = vrot.slane %v1920, 3
      %v3172 = vrot.slane %v1916, 4
      %v3173 = vor.u32 %v3171, %v3172
      %v3174 = vsel %vm3142, %v3169, %v3173
      %v3175 = vrot.slane %v1928, 3
      %v3176 = vrot.slane %v1924, 4
      %v3177 = vor.u32 %v3175, %v3176
      %v3178 = vsel %vm3142, %v3173, %v3177
      %v3179 = vrot.slane %v1936, 3
      %v3180 = vrot.slane %v1932, 4
      %v3181 = vor.u32 %v3179, %v3180
      %v3182 = vsel %vm3142, %v3177, %v3181
      %v3183 = vrot.slane %v1944, 3
      %v3184 = vrot.slane %v1940, 4
      %v3185 = vor.u32 %v3183, %v3184
      %v3186 = vsel %vm3142, %v3181, %v3185
      %v3187 = vrot.slane %v1952, 3
      %v3188 = vrot.slane %v1948, 4
      %v3189 = vor.u32 %v3187, %v3188
      %v3190 = vsel %vm3142, %v3185, %v3189
      %v3191 = vrot.slane %v1960, 3
      %v3192 = vrot.slane %v1956, 4
      %v3193 = vor.u32 %v3191, %v3192
      %v3194 = vsel %vm3142, %v3189, %v3193
      %v3195 = vrot.slane %v1968, 3
      %v3196 = vrot.slane %v1964, 4
      %v3197 = vor.u32 %v3195, %v3196
      %v3198 = vsel %vm3142, %v3193, %v3197
      %v3199 = vrot.slane %v1976, 3
      %v3200 = vrot.slane %v1972, 4
      %v3201 = vor.u32 %v3199, %v3200
      %v3202 = vsel %vm3142, %v3197, %v3201
      %v3203 = vrot.slane %v1984, 3
      %v3204 = vrot.slane %v1980, 4
      %v3205 = vor.u32 %v3203, %v3204
      %v3206 = vsel %vm3142, %v3201, %v3205
      %v3207 = vrot.slane %v1992, 3
      %v3208 = vrot.slane %v1988, 4
      %v3209 = vor.u32 %v3207, %v3208
      %v3210 = vsel %vm3142, %v3205, %v3209
      %v3212 = vshrl.u32 %v3141, 16
      %v3214 = vrot.slane %v3212, 3
      %v3215 = vshll.u32 %v3141, 16
      %v3217 = vrot.slane %v3215, 4
      %v3218 = vor.u32 %v3214, %v3217
      %v3219 = vsel %vm3142, %v3209, %v3218
      %v3224 = vunpack.c.l.b16 %v3135
      %v3225 = vunpack.c.l.b16 %v3136
      %v3226 = vunpack.c.l.b16 %v3137
      %v3227 = vunpack.c.l.b16 %v3138
      %v3228 = vpack.c.b16 %v3225, %v3224
      %v3229 = vpack.c.b16 %v3227, %v3226
      %v3233 = vsel %vm1726, %v3154, 0
      %v3236 = vsel %vm1726, %v3158, 0
      %v3239 = vsel %vm1726, %v3162, 0
      %v3242 = vsel %vm1726, %v3166, 0
      %v3245 = vsel %vm1726, %v3170, 0
      %v3248 = vsel %vm1726, %v3174, 0
      %v3251 = vsel %vm1726, %v3178, 0
      %v3254 = vsel %vm1726, %v3182, 0
      %v3257 = vsel %vm1726, %v3186, 0
      %v3260 = vsel %vm1726, %v3190, 0
      %v3263 = vsel %vm1726, %v3194, 0
      %v3266 = vsel %vm1726, %v3198, 0
      %v3269 = vsel %vm1726, %v3202, 0
      %v3272 = vsel %vm1726, %v3206, 0
      %v3275 = vsel %vm1726, %v3210, 0
      %v3278 = vsel %vm1726, %v3219, 0
      %3280 = vmatpush.bf16.msra.mxu0 0
      %3281 = vmatpush.bf16.msra.mxu0 0
      %3282 = vmatpush.bf16.msra.mxu0 0
      %3283 = vmatpush.bf16.msra.mxu0 0
      %3284 = vmatpush.bf16.msra.mxu0 0
      %3285 = vmatpush.bf16.msra.mxu0 0
      %3286 = vmatpush.bf16.msra.mxu0 %v3229
      %3287 = vmatpush.bf16.msra.mxu0 %v3228
      %3288 = vmatmul.bf16.gmra.mxu0 %v3233
      %v3289 = vpop.f32.mrf.mxu0
      %v3290 = vadd.f32 0.0, %v3289
      %v3291 = vpop.f32.mrf.mxu0
      %v3292 = vadd.f32 0.0, %v3291
      %3293 = vmatmul.bf16.gmra.mxu0 %v3236
      %v3294 = vpop.f32.mrf.mxu0
      %v3295 = vadd.f32 0.0, %v3294
      %v3296 = vpop.f32.mrf.mxu0
      %v3297 = vadd.f32 0.0, %v3296
      %3298 = vmatmul.bf16.gmra.mxu0 %v3239
      %v3299 = vpop.f32.mrf.mxu0
      %v3300 = vadd.f32 0.0, %v3299
      %v3301 = vpop.f32.mrf.mxu0
      %v3302 = vadd.f32 0.0, %v3301
      %3303 = vmatmul.bf16.gmra.mxu0 %v3242
      %v3304 = vpop.f32.mrf.mxu0
      %v3305 = vadd.f32 0.0, %v3304
      %v3306 = vpop.f32.mrf.mxu0
      %v3307 = vadd.f32 0.0, %v3306
      %3308 = vmatmul.bf16.gmra.mxu0 %v3245
      %v3309 = vpop.f32.mrf.mxu0
      %v3310 = vadd.f32 0.0, %v3309
      %v3311 = vpop.f32.mrf.mxu0
      %v3312 = vadd.f32 0.0, %v3311
      %3313 = vmatmul.bf16.gmra.mxu0 %v3248
      %v3314 = vpop.f32.mrf.mxu0
      %v3315 = vadd.f32 0.0, %v3314
      %v3316 = vpop.f32.mrf.mxu0
      %v3317 = vadd.f32 0.0, %v3316
      %3318 = vmatmul.bf16.gmra.mxu0 %v3251
      %v3319 = vpop.f32.mrf.mxu0
      %v3320 = vadd.f32 0.0, %v3319
      %v3321 = vpop.f32.mrf.mxu0
      %v3322 = vadd.f32 0.0, %v3321
      %3323 = vmatmul.bf16.gmra.mxu0 %v3254
      %v3324 = vpop.f32.mrf.mxu0
      %v3325 = vadd.f32 0.0, %v3324
      %v3326 = vpop.f32.mrf.mxu0
      %v3327 = vadd.f32 0.0, %v3326
      %3328 = vmatmul.bf16.gmra.mxu0 %v3257
      %v3329 = vpop.f32.mrf.mxu0
      %v3330 = vadd.f32 0.0, %v3329
      %v3331 = vpop.f32.mrf.mxu0
      %v3332 = vadd.f32 0.0, %v3331
      %3333 = vmatmul.bf16.gmra.mxu0 %v3260
      %v3334 = vpop.f32.mrf.mxu0
      %v3335 = vadd.f32 0.0, %v3334
      %v3336 = vpop.f32.mrf.mxu0
      %v3337 = vadd.f32 0.0, %v3336
      %3338 = vmatmul.bf16.gmra.mxu0 %v3263
      %v3339 = vpop.f32.mrf.mxu0
      %v3340 = vadd.f32 0.0, %v3339
      %v3341 = vpop.f32.mrf.mxu0
      %v3342 = vadd.f32 0.0, %v3341
      %3343 = vmatmul.bf16.gmra.mxu0 %v3266
      %v3344 = vpop.f32.mrf.mxu0
      %v3345 = vadd.f32 0.0, %v3344
      %v3346 = vpop.f32.mrf.mxu0
      %v3347 = vadd.f32 0.0, %v3346
      %3348 = vmatmul.bf16.gmra.mxu0 %v3269
      %v3349 = vpop.f32.mrf.mxu0
      %v3350 = vadd.f32 0.0, %v3349
      %v3351 = vpop.f32.mrf.mxu0
      %v3352 = vadd.f32 0.0, %v3351
      %3353 = vmatmul.bf16.gmra.mxu0 %v3272
      %v3354 = vpop.f32.mrf.mxu0
      %v3355 = vadd.f32 0.0, %v3354
      %v3356 = vpop.f32.mrf.mxu0
      %v3357 = vadd.f32 0.0, %v3356
      %3358 = vmatmul.bf16.gmra.mxu0 %v3275
      %v3359 = vpop.f32.mrf.mxu0
      %v3360 = vadd.f32 0.0, %v3359
      %v3361 = vpop.f32.mrf.mxu0
      %v3362 = vadd.f32 0.0, %v3361
      %3363 = vmatmul.bf16.gmra.mxu0 %v3278
      %v3364 = vpop.f32.mrf.mxu0
      %v3365 = vadd.f32 0.0, %v3364
      %v3366 = vpop.f32.mrf.mxu0
      %v3367 = vadd.f32 0.0, %v3366
      %3368 = vdwg.mxu0
      %v3369 = vadd.f32 %v3101, %v3290
      %v3370 = vadd.f32 %v3102, %v3292
      %v3371 = vadd.f32 %v3103, %v3295
      %v3372 = vadd.f32 %v3104, %v3297
      %v3373 = vadd.f32 %v3105, %v3300
      %v3374 = vadd.f32 %v3106, %v3302
      %v3375 = vadd.f32 %v3107, %v3305
      %v3376 = vadd.f32 %v3108, %v3307
      %v3377 = vadd.f32 %v3109, %v3310
      %v3378 = vadd.f32 %v3110, %v3312
      %v3379 = vadd.f32 %v3111, %v3315
      %v3380 = vadd.f32 %v3112, %v3317
      %v3381 = vadd.f32 %v3113, %v3320
      %v3382 = vadd.f32 %v3114, %v3322
      %v3383 = vadd.f32 %v3115, %v3325
      %v3384 = vadd.f32 %v3116, %v3327
      %v3385 = vadd.f32 %v3117, %v3330
      %v3386 = vadd.f32 %v3118, %v3332
      %v3387 = vadd.f32 %v3119, %v3335
      %v3388 = vadd.f32 %v3120, %v3337
      %v3389 = vadd.f32 %v3121, %v3340
      %v3390 = vadd.f32 %v3122, %v3342
      %v3391 = vadd.f32 %v3123, %v3345
      %v3392 = vadd.f32 %v3124, %v3347
      %v3393 = vadd.f32 %v3125, %v3350
      %v3394 = vadd.f32 %v3126, %v3352
      %v3395 = vadd.f32 %v3127, %v3355
      %v3396 = vadd.f32 %v3128, %v3357
      %v3397 = vadd.f32 %v3129, %v3360
      %v3398 = vadd.f32 %v3130, %v3362
      %v3399 = vadd.f32 %v3131, %v3365
      %v3400 = vadd.f32 %v3132, %v3367
      %s3401 = scalar_lea.vmem %s3, 112
      %v3402 = vld [vmem:[%s3401] sm:$0xf]
      %v3403 = vld [vmem:[%s3401 + $0x4] sm:$0xf]
      %v3404 = vld [vmem:[%s3401 + $0x8] sm:$0xf]
      %v3405 = vld [vmem:[%s3401 + $0xc] sm:$0xf]
      %v3406 = vpack.c.b16 %v1632, %v1631
      %v3407 = vpack.c.b16 %v1634, %v1633
      %v3408 = vpack.c.b16 %v1636, %v1635
      %v3409 = vpack.c.b16 %v1638, %v1637
      %v3410 = vpack.c.b16 %v1640, %v1639
      %v3411 = vpack.c.b16 %v1642, %v1641
      %v3412 = vpack.c.b16 %v1644, %v1643
      %v3413 = vpack.c.b16 %v1646, %v1645
      %v3414 = vpack.c.b16 %v1648, %v1647
      %v3415 = vpack.c.b16 %v1650, %v1649
      %v3416 = vpack.c.b16 %v1652, %v1651
      %v3417 = vpack.c.b16 %v1654, %v1653
      %v3418 = vpack.c.b16 %v1656, %v1655
      %v3419 = vpack.c.b16 %v1658, %v1657
      %v3420 = vpack.c.b16 %v1660, %v1659
      %v3421 = vpack.c.b16 %v3140, %v1661
      %v3426 = vunpack.c.l.b16 %v3402
      %v3427 = vunpack.c.l.b16 %v3403
      %v3428 = vunpack.c.l.b16 %v3404
      %v3429 = vunpack.c.l.b16 %v3405
      %v3430 = vpack.c.b16 %v3427, %v3426
      %v3431 = vpack.c.b16 %v3429, %v3428
      %v3435 = vsel %vm1726, %v3406, 0
      %v3438 = vsel %vm1726, %v3407, 0
      %v3441 = vsel %vm1726, %v3408, 0
      %v3444 = vsel %vm1726, %v3409, 0
      %v3447 = vsel %vm1726, %v3410, 0
      %v3450 = vsel %vm1726, %v3411, 0
      %v3453 = vsel %vm1726, %v3412, 0
      %v3456 = vsel %vm1726, %v3413, 0
      %v3459 = vsel %vm1726, %v3414, 0
      %v3462 = vsel %vm1726, %v3415, 0
      %v3465 = vsel %vm1726, %v3416, 0
      %v3468 = vsel %vm1726, %v3417, 0
      %v3471 = vsel %vm1726, %v3418, 0
      %v3474 = vsel %vm1726, %v3419, 0
      %v3477 = vsel %vm1726, %v3420, 0
      %v3480 = vsel %vm1726, %v3421, 0
      %3482 = vmatpush.bf16.msra.mxu0 0
      %3483 = vmatpush.bf16.msra.mxu0 0
      %3484 = vmatpush.bf16.msra.mxu0 0
      %3485 = vmatpush.bf16.msra.mxu0 0
      %3486 = vmatpush.bf16.msra.mxu0 0
      %3487 = vmatpush.bf16.msra.mxu0 0
      %3488 = vmatpush.bf16.msra.mxu0 %v3431
      %3489 = vmatpush.bf16.msra.mxu0 %v3430
      %3490 = vmatmul.bf16.gmra.mxu0 %v3435
      %v3491 = vpop.f32.mrf.mxu0
      %v3492 = vadd.f32 0.0, %v3491
      %v3493 = vpop.f32.mrf.mxu0
      %v3494 = vadd.f32 0.0, %v3493
      %3495 = vmatmul.bf16.gmra.mxu0 %v3438
      %v3496 = vpop.f32.mrf.mxu0
      %v3497 = vadd.f32 0.0, %v3496
      %v3498 = vpop.f32.mrf.mxu0
      %v3499 = vadd.f32 0.0, %v3498
      %3500 = vmatmul.bf16.gmra.mxu0 %v3441
      %v3501 = vpop.f32.mrf.mxu0
      %v3502 = vadd.f32 0.0, %v3501
      %v3503 = vpop.f32.mrf.mxu0
      %v3504 = vadd.f32 0.0, %v3503
      %3505 = vmatmul.bf16.gmra.mxu0 %v3444
      %v3506 = vpop.f32.mrf.mxu0
      %v3507 = vadd.f32 0.0, %v3506
      %v3508 = vpop.f32.mrf.mxu0
      %v3509 = vadd.f32 0.0, %v3508
      %3510 = vmatmul.bf16.gmra.mxu0 %v3447
      %v3511 = vpop.f32.mrf.mxu0
      %v3512 = vadd.f32 0.0, %v3511
      %v3513 = vpop.f32.mrf.mxu0
      %v3514 = vadd.f32 0.0, %v3513
      %3515 = vmatmul.bf16.gmra.mxu0 %v3450
      %v3516 = vpop.f32.mrf.mxu0
      %v3517 = vadd.f32 0.0, %v3516
      %v3518 = vpop.f32.mrf.mxu0
      %v3519 = vadd.f32 0.0, %v3518
      %3520 = vmatmul.bf16.gmra.mxu0 %v3453
      %v3521 = vpop.f32.mrf.mxu0
      %v3522 = vadd.f32 0.0, %v3521
      %v3523 = vpop.f32.mrf.mxu0
      %v3524 = vadd.f32 0.0, %v3523
      %3525 = vmatmul.bf16.gmra.mxu0 %v3456
      %v3526 = vpop.f32.mrf.mxu0
      %v3527 = vadd.f32 0.0, %v3526
      %v3528 = vpop.f32.mrf.mxu0
      %v3529 = vadd.f32 0.0, %v3528
      %3530 = vmatmul.bf16.gmra.mxu0 %v3459
      %v3531 = vpop.f32.mrf.mxu0
      %v3532 = vadd.f32 0.0, %v3531
      %v3533 = vpop.f32.mrf.mxu0
      %v3534 = vadd.f32 0.0, %v3533
      %3535 = vmatmul.bf16.gmra.mxu0 %v3462
      %v3536 = vpop.f32.mrf.mxu0
      %v3537 = vadd.f32 0.0, %v3536
      %v3538 = vpop.f32.mrf.mxu0
      %v3539 = vadd.f32 0.0, %v3538
      %3540 = vmatmul.bf16.gmra.mxu0 %v3465
      %v3541 = vpop.f32.mrf.mxu0
      %v3542 = vadd.f32 0.0, %v3541
      %v3543 = vpop.f32.mrf.mxu0
      %v3544 = vadd.f32 0.0, %v3543
      %3545 = vmatmul.bf16.gmra.mxu0 %v3468
      %v3546 = vpop.f32.mrf.mxu0
      %v3547 = vadd.f32 0.0, %v3546
      %v3548 = vpop.f32.mrf.mxu0
      %v3549 = vadd.f32 0.0, %v3548
      %3550 = vmatmul.bf16.gmra.mxu0 %v3471
      %v3551 = vpop.f32.mrf.mxu0
      %v3552 = vadd.f32 0.0, %v3551
      %v3553 = vpop.f32.mrf.mxu0
      %v3554 = vadd.f32 0.0, %v3553
      %3555 = vmatmul.bf16.gmra.mxu0 %v3474
      %v3556 = vpop.f32.mrf.mxu0
      %v3557 = vadd.f32 0.0, %v3556
      %v3558 = vpop.f32.mrf.mxu0
      %v3559 = vadd.f32 0.0, %v3558
      %3560 = vmatmul.bf16.gmra.mxu0 %v3477
      %v3561 = vpop.f32.mrf.mxu0
      %v3562 = vadd.f32 0.0, %v3561
      %v3563 = vpop.f32.mrf.mxu0
      %v3564 = vadd.f32 0.0, %v3563
      %3565 = vmatmul.bf16.gmra.mxu0 %v3480
      %v3566 = vpop.f32.mrf.mxu0
      %v3567 = vadd.f32 0.0, %v3566
      %v3568 = vpop.f32.mrf.mxu0
      %v3569 = vadd.f32 0.0, %v3568
      %3570 = vdwg.mxu0
      %v3571 = vadd.f32 %v3369, %v3492
      %v3572 = vadd.f32 %v3370, %v3494
      %v3573 = vadd.f32 %v3371, %v3497
      %v3574 = vadd.f32 %v3372, %v3499
      %v3575 = vadd.f32 %v3373, %v3502
      %v3576 = vadd.f32 %v3374, %v3504
      %v3577 = vadd.f32 %v3375, %v3507
      %v3578 = vadd.f32 %v3376, %v3509
      %v3579 = vadd.f32 %v3377, %v3512
      %v3580 = vadd.f32 %v3378, %v3514
      %v3581 = vadd.f32 %v3379, %v3517
      %v3582 = vadd.f32 %v3380, %v3519
      %v3583 = vadd.f32 %v3381, %v3522
      %v3584 = vadd.f32 %v3382, %v3524
      %v3585 = vadd.f32 %v3383, %v3527
      %v3586 = vadd.f32 %v3384, %v3529
      %v3587 = vadd.f32 %v3385, %v3532
      %v3588 = vadd.f32 %v3386, %v3534
      %v3589 = vadd.f32 %v3387, %v3537
      %v3590 = vadd.f32 %v3388, %v3539
      %v3591 = vadd.f32 %v3389, %v3542
      %v3592 = vadd.f32 %v3390, %v3544
      %v3593 = vadd.f32 %v3391, %v3547
      %v3594 = vadd.f32 %v3392, %v3549
      %v3595 = vadd.f32 %v3393, %v3552
      %v3596 = vadd.f32 %v3394, %v3554
      %v3597 = vadd.f32 %v3395, %v3557
      %v3598 = vadd.f32 %v3396, %v3559
      %v3599 = vadd.f32 %v3397, %v3562
      %v3600 = vadd.f32 %v3398, %v3564
      %v3601 = vadd.f32 %v3399, %v3567
      %v3602 = vadd.f32 %v3400, %v3569
      %v3603 = vld [vmem:[#allocation2 + $0x4] sm:$0xf]
      %v3604 = vld [vmem:[#allocation2 + $0x8] sm:$0xf]
      %v3605 = vld [vmem:[#allocation2 + $0xc] sm:$0xf]
      %v3606 = vld [vmem:[#allocation2 + $0x10] sm:$0xf]
      %v3607 = vld [vmem:[#allocation2 + $0x14] sm:$0xf]
      %v3608 = vld [vmem:[#allocation2 + $0x18] sm:$0xf]
      %v3609 = vld [vmem:[#allocation2 + $0x1c] sm:$0xf]
      %v3610 = vld [vmem:[#allocation2 + $0x20] sm:$0xf]
      %v3611 = vld [vmem:[#allocation2 + $0x24] sm:$0xf]
      %v3612 = vld [vmem:[#allocation2 + $0x28] sm:$0xf]
      %v3613 = vld [vmem:[#allocation2 + $0x2c] sm:$0xf]
      %v3614 = vld [vmem:[#allocation2 + $0x30] sm:$0xf]
      %v3615 = vld [vmem:[#allocation2 + $0x34] sm:$0xf]
      %v3616 = vld [vmem:[#allocation2 + $0x38] sm:$0xf]
      %v3617 = vld [vmem:[#allocation2 + $0x3c] sm:$0xf]
      %v3618 = vld [vmem:[#allocation2 + $0x40] sm:$0xf]
      %v3619 = vld [vmem:[#allocation2 + $0x44] sm:$0xf]
      %v3620 = vld [vmem:[#allocation2 + $0x48] sm:$0xf]
      %v3621 = vld [vmem:[#allocation2 + $0x4c] sm:$0xf]
      %v3622 = vld [vmem:[#allocation2 + $0x50] sm:$0xf]
      %v3623 = vld [vmem:[#allocation2 + $0x54] sm:$0xf]
      %v3624 = vld [vmem:[#allocation2 + $0x58] sm:$0xf]
      %v3625 = vld [vmem:[#allocation2 + $0x5c] sm:$0xf]
      %v3626 = vld [vmem:[#allocation2 + $0x60] sm:$0xf]
      %v3627 = vld [vmem:[#allocation2 + $0x64] sm:$0xf]
      %v3628 = vld [vmem:[#allocation2 + $0x68] sm:$0xf]
      %v3629 = vld [vmem:[#allocation2 + $0x6c] sm:$0xf]
      %v3630 = vld [vmem:[#allocation2 + $0x70] sm:$0xf]
      %v3631 = vld [vmem:[#allocation2 + $0x74] sm:$0xf]
      %v3632 = vld [vmem:[#allocation2 + $0x78] sm:$0xf]
      %v3633 = vld [vmem:[#allocation2 + $0x7c] sm:$0xf]
      %v3634 = vld [vmem:[#allocation2 + $0x80] sm:$0xf]
      %v3635 = vld [vmem:[#allocation2 + $0x84] sm:$0x1]
      %s3636 = scalar_lea.vmem %s3, 128
      %v3637 = vld [vmem:[%s3636] sm:$0xf]
      %v3638 = vld [vmem:[%s3636 + $0x4] sm:$0xf]
      %v3639 = vld [vmem:[%s3636 + $0x8] sm:$0xf]
      %v3640 = vld [vmem:[%s3636 + $0xc] sm:$0xf]
      %v3674 = vunpack.c.l.b16 %v3603
      %v3675 = vunpack.c.l.b16 %v3604
      %v3676 = vunpack.c.l.b16 %v3605
      %v3677 = vunpack.c.l.b16 %v3606
      %v3678 = vunpack.c.l.b16 %v3607
      %v3679 = vunpack.c.l.b16 %v3608
      %v3680 = vunpack.c.l.b16 %v3609
      %v3681 = vunpack.c.l.b16 %v3610
      %v3682 = vunpack.c.l.b16 %v3611
      %v3683 = vunpack.c.l.b16 %v3612
      %v3684 = vunpack.c.l.b16 %v3613
      %v3685 = vunpack.c.l.b16 %v3614
      %v3686 = vunpack.c.l.b16 %v3615
      %v3687 = vunpack.c.l.b16 %v3616
      %v3688 = vunpack.c.l.b16 %v3617
      %v3689 = vunpack.c.l.b16 %v3618
      %v3690 = vunpack.c.l.b16 %v3619
      %v3691 = vunpack.c.l.b16 %v3620
      %v3692 = vunpack.c.l.b16 %v3621
      %v3693 = vunpack.c.l.b16 %v3622
      %v3694 = vunpack.c.l.b16 %v3623
      %v3695 = vunpack.c.l.b16 %v3624
      %v3696 = vunpack.c.l.b16 %v3625
      %v3697 = vunpack.c.l.b16 %v3626
      %v3698 = vunpack.c.l.b16 %v3627
      %v3699 = vunpack.c.l.b16 %v3628
      %v3700 = vunpack.c.l.b16 %v3629
      %v3701 = vunpack.c.l.b16 %v3630
      %v3702 = vunpack.c.l.b16 %v3631
      %v3703 = vunpack.c.l.b16 %v3632
      %v3704 = vunpack.c.l.b16 %v3633
      %v3705 = vunpack.c.l.b16 %v3634
      %v3706 = vunpack.c.l.b16 %v3635
      %v3707 = vpack.c.b16 %v3675, %v3674
      %v3708 = vpack.c.b16 %v3677, %v3676
      %v3709 = vpack.c.b16 %v3679, %v3678
      %v3710 = vpack.c.b16 %v3681, %v3680
      %v3711 = vpack.c.b16 %v3683, %v3682
      %v3712 = vpack.c.b16 %v3685, %v3684
      %v3713 = vpack.c.b16 %v3687, %v3686
      %v3714 = vpack.c.b16 %v3689, %v3688
      %v3715 = vpack.c.b16 %v3691, %v3690
      %v3716 = vpack.c.b16 %v3693, %v3692
      %v3717 = vpack.c.b16 %v3695, %v3694
      %v3718 = vpack.c.b16 %v3697, %v3696
      %v3719 = vpack.c.b16 %v3699, %v3698
      %v3720 = vpack.c.b16 %v3701, %v3700
      %v3721 = vpack.c.b16 %v3703, %v3702
      %v3722 = vpack.c.b16 %v3705, %v3704
      %v3723 = vpack.c.b16 %v3706, %v3706
      %v3725 = vshrl.u32 %v3707, 16
      %v3727 = vshll.u32 %v3707, 16
      %v3729 = vrot.slane %v3727, 1
      %v3730 = vor.u32 %v3725, %v3729
      %v3732 = vshll.u32 %v3708, 16
      %v3734 = vrot.slane %v3732, 1
      %v3735 = vsel %vm1867, %v3730, %v3734
      %v3736 = vshrl.u32 %v3708, 16
      %v3738 = vor.u32 %v3736, %v3734
      %v3740 = vshll.u32 %v3709, 16
      %v3742 = vrot.slane %v3740, 1
      %v3743 = vsel %vm1867, %v3738, %v3742
      %v3744 = vshrl.u32 %v3709, 16
      %v3746 = vor.u32 %v3744, %v3742
      %v3748 = vshll.u32 %v3710, 16
      %v3750 = vrot.slane %v3748, 1
      %v3751 = vsel %vm1867, %v3746, %v3750
      %v3752 = vshrl.u32 %v3710, 16
      %v3754 = vor.u32 %v3752, %v3750
      %v3756 = vshll.u32 %v3711, 16
      %v3758 = vrot.slane %v3756, 1
      %v3759 = vsel %vm1867, %v3754, %v3758
      %v3760 = vshrl.u32 %v3711, 16
      %v3762 = vor.u32 %v3760, %v3758
      %v3764 = vshll.u32 %v3712, 16
      %v3766 = vrot.slane %v3764, 1
      %v3767 = vsel %vm1867, %v3762, %v3766
      %v3768 = vshrl.u32 %v3712, 16
      %v3770 = vor.u32 %v3768, %v3766
      %v3772 = vshll.u32 %v3713, 16
      %v3774 = vrot.slane %v3772, 1
      %v3775 = vsel %vm1867, %v3770, %v3774
      %v3776 = vshrl.u32 %v3713, 16
      %v3778 = vor.u32 %v3776, %v3774
      %v3780 = vshll.u32 %v3714, 16
      %v3782 = vrot.slane %v3780, 1
      %v3783 = vsel %vm1867, %v3778, %v3782
      %v3784 = vshrl.u32 %v3714, 16
      %v3786 = vor.u32 %v3784, %v3782
      %v3788 = vshll.u32 %v3715, 16
      %v3790 = vrot.slane %v3788, 1
      %v3791 = vsel %vm1867, %v3786, %v3790
      %v3792 = vshrl.u32 %v3715, 16
      %v3794 = vor.u32 %v3792, %v3790
      %v3796 = vshll.u32 %v3716, 16
      %v3798 = vrot.slane %v3796, 1
      %v3799 = vsel %vm1867, %v3794, %v3798
      %v3800 = vshrl.u32 %v3716, 16
      %v3802 = vor.u32 %v3800, %v3798
      %v3804 = vshll.u32 %v3717, 16
      %v3806 = vrot.slane %v3804, 1
      %v3807 = vsel %vm1867, %v3802, %v3806
      %v3808 = vshrl.u32 %v3717, 16
      %v3810 = vor.u32 %v3808, %v3806
      %v3812 = vshll.u32 %v3718, 16
      %v3814 = vrot.slane %v3812, 1
      %v3815 = vsel %vm1867, %v3810, %v3814
      %v3816 = vshrl.u32 %v3718, 16
      %v3818 = vor.u32 %v3816, %v3814
      %v3820 = vshll.u32 %v3719, 16
      %v3822 = vrot.slane %v3820, 1
      %v3823 = vsel %vm1867, %v3818, %v3822
      %v3824 = vshrl.u32 %v3719, 16
      %v3826 = vor.u32 %v3824, %v3822
      %v3828 = vshll.u32 %v3720, 16
      %v3830 = vrot.slane %v3828, 1
      %v3831 = vsel %vm1867, %v3826, %v3830
      %v3832 = vshrl.u32 %v3720, 16
      %v3834 = vor.u32 %v3832, %v3830
      %v3836 = vshll.u32 %v3721, 16
      %v3838 = vrot.slane %v3836, 1
      %v3839 = vsel %vm1867, %v3834, %v3838
      %v3840 = vshrl.u32 %v3721, 16
      %v3842 = vor.u32 %v3840, %v3838
      %v3844 = vshll.u32 %v3722, 16
      %v3846 = vrot.slane %v3844, 1
      %v3847 = vsel %vm1867, %v3842, %v3846
      %v3848 = vshrl.u32 %v3722, 16
      %v3850 = vor.u32 %v3848, %v3846
      %v3852 = vshll.u32 %v3723, 16
      %v3854 = vrot.slane %v3852, 1
      %v3855 = vsel %vm1867, %v3850, %v3854
      %v3860 = vunpack.c.l.b16 %v3637
      %v3861 = vunpack.c.l.b16 %v3638
      %v3862 = vunpack.c.l.b16 %v3639
      %v3863 = vunpack.c.l.b16 %v3640
      %v3864 = vpack.c.b16 %v3861, %v3860
      %v3865 = vpack.c.b16 %v3863, %v3862
      %v3869 = vsel %vm1726, %v3735, 0
      %v3872 = vsel %vm1726, %v3743, 0
      %v3875 = vsel %vm1726, %v3751, 0
      %v3878 = vsel %vm1726, %v3759, 0
      %v3881 = vsel %vm1726, %v3767, 0
      %v3884 = vsel %vm1726, %v3775, 0
      %v3887 = vsel %vm1726, %v3783, 0
      %v3890 = vsel %vm1726, %v3791, 0
      %v3893 = vsel %vm1726, %v3799, 0
      %v3896 = vsel %vm1726, %v3807, 0
      %v3899 = vsel %vm1726, %v3815, 0
      %v3902 = vsel %vm1726, %v3823, 0
      %v3905 = vsel %vm1726, %v3831, 0
      %v3908 = vsel %vm1726, %v3839, 0
      %v3911 = vsel %vm1726, %v3847, 0
      %v3914 = vsel %vm1726, %v3855, 0
      %3916 = vmatpush.bf16.msra.mxu0 0
      %3917 = vmatpush.bf16.msra.mxu0 0
      %3918 = vmatpush.bf16.msra.mxu0 0
      %3919 = vmatpush.bf16.msra.mxu0 0
      %3920 = vmatpush.bf16.msra.mxu0 0
      %3921 = vmatpush.bf16.msra.mxu0 0
      %3922 = vmatpush.bf16.msra.mxu0 %v3865
      %3923 = vmatpush.bf16.msra.mxu0 %v3864
      %3924 = vmatmul.bf16.gmra.mxu0 %v3869
      %v3925 = vpop.f32.mrf.mxu0
      %v3926 = vadd.f32 0.0, %v3925
      %v3927 = vpop.f32.mrf.mxu0
      %v3928 = vadd.f32 0.0, %v3927
      %3929 = vmatmul.bf16.gmra.mxu0 %v3872
      %v3930 = vpop.f32.mrf.mxu0
      %v3931 = vadd.f32 0.0, %v3930
      %v3932 = vpop.f32.mrf.mxu0
      %v3933 = vadd.f32 0.0, %v3932
      %3934 = vmatmul.bf16.gmra.mxu0 %v3875
      %v3935 = vpop.f32.mrf.mxu0
      %v3936 = vadd.f32 0.0, %v3935
      %v3937 = vpop.f32.mrf.mxu0
      %v3938 = vadd.f32 0.0, %v3937
      %3939 = vmatmul.bf16.gmra.mxu0 %v3878
      %v3940 = vpop.f32.mrf.mxu0
      %v3941 = vadd.f32 0.0, %v3940
      %v3942 = vpop.f32.mrf.mxu0
      %v3943 = vadd.f32 0.0, %v3942
      %3944 = vmatmul.bf16.gmra.mxu0 %v3881
      %v3945 = vpop.f32.mrf.mxu0
      %v3946 = vadd.f32 0.0, %v3945
      %v3947 = vpop.f32.mrf.mxu0
      %v3948 = vadd.f32 0.0, %v3947
      %3949 = vmatmul.bf16.gmra.mxu0 %v3884
      %v3950 = vpop.f32.mrf.mxu0
      %v3951 = vadd.f32 0.0, %v3950
      %v3952 = vpop.f32.mrf.mxu0
      %v3953 = vadd.f32 0.0, %v3952
      %3954 = vmatmul.bf16.gmra.mxu0 %v3887
      %v3955 = vpop.f32.mrf.mxu0
      %v3956 = vadd.f32 0.0, %v3955
      %v3957 = vpop.f32.mrf.mxu0
      %v3958 = vadd.f32 0.0, %v3957
      %3959 = vmatmul.bf16.gmra.mxu0 %v3890
      %v3960 = vpop.f32.mrf.mxu0
      %v3961 = vadd.f32 0.0, %v3960
      %v3962 = vpop.f32.mrf.mxu0
      %v3963 = vadd.f32 0.0, %v3962
      %3964 = vmatmul.bf16.gmra.mxu0 %v3893
      %v3965 = vpop.f32.mrf.mxu0
      %v3966 = vadd.f32 0.0, %v3965
      %v3967 = vpop.f32.mrf.mxu0
      %v3968 = vadd.f32 0.0, %v3967
      %3969 = vmatmul.bf16.gmra.mxu0 %v3896
      %v3970 = vpop.f32.mrf.mxu0
      %v3971 = vadd.f32 0.0, %v3970
      %v3972 = vpop.f32.mrf.mxu0
      %v3973 = vadd.f32 0.0, %v3972
      %3974 = vmatmul.bf16.gmra.mxu0 %v3899
      %v3975 = vpop.f32.mrf.mxu0
      %v3976 = vadd.f32 0.0, %v3975
      %v3977 = vpop.f32.mrf.mxu0
      %v3978 = vadd.f32 0.0, %v3977
      %3979 = vmatmul.bf16.gmra.mxu0 %v3902
      %v3980 = vpop.f32.mrf.mxu0
      %v3981 = vadd.f32 0.0, %v3980
      %v3982 = vpop.f32.mrf.mxu0
      %v3983 = vadd.f32 0.0, %v3982
      %3984 = vmatmul.bf16.gmra.mxu0 %v3905
      %v3985 = vpop.f32.mrf.mxu0
      %v3986 = vadd.f32 0.0, %v3985
      %v3987 = vpop.f32.mrf.mxu0
      %v3988 = vadd.f32 0.0, %v3987
      %3989 = vmatmul.bf16.gmra.mxu0 %v3908
      %v3990 = vpop.f32.mrf.mxu0
      %v3991 = vadd.f32 0.0, %v3990
      %v3992 = vpop.f32.mrf.mxu0
      %v3993 = vadd.f32 0.0, %v3992
      %3994 = vmatmul.bf16.gmra.mxu0 %v3911
      %v3995 = vpop.f32.mrf.mxu0
      %v3996 = vadd.f32 0.0, %v3995
      %v3997 = vpop.f32.mrf.mxu0
      %v3998 = vadd.f32 0.0, %v3997
      %3999 = vmatmul.bf16.gmra.mxu0 %v3914
      %v4000 = vpop.f32.mrf.mxu0
      %v4001 = vadd.f32 0.0, %v4000
      %v4002 = vpop.f32.mrf.mxu0
      %v4003 = vadd.f32 0.0, %v4002
      %4004 = vdwg.mxu0
      %v4005 = vadd.f32 %v3571, %v3926
      %v4006 = vadd.f32 %v3572, %v3928
      %v4007 = vadd.f32 %v3573, %v3931
      %v4008 = vadd.f32 %v3574, %v3933
      %v4009 = vadd.f32 %v3575, %v3936
      %v4010 = vadd.f32 %v3576, %v3938
      %v4011 = vadd.f32 %v3577, %v3941
      %v4012 = vadd.f32 %v3578, %v3943
      %v4013 = vadd.f32 %v3579, %v3946
      %v4014 = vadd.f32 %v3580, %v3948
      %v4015 = vadd.f32 %v3581, %v3951
      %v4016 = vadd.f32 %v3582, %v3953
      %v4017 = vadd.f32 %v3583, %v3956
      %v4018 = vadd.f32 %v3584, %v3958
      %v4019 = vadd.f32 %v3585, %v3961
      %v4020 = vadd.f32 %v3586, %v3963
      %v4021 = vadd.f32 %v3587, %v3966
      %v4022 = vadd.f32 %v3588, %v3968
      %v4023 = vadd.f32 %v3589, %v3971
      %v4024 = vadd.f32 %v3590, %v3973
      %v4025 = vadd.f32 %v3591, %v3976
      %v4026 = vadd.f32 %v3592, %v3978
      %v4027 = vadd.f32 %v3593, %v3981
      %v4028 = vadd.f32 %v3594, %v3983
      %v4029 = vadd.f32 %v3595, %v3986
      %v4030 = vadd.f32 %v3596, %v3988
      %v4031 = vadd.f32 %v3597, %v3991
      %v4032 = vadd.f32 %v3598, %v3993
      %v4033 = vadd.f32 %v3599, %v3996
      %v4034 = vadd.f32 %v3600, %v3998
      %v4035 = vadd.f32 %v3601, %v4001
      %v4036 = vadd.f32 %v3602, %v4003
      %v4037 = vld [vmem:[#allocation2 + $0x4] sm:$0xe]
      %s4038 = scalar_lea.vmem %s3, 144
      %v4039 = vld [vmem:[%s4038] sm:$0xf]
      %v4040 = vld [vmem:[%s4038 + $0x4] sm:$0xf]
      %v4041 = vld [vmem:[%s4038 + $0x8] sm:$0xf]
      %v4042 = vld [vmem:[%s4038 + $0xc] sm:$0xf]
      %v4044 = vunpack.c.l.b16 %v4037
      %v4045 = vpack.c.b16 %v3675, %v4044
      %v4046 = vrot.slane %v4045, 1
      %v4047 = vrot.slane %v3708, 1
      %v4048 = vsel %vm1680, %v4046, %v4047
      %v4049 = vrot.slane %v3709, 1
      %v4050 = vsel %vm1680, %v4047, %v4049
      %v4051 = vrot.slane %v3710, 1
      %v4052 = vsel %vm1680, %v4049, %v4051
      %v4053 = vrot.slane %v3711, 1
      %v4054 = vsel %vm1680, %v4051, %v4053
      %v4055 = vrot.slane %v3712, 1
      %v4056 = vsel %vm1680, %v4053, %v4055
      %v4057 = vrot.slane %v3713, 1
      %v4058 = vsel %vm1680, %v4055, %v4057
      %v4059 = vrot.slane %v3714, 1
      %v4060 = vsel %vm1680, %v4057, %v4059
      %v4061 = vrot.slane %v3715, 1
      %v4062 = vsel %vm1680, %v4059, %v4061
      %v4063 = vrot.slane %v3716, 1
      %v4064 = vsel %vm1680, %v4061, %v4063
      %v4065 = vrot.slane %v3717, 1
      %v4066 = vsel %vm1680, %v4063, %v4065
      %v4067 = vrot.slane %v3718, 1
      %v4068 = vsel %vm1680, %v4065, %v4067
      %v4069 = vrot.slane %v3719, 1
      %v4070 = vsel %vm1680, %v4067, %v4069
      %v4071 = vrot.slane %v3720, 1
      %v4072 = vsel %vm1680, %v4069, %v4071
      %v4073 = vrot.slane %v3721, 1
      %v4074 = vsel %vm1680, %v4071, %v4073
      %v4075 = vrot.slane %v3722, 1
      %v4076 = vsel %vm1680, %v4073, %v4075
      %v4077 = vrot.slane %v3723, 1
      %v4078 = vsel %vm1680, %v4075, %v4077
      %v4083 = vunpack.c.l.b16 %v4039
      %v4084 = vunpack.c.l.b16 %v4040
      %v4085 = vunpack.c.l.b16 %v4041
      %v4086 = vunpack.c.l.b16 %v4042
      %v4087 = vpack.c.b16 %v4084, %v4083
      %v4088 = vpack.c.b16 %v4086, %v4085
      %v4092 = vsel %vm1726, %v4048, 0
      %v4095 = vsel %vm1726, %v4050, 0
      %v4098 = vsel %vm1726, %v4052, 0
      %v4101 = vsel %vm1726, %v4054, 0
      %v4104 = vsel %vm1726, %v4056, 0
      %v4107 = vsel %vm1726, %v4058, 0
      %v4110 = vsel %vm1726, %v4060, 0
      %v4113 = vsel %vm1726, %v4062, 0
      %v4116 = vsel %vm1726, %v4064, 0
      %v4119 = vsel %vm1726, %v4066, 0
      %v4122 = vsel %vm1726, %v4068, 0
      %v4125 = vsel %vm1726, %v4070, 0
      %v4128 = vsel %vm1726, %v4072, 0
      %v4131 = vsel %vm1726, %v4074, 0
      %v4134 = vsel %vm1726, %v4076, 0
      %v4137 = vsel %vm1726, %v4078, 0
      %4139 = vmatpush.bf16.msra.mxu0 0
      %4140 = vmatpush.bf16.msra.mxu0 0
      %4141 = vmatpush.bf16.msra.mxu0 0
      %4142 = vmatpush.bf16.msra.mxu0 0
      %4143 = vmatpush.bf16.msra.mxu0 0
      %4144 = vmatpush.bf16.msra.mxu0 0
      %4145 = vmatpush.bf16.msra.mxu0 %v4088
      %4146 = vmatpush.bf16.msra.mxu0 %v4087
      %4147 = vmatmul.bf16.gmra.mxu0 %v4092
      %v4148 = vpop.f32.mrf.mxu0
      %v4149 = vadd.f32 0.0, %v4148
      %v4150 = vpop.f32.mrf.mxu0
      %v4151 = vadd.f32 0.0, %v4150
      %4152 = vmatmul.bf16.gmra.mxu0 %v4095
      %v4153 = vpop.f32.mrf.mxu0
      %v4154 = vadd.f32 0.0, %v4153
      %v4155 = vpop.f32.mrf.mxu0
      %v4156 = vadd.f32 0.0, %v4155
      %4157 = vmatmul.bf16.gmra.mxu0 %v4098
      %v4158 = vpop.f32.mrf.mxu0
      %v4159 = vadd.f32 0.0, %v4158
      %v4160 = vpop.f32.mrf.mxu0
      %v4161 = vadd.f32 0.0, %v4160
      %4162 = vmatmul.bf16.gmra.mxu0 %v4101
      %v4163 = vpop.f32.mrf.mxu0
      %v4164 = vadd.f32 0.0, %v4163
      %v4165 = vpop.f32.mrf.mxu0
      %v4166 = vadd.f32 0.0, %v4165
      %4167 = vmatmul.bf16.gmra.mxu0 %v4104
      %v4168 = vpop.f32.mrf.mxu0
      %v4169 = vadd.f32 0.0, %v4168
      %v4170 = vpop.f32.mrf.mxu0
      %v4171 = vadd.f32 0.0, %v4170
      %4172 = vmatmul.bf16.gmra.mxu0 %v4107
      %v4173 = vpop.f32.mrf.mxu0
      %v4174 = vadd.f32 0.0, %v4173
      %v4175 = vpop.f32.mrf.mxu0
      %v4176 = vadd.f32 0.0, %v4175
      %4177 = vmatmul.bf16.gmra.mxu0 %v4110
      %v4178 = vpop.f32.mrf.mxu0
      %v4179 = vadd.f32 0.0, %v4178
      %v4180 = vpop.f32.mrf.mxu0
      %v4181 = vadd.f32 0.0, %v4180
      %4182 = vmatmul.bf16.gmra.mxu0 %v4113
      %v4183 = vpop.f32.mrf.mxu0
      %v4184 = vadd.f32 0.0, %v4183
      %v4185 = vpop.f32.mrf.mxu0
      %v4186 = vadd.f32 0.0, %v4185
      %4187 = vmatmul.bf16.gmra.mxu0 %v4116
      %v4188 = vpop.f32.mrf.mxu0
      %v4189 = vadd.f32 0.0, %v4188
      %v4190 = vpop.f32.mrf.mxu0
      %v4191 = vadd.f32 0.0, %v4190
      %4192 = vmatmul.bf16.gmra.mxu0 %v4119
      %v4193 = vpop.f32.mrf.mxu0
      %v4194 = vadd.f32 0.0, %v4193
      %v4195 = vpop.f32.mrf.mxu0
      %v4196 = vadd.f32 0.0, %v4195
      %4197 = vmatmul.bf16.gmra.mxu0 %v4122
      %v4198 = vpop.f32.mrf.mxu0
      %v4199 = vadd.f32 0.0, %v4198
      %v4200 = vpop.f32.mrf.mxu0
      %v4201 = vadd.f32 0.0, %v4200
      %4202 = vmatmul.bf16.gmra.mxu0 %v4125
      %v4203 = vpop.f32.mrf.mxu0
      %v4204 = vadd.f32 0.0, %v4203
      %v4205 = vpop.f32.mrf.mxu0
      %v4206 = vadd.f32 0.0, %v4205
      %4207 = vmatmul.bf16.gmra.mxu0 %v4128
      %v4208 = vpop.f32.mrf.mxu0
      %v4209 = vadd.f32 0.0, %v4208
      %v4210 = vpop.f32.mrf.mxu0
      %v4211 = vadd.f32 0.0, %v4210
      %4212 = vmatmul.bf16.gmra.mxu0 %v4131
      %v4213 = vpop.f32.mrf.mxu0
      %v4214 = vadd.f32 0.0, %v4213
      %v4215 = vpop.f32.mrf.mxu0
      %v4216 = vadd.f32 0.0, %v4215
      %4217 = vmatmul.bf16.gmra.mxu0 %v4134
      %v4218 = vpop.f32.mrf.mxu0
      %v4219 = vadd.f32 0.0, %v4218
      %v4220 = vpop.f32.mrf.mxu0
      %v4221 = vadd.f32 0.0, %v4220
      %4222 = vmatmul.bf16.gmra.mxu0 %v4137
      %v4223 = vpop.f32.mrf.mxu0
      %v4224 = vadd.f32 0.0, %v4223
      %v4225 = vpop.f32.mrf.mxu0
      %v4226 = vadd.f32 0.0, %v4225
      %4227 = vdwg.mxu0
      %v4228 = vadd.f32 %v4005, %v4149
      %v4229 = vadd.f32 %v4006, %v4151
      %v4230 = vadd.f32 %v4007, %v4154
      %v4231 = vadd.f32 %v4008, %v4156
      %v4232 = vadd.f32 %v4009, %v4159
      %v4233 = vadd.f32 %v4010, %v4161
      %v4234 = vadd.f32 %v4011, %v4164
      %v4235 = vadd.f32 %v4012, %v4166
      %v4236 = vadd.f32 %v4013, %v4169
      %v4237 = vadd.f32 %v4014, %v4171
      %v4238 = vadd.f32 %v4015, %v4174
      %v4239 = vadd.f32 %v4016, %v4176
      %v4240 = vadd.f32 %v4017, %v4179
      %v4241 = vadd.f32 %v4018, %v4181
      %v4242 = vadd.f32 %v4019, %v4184
      %v4243 = vadd.f32 %v4020, %v4186
      %v4244 = vadd.f32 %v4021, %v4189
      %v4245 = vadd.f32 %v4022, %v4191
      %v4246 = vadd.f32 %v4023, %v4194
      %v4247 = vadd.f32 %v4024, %v4196
      %v4248 = vadd.f32 %v4025, %v4199
      %v4249 = vadd.f32 %v4026, %v4201
      %v4250 = vadd.f32 %v4027, %v4204
      %v4251 = vadd.f32 %v4028, %v4206
      %v4252 = vadd.f32 %v4029, %v4209
      %v4253 = vadd.f32 %v4030, %v4211
      %v4254 = vadd.f32 %v4031, %v4214
      %v4255 = vadd.f32 %v4032, %v4216
      %v4256 = vadd.f32 %v4033, %v4219
      %v4257 = vadd.f32 %v4034, %v4221
      %v4258 = vadd.f32 %v4035, %v4224
      %v4259 = vadd.f32 %v4036, %v4226
      %v4260 = vld [vmem:[#allocation2 + $0x84] sm:$0x3]
      %s4261 = scalar_lea.vmem %s3, 160
      %v4262 = vld [vmem:[%s4261] sm:$0xf]
      %v4263 = vld [vmem:[%s4261 + $0x4] sm:$0xf]
      %v4264 = vld [vmem:[%s4261 + $0x8] sm:$0xf]
      %v4265 = vld [vmem:[%s4261 + $0xc] sm:$0xf]
      %v4267 = vunpack.c.l.b16 %v4260
      %v4268 = vpack.c.b16 %v4267, %v4267
      %v4270 = vshrl.u32 %v4045, 16
      %v4272 = vrot.slane %v4270, 1
      %v4273 = vshll.u32 %v4045, 16
      %v4275 = vrot.slane %v4273, 2
      %v4276 = vor.u32 %v4272, %v4275
      %v4277 = vrot.slane %v3736, 1
      %v4278 = vrot.slane %v3732, 2
      %v4279 = vor.u32 %v4277, %v4278
      %v4280 = vsel %vm2158, %v4276, %v4279
      %v4281 = vrot.slane %v3744, 1
      %v4282 = vrot.slane %v3740, 2
      %v4283 = vor.u32 %v4281, %v4282
      %v4284 = vsel %vm2158, %v4279, %v4283
      %v4285 = vrot.slane %v3752, 1
      %v4286 = vrot.slane %v3748, 2
      %v4287 = vor.u32 %v4285, %v4286
      %v4288 = vsel %vm2158, %v4283, %v4287
      %v4289 = vrot.slane %v3760, 1
      %v4290 = vrot.slane %v3756, 2
      %v4291 = vor.u32 %v4289, %v4290
      %v4292 = vsel %vm2158, %v4287, %v4291
      %v4293 = vrot.slane %v3768, 1
      %v4294 = vrot.slane %v3764, 2
      %v4295 = vor.u32 %v4293, %v4294
      %v4296 = vsel %vm2158, %v4291, %v4295
      %v4297 = vrot.slane %v3776, 1
      %v4298 = vrot.slane %v3772, 2
      %v4299 = vor.u32 %v4297, %v4298
      %v4300 = vsel %vm2158, %v4295, %v4299
      %v4301 = vrot.slane %v3784, 1
      %v4302 = vrot.slane %v3780, 2
      %v4303 = vor.u32 %v4301, %v4302
      %v4304 = vsel %vm2158, %v4299, %v4303
      %v4305 = vrot.slane %v3792, 1
      %v4306 = vrot.slane %v3788, 2
      %v4307 = vor.u32 %v4305, %v4306
      %v4308 = vsel %vm2158, %v4303, %v4307
      %v4309 = vrot.slane %v3800, 1
      %v4310 = vrot.slane %v3796, 2
      %v4311 = vor.u32 %v4309, %v4310
      %v4312 = vsel %vm2158, %v4307, %v4311
      %v4313 = vrot.slane %v3808, 1
      %v4314 = vrot.slane %v3804, 2
      %v4315 = vor.u32 %v4313, %v4314
      %v4316 = vsel %vm2158, %v4311, %v4315
      %v4317 = vrot.slane %v3816, 1
      %v4318 = vrot.slane %v3812, 2
      %v4319 = vor.u32 %v4317, %v4318
      %v4320 = vsel %vm2158, %v4315, %v4319
      %v4321 = vrot.slane %v3824, 1
      %v4322 = vrot.slane %v3820, 2
      %v4323 = vor.u32 %v4321, %v4322
      %v4324 = vsel %vm2158, %v4319, %v4323
      %v4325 = vrot.slane %v3832, 1
      %v4326 = vrot.slane %v3828, 2
      %v4327 = vor.u32 %v4325, %v4326
      %v4328 = vsel %vm2158, %v4323, %v4327
      %v4329 = vrot.slane %v3840, 1
      %v4330 = vrot.slane %v3836, 2
      %v4331 = vor.u32 %v4329, %v4330
      %v4332 = vsel %vm2158, %v4327, %v4331
      %v4333 = vrot.slane %v3848, 1
      %v4334 = vrot.slane %v3844, 2
      %v4335 = vor.u32 %v4333, %v4334
      %v4336 = vsel %vm2158, %v4331, %v4335
      %v4338 = vshrl.u32 %v4268, 16
      %v4340 = vrot.slane %v4338, 1
      %v4341 = vshll.u32 %v4268, 16
      %v4343 = vrot.slane %v4341, 2
      %v4344 = vor.u32 %v4340, %v4343
      %v4345 = vsel %vm2158, %v4335, %v4344
      %v4350 = vunpack.c.l.b16 %v4262
      %v4351 = vunpack.c.l.b16 %v4263
      %v4352 = vunpack.c.l.b16 %v4264
      %v4353 = vunpack.c.l.b16 %v4265
      %v4354 = vpack.c.b16 %v4351, %v4350
      %v4355 = vpack.c.b16 %v4353, %v4352
      %v4359 = vsel %vm1726, %v4280, 0
      %v4362 = vsel %vm1726, %v4284, 0
      %v4365 = vsel %vm1726, %v4288, 0
      %v4368 = vsel %vm1726, %v4292, 0
      %v4371 = vsel %vm1726, %v4296, 0
      %v4374 = vsel %vm1726, %v4300, 0
      %v4377 = vsel %vm1726, %v4304, 0
      %v4380 = vsel %vm1726, %v4308, 0
      %v4383 = vsel %vm1726, %v4312, 0
      %v4386 = vsel %vm1726, %v4316, 0
      %v4389 = vsel %vm1726, %v4320, 0
      %v4392 = vsel %vm1726, %v4324, 0
      %v4395 = vsel %vm1726, %v4328, 0
      %v4398 = vsel %vm1726, %v4332, 0
      %v4401 = vsel %vm1726, %v4336, 0
      %v4404 = vsel %vm1726, %v4345, 0
      %4406 = vmatpush.bf16.msra.mxu0 0
      %4407 = vmatpush.bf16.msra.mxu0 0
      %4408 = vmatpush.bf16.msra.mxu0 0
      %4409 = vmatpush.bf16.msra.mxu0 0
      %4410 = vmatpush.bf16.msra.mxu0 0
      %4411 = vmatpush.bf16.msra.mxu0 0
      %4412 = vmatpush.bf16.msra.mxu0 %v4355
      %4413 = vmatpush.bf16.msra.mxu0 %v4354
      %4414 = vmatmul.bf16.gmra.mxu0 %v4359
      %v4415 = vpop.f32.mrf.mxu0
      %v4416 = vadd.f32 0.0, %v4415
      %v4417 = vpop.f32.mrf.mxu0
      %v4418 = vadd.f32 0.0, %v4417
      %4419 = vmatmul.bf16.gmra.mxu0 %v4362
      %v4420 = vpop.f32.mrf.mxu0
      %v4421 = vadd.f32 0.0, %v4420
      %v4422 = vpop.f32.mrf.mxu0
      %v4423 = vadd.f32 0.0, %v4422
      %4424 = vmatmul.bf16.gmra.mxu0 %v4365
      %v4425 = vpop.f32.mrf.mxu0
      %v4426 = vadd.f32 0.0, %v4425
      %v4427 = vpop.f32.mrf.mxu0
      %v4428 = vadd.f32 0.0, %v4427
      %4429 = vmatmul.bf16.gmra.mxu0 %v4368
      %v4430 = vpop.f32.mrf.mxu0
      %v4431 = vadd.f32 0.0, %v4430
      %v4432 = vpop.f32.mrf.mxu0
      %v4433 = vadd.f32 0.0, %v4432
      %4434 = vmatmul.bf16.gmra.mxu0 %v4371
      %v4435 = vpop.f32.mrf.mxu0
      %v4436 = vadd.f32 0.0, %v4435
      %v4437 = vpop.f32.mrf.mxu0
      %v4438 = vadd.f32 0.0, %v4437
      %4439 = vmatmul.bf16.gmra.mxu0 %v4374
      %v4440 = vpop.f32.mrf.mxu0
      %v4441 = vadd.f32 0.0, %v4440
      %v4442 = vpop.f32.mrf.mxu0
      %v4443 = vadd.f32 0.0, %v4442
      %4444 = vmatmul.bf16.gmra.mxu0 %v4377
      %v4445 = vpop.f32.mrf.mxu0
      %v4446 = vadd.f32 0.0, %v4445
      %v4447 = vpop.f32.mrf.mxu0
      %v4448 = vadd.f32 0.0, %v4447
      %4449 = vmatmul.bf16.gmra.mxu0 %v4380
      %v4450 = vpop.f32.mrf.mxu0
      %v4451 = vadd.f32 0.0, %v4450
      %v4452 = vpop.f32.mrf.mxu0
      %v4453 = vadd.f32 0.0, %v4452
      %4454 = vmatmul.bf16.gmra.mxu0 %v4383
      %v4455 = vpop.f32.mrf.mxu0
      %v4456 = vadd.f32 0.0, %v4455
      %v4457 = vpop.f32.mrf.mxu0
      %v4458 = vadd.f32 0.0, %v4457
      %4459 = vmatmul.bf16.gmra.mxu0 %v4386
      %v4460 = vpop.f32.mrf.mxu0
      %v4461 = vadd.f32 0.0, %v4460
      %v4462 = vpop.f32.mrf.mxu0
      %v4463 = vadd.f32 0.0, %v4462
      %4464 = vmatmul.bf16.gmra.mxu0 %v4389
      %v4465 = vpop.f32.mrf.mxu0
      %v4466 = vadd.f32 0.0, %v4465
      %v4467 = vpop.f32.mrf.mxu0
      %v4468 = vadd.f32 0.0, %v4467
      %4469 = vmatmul.bf16.gmra.mxu0 %v4392
      %v4470 = vpop.f32.mrf.mxu0
      %v4471 = vadd.f32 0.0, %v4470
      %v4472 = vpop.f32.mrf.mxu0
      %v4473 = vadd.f32 0.0, %v4472
      %4474 = vmatmul.bf16.gmra.mxu0 %v4395
      %v4475 = vpop.f32.mrf.mxu0
      %v4476 = vadd.f32 0.0, %v4475
      %v4477 = vpop.f32.mrf.mxu0
      %v4478 = vadd.f32 0.0, %v4477
      %4479 = vmatmul.bf16.gmra.mxu0 %v4398
      %v4480 = vpop.f32.mrf.mxu0
      %v4481 = vadd.f32 0.0, %v4480
      %v4482 = vpop.f32.mrf.mxu0
      %v4483 = vadd.f32 0.0, %v4482
      %4484 = vmatmul.bf16.gmra.mxu0 %v4401
      %v4485 = vpop.f32.mrf.mxu0
      %v4486 = vadd.f32 0.0, %v4485
      %v4487 = vpop.f32.mrf.mxu0
      %v4488 = vadd.f32 0.0, %v4487
      %4489 = vmatmul.bf16.gmra.mxu0 %v4404
      %v4490 = vpop.f32.mrf.mxu0
      %v4491 = vadd.f32 0.0, %v4490
      %v4492 = vpop.f32.mrf.mxu0
      %v4493 = vadd.f32 0.0, %v4492
      %4494 = vdwg.mxu0
      %v4495 = vadd.f32 %v4228, %v4416
      %v4496 = vadd.f32 %v4229, %v4418
      %v4497 = vadd.f32 %v4230, %v4421
      %v4498 = vadd.f32 %v4231, %v4423
      %v4499 = vadd.f32 %v4232, %v4426
      %v4500 = vadd.f32 %v4233, %v4428
      %v4501 = vadd.f32 %v4234, %v4431
      %v4502 = vadd.f32 %v4235, %v4433
      %v4503 = vadd.f32 %v4236, %v4436
      %v4504 = vadd.f32 %v4237, %v4438
      %v4505 = vadd.f32 %v4238, %v4441
      %v4506 = vadd.f32 %v4239, %v4443
      %v4507 = vadd.f32 %v4240, %v4446
      %v4508 = vadd.f32 %v4241, %v4448
      %v4509 = vadd.f32 %v4242, %v4451
      %v4510 = vadd.f32 %v4243, %v4453
      %v4511 = vadd.f32 %v4244, %v4456
      %v4512 = vadd.f32 %v4245, %v4458
      %v4513 = vadd.f32 %v4246, %v4461
      %v4514 = vadd.f32 %v4247, %v4463
      %v4515 = vadd.f32 %v4248, %v4466
      %v4516 = vadd.f32 %v4249, %v4468
      %v4517 = vadd.f32 %v4250, %v4471
      %v4518 = vadd.f32 %v4251, %v4473
      %v4519 = vadd.f32 %v4252, %v4476
      %v4520 = vadd.f32 %v4253, %v4478
      %v4521 = vadd.f32 %v4254, %v4481
      %v4522 = vadd.f32 %v4255, %v4483
      %v4523 = vadd.f32 %v4256, %v4486
      %v4524 = vadd.f32 %v4257, %v4488
      %v4525 = vadd.f32 %v4258, %v4491
      %v4526 = vadd.f32 %v4259, %v4493
      %v4527 = vld [vmem:[#allocation2 + $0x4] sm:$0xc]
      %s4528 = scalar_lea.vmem %s3, 176
      %v4529 = vld [vmem:[%s4528] sm:$0xf]
      %v4530 = vld [vmem:[%s4528 + $0x4] sm:$0xf]
      %v4531 = vld [vmem:[%s4528 + $0x8] sm:$0xf]
      %v4532 = vld [vmem:[%s4528 + $0xc] sm:$0xf]
      %v4534 = vunpack.c.l.b16 %v4527
      %v4535 = vpack.c.b16 %v3675, %v4534
      %v4536 = vrot.slane %v4535, 2
      %v4537 = vrot.slane %v3708, 2
      %v4538 = vsel %vm2426, %v4536, %v4537
      %v4539 = vrot.slane %v3709, 2
      %v4540 = vsel %vm2426, %v4537, %v4539
      %v4541 = vrot.slane %v3710, 2
      %v4542 = vsel %vm2426, %v4539, %v4541
      %v4543 = vrot.slane %v3711, 2
      %v4544 = vsel %vm2426, %v4541, %v4543
      %v4545 = vrot.slane %v3712, 2
      %v4546 = vsel %vm2426, %v4543, %v4545
      %v4547 = vrot.slane %v3713, 2
      %v4548 = vsel %vm2426, %v4545, %v4547
      %v4549 = vrot.slane %v3714, 2
      %v4550 = vsel %vm2426, %v4547, %v4549
      %v4551 = vrot.slane %v3715, 2
      %v4552 = vsel %vm2426, %v4549, %v4551
      %v4553 = vrot.slane %v3716, 2
      %v4554 = vsel %vm2426, %v4551, %v4553
      %v4555 = vrot.slane %v3717, 2
      %v4556 = vsel %vm2426, %v4553, %v4555
      %v4557 = vrot.slane %v3718, 2
      %v4558 = vsel %vm2426, %v4555, %v4557
      %v4559 = vrot.slane %v3719, 2
      %v4560 = vsel %vm2426, %v4557, %v4559
      %v4561 = vrot.slane %v3720, 2
      %v4562 = vsel %vm2426, %v4559, %v4561
      %v4563 = vrot.slane %v3721, 2
      %v4564 = vsel %vm2426, %v4561, %v4563
      %v4565 = vrot.slane %v3722, 2
      %v4566 = vsel %vm2426, %v4563, %v4565
      %v4567 = vrot.slane %v4268, 2
      %v4568 = vsel %vm2426, %v4565, %v4567
      %v4573 = vunpack.c.l.b16 %v4529
      %v4574 = vunpack.c.l.b16 %v4530
      %v4575 = vunpack.c.l.b16 %v4531
      %v4576 = vunpack.c.l.b16 %v4532
      %v4577 = vpack.c.b16 %v4574, %v4573
      %v4578 = vpack.c.b16 %v4576, %v4575
      %v4582 = vsel %vm1726, %v4538, 0
      %v4585 = vsel %vm1726, %v4540, 0
      %v4588 = vsel %vm1726, %v4542, 0
      %v4591 = vsel %vm1726, %v4544, 0
      %v4594 = vsel %vm1726, %v4546, 0
      %v4597 = vsel %vm1726, %v4548, 0
      %v4600 = vsel %vm1726, %v4550, 0
      %v4603 = vsel %vm1726, %v4552, 0
      %v4606 = vsel %vm1726, %v4554, 0
      %v4609 = vsel %vm1726, %v4556, 0
      %v4612 = vsel %vm1726, %v4558, 0
      %v4615 = vsel %vm1726, %v4560, 0
      %v4618 = vsel %vm1726, %v4562, 0
      %v4621 = vsel %vm1726, %v4564, 0
      %v4624 = vsel %vm1726, %v4566, 0
      %v4627 = vsel %vm1726, %v4568, 0
      %4629 = vmatpush.bf16.msra.mxu0 0
      %4630 = vmatpush.bf16.msra.mxu0 0
      %4631 = vmatpush.bf16.msra.mxu0 0
      %4632 = vmatpush.bf16.msra.mxu0 0
      %4633 = vmatpush.bf16.msra.mxu0 0
      %4634 = vmatpush.bf16.msra.mxu0 0
      %4635 = vmatpush.bf16.msra.mxu0 %v4578
      %4636 = vmatpush.bf16.msra.mxu0 %v4577
      %4637 = vmatmul.bf16.gmra.mxu0 %v4582
      %v4638 = vpop.f32.mrf.mxu0
      %v4639 = vadd.f32 0.0, %v4638
      %v4640 = vpop.f32.mrf.mxu0
      %v4641 = vadd.f32 0.0, %v4640
      %4642 = vmatmul.bf16.gmra.mxu0 %v4585
      %v4643 = vpop.f32.mrf.mxu0
      %v4644 = vadd.f32 0.0, %v4643
      %v4645 = vpop.f32.mrf.mxu0
      %v4646 = vadd.f32 0.0, %v4645
      %4647 = vmatmul.bf16.gmra.mxu0 %v4588
      %v4648 = vpop.f32.mrf.mxu0
      %v4649 = vadd.f32 0.0, %v4648
      %v4650 = vpop.f32.mrf.mxu0
      %v4651 = vadd.f32 0.0, %v4650
      %4652 = vmatmul.bf16.gmra.mxu0 %v4591
      %v4653 = vpop.f32.mrf.mxu0
      %v4654 = vadd.f32 0.0, %v4653
      %v4655 = vpop.f32.mrf.mxu0
      %v4656 = vadd.f32 0.0, %v4655
      %4657 = vmatmul.bf16.gmra.mxu0 %v4594
      %v4658 = vpop.f32.mrf.mxu0
      %v4659 = vadd.f32 0.0, %v4658
      %v4660 = vpop.f32.mrf.mxu0
      %v4661 = vadd.f32 0.0, %v4660
      %4662 = vmatmul.bf16.gmra.mxu0 %v4597
      %v4663 = vpop.f32.mrf.mxu0
      %v4664 = vadd.f32 0.0, %v4663
      %v4665 = vpop.f32.mrf.mxu0
      %v4666 = vadd.f32 0.0, %v4665
      %4667 = vmatmul.bf16.gmra.mxu0 %v4600
      %v4668 = vpop.f32.mrf.mxu0
      %v4669 = vadd.f32 0.0, %v4668
      %v4670 = vpop.f32.mrf.mxu0
      %v4671 = vadd.f32 0.0, %v4670
      %4672 = vmatmul.bf16.gmra.mxu0 %v4603
      %v4673 = vpop.f32.mrf.mxu0
      %v4674 = vadd.f32 0.0, %v4673
      %v4675 = vpop.f32.mrf.mxu0
      %v4676 = vadd.f32 0.0, %v4675
      %4677 = vmatmul.bf16.gmra.mxu0 %v4606
      %v4678 = vpop.f32.mrf.mxu0
      %v4679 = vadd.f32 0.0, %v4678
      %v4680 = vpop.f32.mrf.mxu0
      %v4681 = vadd.f32 0.0, %v4680
      %4682 = vmatmul.bf16.gmra.mxu0 %v4609
      %v4683 = vpop.f32.mrf.mxu0
      %v4684 = vadd.f32 0.0, %v4683
      %v4685 = vpop.f32.mrf.mxu0
      %v4686 = vadd.f32 0.0, %v4685
      %4687 = vmatmul.bf16.gmra.mxu0 %v4612
      %v4688 = vpop.f32.mrf.mxu0
      %v4689 = vadd.f32 0.0, %v4688
      %v4690 = vpop.f32.mrf.mxu0
      %v4691 = vadd.f32 0.0, %v4690
      %4692 = vmatmul.bf16.gmra.mxu0 %v4615
      %v4693 = vpop.f32.mrf.mxu0
      %v4694 = vadd.f32 0.0, %v4693
      %v4695 = vpop.f32.mrf.mxu0
      %v4696 = vadd.f32 0.0, %v4695
      %4697 = vmatmul.bf16.gmra.mxu0 %v4618
      %v4698 = vpop.f32.mrf.mxu0
      %v4699 = vadd.f32 0.0, %v4698
      %v4700 = vpop.f32.mrf.mxu0
      %v4701 = vadd.f32 0.0, %v4700
      %4702 = vmatmul.bf16.gmra.mxu0 %v4621
      %v4703 = vpop.f32.mrf.mxu0
      %v4704 = vadd.f32 0.0, %v4703
      %v4705 = vpop.f32.mrf.mxu0
      %v4706 = vadd.f32 0.0, %v4705
      %4707 = vmatmul.bf16.gmra.mxu0 %v4624
      %v4708 = vpop.f32.mrf.mxu0
      %v4709 = vadd.f32 0.0, %v4708
      %v4710 = vpop.f32.mrf.mxu0
      %v4711 = vadd.f32 0.0, %v4710
      %4712 = vmatmul.bf16.gmra.mxu0 %v4627
      %v4713 = vpop.f32.mrf.mxu0
      %v4714 = vadd.f32 0.0, %v4713
      %v4715 = vpop.f32.mrf.mxu0
      %v4716 = vadd.f32 0.0, %v4715
      %4717 = vdwg.mxu0
      %v4718 = vadd.f32 %v4495, %v4639
      %v4719 = vadd.f32 %v4496, %v4641
      %v4720 = vadd.f32 %v4497, %v4644
      %v4721 = vadd.f32 %v4498, %v4646
      %v4722 = vadd.f32 %v4499, %v4649
      %v4723 = vadd.f32 %v4500, %v4651
      %v4724 = vadd.f32 %v4501, %v4654
      %v4725 = vadd.f32 %v4502, %v4656
      %v4726 = vadd.f32 %v4503, %v4659
      %v4727 = vadd.f32 %v4504, %v4661
      %v4728 = vadd.f32 %v4505, %v4664
      %v4729 = vadd.f32 %v4506, %v4666
      %v4730 = vadd.f32 %v4507, %v4669
      %v4731 = vadd.f32 %v4508, %v4671
      %v4732 = vadd.f32 %v4509, %v4674
      %v4733 = vadd.f32 %v4510, %v4676
      %v4734 = vadd.f32 %v4511, %v4679
      %v4735 = vadd.f32 %v4512, %v4681
      %v4736 = vadd.f32 %v4513, %v4684
      %v4737 = vadd.f32 %v4514, %v4686
      %v4738 = vadd.f32 %v4515, %v4689
      %v4739 = vadd.f32 %v4516, %v4691
      %v4740 = vadd.f32 %v4517, %v4694
      %v4741 = vadd.f32 %v4518, %v4696
      %v4742 = vadd.f32 %v4519, %v4699
      %v4743 = vadd.f32 %v4520, %v4701
      %v4744 = vadd.f32 %v4521, %v4704
      %v4745 = vadd.f32 %v4522, %v4706
      %v4746 = vadd.f32 %v4523, %v4709
      %v4747 = vadd.f32 %v4524, %v4711
      %v4748 = vadd.f32 %v4525, %v4714
      %v4749 = vadd.f32 %v4526, %v4716
      %v4750 = vld [vmem:[#allocation2 + $0x84] sm:$0x7]
      %s4751 = scalar_lea.vmem %s3, 192
      %v4752 = vld [vmem:[%s4751] sm:$0xf]
      %v4753 = vld [vmem:[%s4751 + $0x4] sm:$0xf]
      %v4754 = vld [vmem:[%s4751 + $0x8] sm:$0xf]
      %v4755 = vld [vmem:[%s4751 + $0xc] sm:$0xf]
      %v4757 = vunpack.c.l.b16 %v4750
      %v4758 = vpack.c.b16 %v4757, %v4757
      %v4760 = vshrl.u32 %v4535, 16
      %v4762 = vrot.slane %v4760, 2
      %v4763 = vshll.u32 %v4535, 16
      %v4765 = vrot.slane %v4763, 3
      %v4766 = vor.u32 %v4762, %v4765
      %v4767 = vrot.slane %v3736, 2
      %v4768 = vrot.slane %v3732, 3
      %v4769 = vor.u32 %v4767, %v4768
      %v4770 = vsel %vm2650, %v4766, %v4769
      %v4771 = vrot.slane %v3744, 2
      %v4772 = vrot.slane %v3740, 3
      %v4773 = vor.u32 %v4771, %v4772
      %v4774 = vsel %vm2650, %v4769, %v4773
      %v4775 = vrot.slane %v3752, 2
      %v4776 = vrot.slane %v3748, 3
      %v4777 = vor.u32 %v4775, %v4776
      %v4778 = vsel %vm2650, %v4773, %v4777
      %v4779 = vrot.slane %v3760, 2
      %v4780 = vrot.slane %v3756, 3
      %v4781 = vor.u32 %v4779, %v4780
      %v4782 = vsel %vm2650, %v4777, %v4781
      %v4783 = vrot.slane %v3768, 2
      %v4784 = vrot.slane %v3764, 3
      %v4785 = vor.u32 %v4783, %v4784
      %v4786 = vsel %vm2650, %v4781, %v4785
      %v4787 = vrot.slane %v3776, 2
      %v4788 = vrot.slane %v3772, 3
      %v4789 = vor.u32 %v4787, %v4788
      %v4790 = vsel %vm2650, %v4785, %v4789
      %v4791 = vrot.slane %v3784, 2
      %v4792 = vrot.slane %v3780, 3
      %v4793 = vor.u32 %v4791, %v4792
      %v4794 = vsel %vm2650, %v4789, %v4793
      %v4795 = vrot.slane %v3792, 2
      %v4796 = vrot.slane %v3788, 3
      %v4797 = vor.u32 %v4795, %v4796
      %v4798 = vsel %vm2650, %v4793, %v4797
      %v4799 = vrot.slane %v3800, 2
      %v4800 = vrot.slane %v3796, 3
      %v4801 = vor.u32 %v4799, %v4800
      %v4802 = vsel %vm2650, %v4797, %v4801
      %v4803 = vrot.slane %v3808, 2
      %v4804 = vrot.slane %v3804, 3
      %v4805 = vor.u32 %v4803, %v4804
      %v4806 = vsel %vm2650, %v4801, %v4805
      %v4807 = vrot.slane %v3816, 2
      %v4808 = vrot.slane %v3812, 3
      %v4809 = vor.u32 %v4807, %v4808
      %v4810 = vsel %vm2650, %v4805, %v4809
      %v4811 = vrot.slane %v3824, 2
      %v4812 = vrot.slane %v3820, 3
      %v4813 = vor.u32 %v4811, %v4812
      %v4814 = vsel %vm2650, %v4809, %v4813
      %v4815 = vrot.slane %v3832, 2
      %v4816 = vrot.slane %v3828, 3
      %v4817 = vor.u32 %v4815, %v4816
      %v4818 = vsel %vm2650, %v4813, %v4817
      %v4819 = vrot.slane %v3840, 2
      %v4820 = vrot.slane %v3836, 3
      %v4821 = vor.u32 %v4819, %v4820
      %v4822 = vsel %vm2650, %v4817, %v4821
      %v4823 = vrot.slane %v3848, 2
      %v4824 = vrot.slane %v3844, 3
      %v4825 = vor.u32 %v4823, %v4824
      %v4826 = vsel %vm2650, %v4821, %v4825
      %v4828 = vshrl.u32 %v4758, 16
      %v4830 = vrot.slane %v4828, 2
      %v4831 = vshll.u32 %v4758, 16
      %v4833 = vrot.slane %v4831, 3
      %v4834 = vor.u32 %v4830, %v4833
      %v4835 = vsel %vm2650, %v4825, %v4834
      %v4840 = vunpack.c.l.b16 %v4752
      %v4841 = vunpack.c.l.b16 %v4753
      %v4842 = vunpack.c.l.b16 %v4754
      %v4843 = vunpack.c.l.b16 %v4755
      %v4844 = vpack.c.b16 %v4841, %v4840
      %v4845 = vpack.c.b16 %v4843, %v4842
      %v4849 = vsel %vm1726, %v4770, 0
      %v4852 = vsel %vm1726, %v4774, 0
      %v4855 = vsel %vm1726, %v4778, 0
      %v4858 = vsel %vm1726, %v4782, 0
      %v4861 = vsel %vm1726, %v4786, 0
      %v4864 = vsel %vm1726, %v4790, 0
      %v4867 = vsel %vm1726, %v4794, 0
      %v4870 = vsel %vm1726, %v4798, 0
      %v4873 = vsel %vm1726, %v4802, 0
      %v4876 = vsel %vm1726, %v4806, 0
      %v4879 = vsel %vm1726, %v4810, 0
      %v4882 = vsel %vm1726, %v4814, 0
      %v4885 = vsel %vm1726, %v4818, 0
      %v4888 = vsel %vm1726, %v4822, 0
      %v4891 = vsel %vm1726, %v4826, 0
      %v4894 = vsel %vm1726, %v4835, 0
      %4896 = vmatpush.bf16.msra.mxu0 0
      %4897 = vmatpush.bf16.msra.mxu0 0
      %4898 = vmatpush.bf16.msra.mxu0 0
      %4899 = vmatpush.bf16.msra.mxu0 0
      %4900 = vmatpush.bf16.msra.mxu0 0
      %4901 = vmatpush.bf16.msra.mxu0 0
      %4902 = vmatpush.bf16.msra.mxu0 %v4845
      %4903 = vmatpush.bf16.msra.mxu0 %v4844
      %4904 = vmatmul.bf16.gmra.mxu0 %v4849
      %v4905 = vpop.f32.mrf.mxu0
      %v4906 = vadd.f32 0.0, %v4905
      %v4907 = vpop.f32.mrf.mxu0
      %v4908 = vadd.f32 0.0, %v4907
      %4909 = vmatmul.bf16.gmra.mxu0 %v4852
      %v4910 = vpop.f32.mrf.mxu0
      %v4911 = vadd.f32 0.0, %v4910
      %v4912 = vpop.f32.mrf.mxu0
      %v4913 = vadd.f32 0.0, %v4912
      %4914 = vmatmul.bf16.gmra.mxu0 %v4855
      %v4915 = vpop.f32.mrf.mxu0
      %v4916 = vadd.f32 0.0, %v4915
      %v4917 = vpop.f32.mrf.mxu0
      %v4918 = vadd.f32 0.0, %v4917
      %4919 = vmatmul.bf16.gmra.mxu0 %v4858
      %v4920 = vpop.f32.mrf.mxu0
      %v4921 = vadd.f32 0.0, %v4920
      %v4922 = vpop.f32.mrf.mxu0
      %v4923 = vadd.f32 0.0, %v4922
      %4924 = vmatmul.bf16.gmra.mxu0 %v4861
      %v4925 = vpop.f32.mrf.mxu0
      %v4926 = vadd.f32 0.0, %v4925
      %v4927 = vpop.f32.mrf.mxu0
      %v4928 = vadd.f32 0.0, %v4927
      %4929 = vmatmul.bf16.gmra.mxu0 %v4864
      %v4930 = vpop.f32.mrf.mxu0
      %v4931 = vadd.f32 0.0, %v4930
      %v4932 = vpop.f32.mrf.mxu0
      %v4933 = vadd.f32 0.0, %v4932
      %4934 = vmatmul.bf16.gmra.mxu0 %v4867
      %v4935 = vpop.f32.mrf.mxu0
      %v4936 = vadd.f32 0.0, %v4935
      %v4937 = vpop.f32.mrf.mxu0
      %v4938 = vadd.f32 0.0, %v4937
      %4939 = vmatmul.bf16.gmra.mxu0 %v4870
      %v4940 = vpop.f32.mrf.mxu0
      %v4941 = vadd.f32 0.0, %v4940
      %v4942 = vpop.f32.mrf.mxu0
      %v4943 = vadd.f32 0.0, %v4942
      %4944 = vmatmul.bf16.gmra.mxu0 %v4873
      %v4945 = vpop.f32.mrf.mxu0
      %v4946 = vadd.f32 0.0, %v4945
      %v4947 = vpop.f32.mrf.mxu0
      %v4948 = vadd.f32 0.0, %v4947
      %4949 = vmatmul.bf16.gmra.mxu0 %v4876
      %v4950 = vpop.f32.mrf.mxu0
      %v4951 = vadd.f32 0.0, %v4950
      %v4952 = vpop.f32.mrf.mxu0
      %v4953 = vadd.f32 0.0, %v4952
      %4954 = vmatmul.bf16.gmra.mxu0 %v4879
      %v4955 = vpop.f32.mrf.mxu0
      %v4956 = vadd.f32 0.0, %v4955
      %v4957 = vpop.f32.mrf.mxu0
      %v4958 = vadd.f32 0.0, %v4957
      %4959 = vmatmul.bf16.gmra.mxu0 %v4882
      %v4960 = vpop.f32.mrf.mxu0
      %v4961 = vadd.f32 0.0, %v4960
      %v4962 = vpop.f32.mrf.mxu0
      %v4963 = vadd.f32 0.0, %v4962
      %4964 = vmatmul.bf16.gmra.mxu0 %v4885
      %v4965 = vpop.f32.mrf.mxu0
      %v4966 = vadd.f32 0.0, %v4965
      %v4967 = vpop.f32.mrf.mxu0
      %v4968 = vadd.f32 0.0, %v4967
      %4969 = vmatmul.bf16.gmra.mxu0 %v4888
      %v4970 = vpop.f32.mrf.mxu0
      %v4971 = vadd.f32 0.0, %v4970
      %v4972 = vpop.f32.mrf.mxu0
      %v4973 = vadd.f32 0.0, %v4972
      %4974 = vmatmul.bf16.gmra.mxu0 %v4891
      %v4975 = vpop.f32.mrf.mxu0
      %v4976 = vadd.f32 0.0, %v4975
      %v4977 = vpop.f32.mrf.mxu0
      %v4978 = vadd.f32 0.0, %v4977
      %4979 = vmatmul.bf16.gmra.mxu0 %v4894
      %v4980 = vpop.f32.mrf.mxu0
      %v4981 = vadd.f32 0.0, %v4980
      %v4982 = vpop.f32.mrf.mxu0
      %v4983 = vadd.f32 0.0, %v4982
      %4984 = vdwg.mxu0
      %v4985 = vadd.f32 %v4718, %v4906
      %v4986 = vadd.f32 %v4719, %v4908
      %v4987 = vadd.f32 %v4720, %v4911
      %v4988 = vadd.f32 %v4721, %v4913
      %v4989 = vadd.f32 %v4722, %v4916
      %v4990 = vadd.f32 %v4723, %v4918
      %v4991 = vadd.f32 %v4724, %v4921
      %v4992 = vadd.f32 %v4725, %v4923
      %v4993 = vadd.f32 %v4726, %v4926
      %v4994 = vadd.f32 %v4727, %v4928
      %v4995 = vadd.f32 %v4728, %v4931
      %v4996 = vadd.f32 %v4729, %v4933
      %v4997 = vadd.f32 %v4730, %v4936
      %v4998 = vadd.f32 %v4731, %v4938
      %v4999 = vadd.f32 %v4732, %v4941
      %v5000 = vadd.f32 %v4733, %v4943
      %v5001 = vadd.f32 %v4734, %v4946
      %v5002 = vadd.f32 %v4735, %v4948
      %v5003 = vadd.f32 %v4736, %v4951
      %v5004 = vadd.f32 %v4737, %v4953
      %v5005 = vadd.f32 %v4738, %v4956
      %v5006 = vadd.f32 %v4739, %v4958
      %v5007 = vadd.f32 %v4740, %v4961
      %v5008 = vadd.f32 %v4741, %v4963
      %v5009 = vadd.f32 %v4742, %v4966
      %v5010 = vadd.f32 %v4743, %v4968
      %v5011 = vadd.f32 %v4744, %v4971
      %v5012 = vadd.f32 %v4745, %v4973
      %v5013 = vadd.f32 %v4746, %v4976
      %v5014 = vadd.f32 %v4747, %v4978
      %v5015 = vadd.f32 %v4748, %v4981
      %v5016 = vadd.f32 %v4749, %v4983
      %v5017 = vld [vmem:[#allocation2 + $0x4] sm:$0x8]
      %s5018 = scalar_lea.vmem %s3, 208
      %v5019 = vld [vmem:[%s5018] sm:$0xf]
      %v5020 = vld [vmem:[%s5018 + $0x4] sm:$0xf]
      %v5021 = vld [vmem:[%s5018 + $0x8] sm:$0xf]
      %v5022 = vld [vmem:[%s5018 + $0xc] sm:$0xf]
      %v5024 = vunpack.c.l.b16 %v5017
      %v5025 = vpack.c.b16 %v3675, %v5024
      %v5026 = vrot.slane %v5025, 3
      %v5027 = vrot.slane %v3708, 3
      %v5028 = vsel %vm2918, %v5026, %v5027
      %v5029 = vrot.slane %v3709, 3
      %v5030 = vsel %vm2918, %v5027, %v5029
      %v5031 = vrot.slane %v3710, 3
      %v5032 = vsel %vm2918, %v5029, %v5031
      %v5033 = vrot.slane %v3711, 3
      %v5034 = vsel %vm2918, %v5031, %v5033
      %v5035 = vrot.slane %v3712, 3
      %v5036 = vsel %vm2918, %v5033, %v5035
      %v5037 = vrot.slane %v3713, 3
      %v5038 = vsel %vm2918, %v5035, %v5037
      %v5039 = vrot.slane %v3714, 3
      %v5040 = vsel %vm2918, %v5037, %v5039
      %v5041 = vrot.slane %v3715, 3
      %v5042 = vsel %vm2918, %v5039, %v5041
      %v5043 = vrot.slane %v3716, 3
      %v5044 = vsel %vm2918, %v5041, %v5043
      %v5045 = vrot.slane %v3717, 3
      %v5046 = vsel %vm2918, %v5043, %v5045
      %v5047 = vrot.slane %v3718, 3
      %v5048 = vsel %vm2918, %v5045, %v5047
      %v5049 = vrot.slane %v3719, 3
      %v5050 = vsel %vm2918, %v5047, %v5049
      %v5051 = vrot.slane %v3720, 3
      %v5052 = vsel %vm2918, %v5049, %v5051
      %v5053 = vrot.slane %v3721, 3
      %v5054 = vsel %vm2918, %v5051, %v5053
      %v5055 = vrot.slane %v3722, 3
      %v5056 = vsel %vm2918, %v5053, %v5055
      %v5057 = vrot.slane %v4758, 3
      %v5058 = vsel %vm2918, %v5055, %v5057
      %v5063 = vunpack.c.l.b16 %v5019
      %v5064 = vunpack.c.l.b16 %v5020
      %v5065 = vunpack.c.l.b16 %v5021
      %v5066 = vunpack.c.l.b16 %v5022
      %v5067 = vpack.c.b16 %v5064, %v5063
      %v5068 = vpack.c.b16 %v5066, %v5065
      %v5072 = vsel %vm1726, %v5028, 0
      %v5075 = vsel %vm1726, %v5030, 0
      %v5078 = vsel %vm1726, %v5032, 0
      %v5081 = vsel %vm1726, %v5034, 0
      %v5084 = vsel %vm1726, %v5036, 0
      %v5087 = vsel %vm1726, %v5038, 0
      %v5090 = vsel %vm1726, %v5040, 0
      %v5093 = vsel %vm1726, %v5042, 0
      %v5096 = vsel %vm1726, %v5044, 0
      %v5099 = vsel %vm1726, %v5046, 0
      %v5102 = vsel %vm1726, %v5048, 0
      %v5105 = vsel %vm1726, %v5050, 0
      %v5108 = vsel %vm1726, %v5052, 0
      %v5111 = vsel %vm1726, %v5054, 0
      %v5114 = vsel %vm1726, %v5056, 0
      %v5117 = vsel %vm1726, %v5058, 0
      %5119 = vmatpush.bf16.msra.mxu0 0
      %5120 = vmatpush.bf16.msra.mxu0 0
      %5121 = vmatpush.bf16.msra.mxu0 0
      %5122 = vmatpush.bf16.msra.mxu0 0
      %5123 = vmatpush.bf16.msra.mxu0 0
      %5124 = vmatpush.bf16.msra.mxu0 0
      %5125 = vmatpush.bf16.msra.mxu0 %v5068
      %5126 = vmatpush.bf16.msra.mxu0 %v5067
      %5127 = vmatmul.bf16.gmra.mxu0 %v5072
      %v5128 = vpop.f32.mrf.mxu0
      %v5129 = vadd.f32 0.0, %v5128
      %v5130 = vpop.f32.mrf.mxu0
      %v5131 = vadd.f32 0.0, %v5130
      %5132 = vmatmul.bf16.gmra.mxu0 %v5075
      %v5133 = vpop.f32.mrf.mxu0
      %v5134 = vadd.f32 0.0, %v5133
      %v5135 = vpop.f32.mrf.mxu0
      %v5136 = vadd.f32 0.0, %v5135
      %5137 = vmatmul.bf16.gmra.mxu0 %v5078
      %v5138 = vpop.f32.mrf.mxu0
      %v5139 = vadd.f32 0.0, %v5138
      %v5140 = vpop.f32.mrf.mxu0
      %v5141 = vadd.f32 0.0, %v5140
      %5142 = vmatmul.bf16.gmra.mxu0 %v5081
      %v5143 = vpop.f32.mrf.mxu0
      %v5144 = vadd.f32 0.0, %v5143
      %v5145 = vpop.f32.mrf.mxu0
      %v5146 = vadd.f32 0.0, %v5145
      %5147 = vmatmul.bf16.gmra.mxu0 %v5084
      %v5148 = vpop.f32.mrf.mxu0
      %v5149 = vadd.f32 0.0, %v5148
      %v5150 = vpop.f32.mrf.mxu0
      %v5151 = vadd.f32 0.0, %v5150
      %5152 = vmatmul.bf16.gmra.mxu0 %v5087
      %v5153 = vpop.f32.mrf.mxu0
      %v5154 = vadd.f32 0.0, %v5153
      %v5155 = vpop.f32.mrf.mxu0
      %v5156 = vadd.f32 0.0, %v5155
      %5157 = vmatmul.bf16.gmra.mxu0 %v5090
      %v5158 = vpop.f32.mrf.mxu0
      %v5159 = vadd.f32 0.0, %v5158
      %v5160 = vpop.f32.mrf.mxu0
      %v5161 = vadd.f32 0.0, %v5160
      %5162 = vmatmul.bf16.gmra.mxu0 %v5093
      %v5163 = vpop.f32.mrf.mxu0
      %v5164 = vadd.f32 0.0, %v5163
      %v5165 = vpop.f32.mrf.mxu0
      %v5166 = vadd.f32 0.0, %v5165
      %5167 = vmatmul.bf16.gmra.mxu0 %v5096
      %v5168 = vpop.f32.mrf.mxu0
      %v5169 = vadd.f32 0.0, %v5168
      %v5170 = vpop.f32.mrf.mxu0
      %v5171 = vadd.f32 0.0, %v5170
      %5172 = vmatmul.bf16.gmra.mxu0 %v5099
      %v5173 = vpop.f32.mrf.mxu0
      %v5174 = vadd.f32 0.0, %v5173
      %v5175 = vpop.f32.mrf.mxu0
      %v5176 = vadd.f32 0.0, %v5175
      %5177 = vmatmul.bf16.gmra.mxu0 %v5102
      %v5178 = vpop.f32.mrf.mxu0
      %v5179 = vadd.f32 0.0, %v5178
      %v5180 = vpop.f32.mrf.mxu0
      %v5181 = vadd.f32 0.0, %v5180
      %5182 = vmatmul.bf16.gmra.mxu0 %v5105
      %v5183 = vpop.f32.mrf.mxu0
      %v5184 = vadd.f32 0.0, %v5183
      %v5185 = vpop.f32.mrf.mxu0
      %v5186 = vadd.f32 0.0, %v5185
      %5187 = vmatmul.bf16.gmra.mxu0 %v5108
      %v5188 = vpop.f32.mrf.mxu0
      %v5189 = vadd.f32 0.0, %v5188
      %v5190 = vpop.f32.mrf.mxu0
      %v5191 = vadd.f32 0.0, %v5190
      %5192 = vmatmul.bf16.gmra.mxu0 %v5111
      %v5193 = vpop.f32.mrf.mxu0
      %v5194 = vadd.f32 0.0, %v5193
      %v5195 = vpop.f32.mrf.mxu0
      %v5196 = vadd.f32 0.0, %v5195
      %5197 = vmatmul.bf16.gmra.mxu0 %v5114
      %v5198 = vpop.f32.mrf.mxu0
      %v5199 = vadd.f32 0.0, %v5198
      %v5200 = vpop.f32.mrf.mxu0
      %v5201 = vadd.f32 0.0, %v5200
      %5202 = vmatmul.bf16.gmra.mxu0 %v5117
      %v5203 = vpop.f32.mrf.mxu0
      %v5204 = vadd.f32 0.0, %v5203
      %v5205 = vpop.f32.mrf.mxu0
      %v5206 = vadd.f32 0.0, %v5205
      %5207 = vdwg.mxu0
      %v5208 = vadd.f32 %v4985, %v5129
      %v5209 = vadd.f32 %v4986, %v5131
      %v5210 = vadd.f32 %v4987, %v5134
      %v5211 = vadd.f32 %v4988, %v5136
      %v5212 = vadd.f32 %v4989, %v5139
      %v5213 = vadd.f32 %v4990, %v5141
      %v5214 = vadd.f32 %v4991, %v5144
      %v5215 = vadd.f32 %v4992, %v5146
      %v5216 = vadd.f32 %v4993, %v5149
      %v5217 = vadd.f32 %v4994, %v5151
      %v5218 = vadd.f32 %v4995, %v5154
      %v5219 = vadd.f32 %v4996, %v5156
      %v5220 = vadd.f32 %v4997, %v5159
      %v5221 = vadd.f32 %v4998, %v5161
      %v5222 = vadd.f32 %v4999, %v5164
      %v5223 = vadd.f32 %v5000, %v5166
      %v5224 = vadd.f32 %v5001, %v5169
      %v5225 = vadd.f32 %v5002, %v5171
      %v5226 = vadd.f32 %v5003, %v5174
      %v5227 = vadd.f32 %v5004, %v5176
      %v5228 = vadd.f32 %v5005, %v5179
      %v5229 = vadd.f32 %v5006, %v5181
      %v5230 = vadd.f32 %v5007, %v5184
      %v5231 = vadd.f32 %v5008, %v5186
      %v5232 = vadd.f32 %v5009, %v5189
      %v5233 = vadd.f32 %v5010, %v5191
      %v5234 = vadd.f32 %v5011, %v5194
      %v5235 = vadd.f32 %v5012, %v5196
      %v5236 = vadd.f32 %v5013, %v5199
      %v5237 = vadd.f32 %v5014, %v5201
      %v5238 = vadd.f32 %v5015, %v5204
      %v5239 = vadd.f32 %v5016, %v5206
      %v5240 = vld [vmem:[#allocation2 + $0x84] sm:$0xf]
      %s5241 = scalar_lea.vmem %s3, 224
      %v5242 = vld [vmem:[%s5241] sm:$0xf]
      %v5243 = vld [vmem:[%s5241 + $0x4] sm:$0xf]
      %v5244 = vld [vmem:[%s5241 + $0x8] sm:$0xf]
      %v5245 = vld [vmem:[%s5241 + $0xc] sm:$0xf]
      %v5247 = vunpack.c.l.b16 %v5240
      %v5248 = vpack.c.b16 %v5247, %v5247
      %v5250 = vshrl.u32 %v5025, 16
      %v5252 = vrot.slane %v5250, 3
      %v5253 = vshll.u32 %v5025, 16
      %v5255 = vrot.slane %v5253, 4
      %v5256 = vor.u32 %v5252, %v5255
      %v5257 = vrot.slane %v3736, 3
      %v5258 = vrot.slane %v3732, 4
      %v5259 = vor.u32 %v5257, %v5258
      %v5260 = vsel %vm3142, %v5256, %v5259
      %v5261 = vrot.slane %v3744, 3
      %v5262 = vrot.slane %v3740, 4
      %v5263 = vor.u32 %v5261, %v5262
      %v5264 = vsel %vm3142, %v5259, %v5263
      %v5265 = vrot.slane %v3752, 3
      %v5266 = vrot.slane %v3748, 4
      %v5267 = vor.u32 %v5265, %v5266
      %v5268 = vsel %vm3142, %v5263, %v5267
      %v5269 = vrot.slane %v3760, 3
      %v5270 = vrot.slane %v3756, 4
      %v5271 = vor.u32 %v5269, %v5270
      %v5272 = vsel %vm3142, %v5267, %v5271
      %v5273 = vrot.slane %v3768, 3
      %v5274 = vrot.slane %v3764, 4
      %v5275 = vor.u32 %v5273, %v5274
      %v5276 = vsel %vm3142, %v5271, %v5275
      %v5277 = vrot.slane %v3776, 3
      %v5278 = vrot.slane %v3772, 4
      %v5279 = vor.u32 %v5277, %v5278
      %v5280 = vsel %vm3142, %v5275, %v5279
      %v5281 = vrot.slane %v3784, 3
      %v5282 = vrot.slane %v3780, 4
      %v5283 = vor.u32 %v5281, %v5282
      %v5284 = vsel %vm3142, %v5279, %v5283
      %v5285 = vrot.slane %v3792, 3
      %v5286 = vrot.slane %v3788, 4
      %v5287 = vor.u32 %v5285, %v5286
      %v5288 = vsel %vm3142, %v5283, %v5287
      %v5289 = vrot.slane %v3800, 3
      %v5290 = vrot.slane %v3796, 4
      %v5291 = vor.u32 %v5289, %v5290
      %v5292 = vsel %vm3142, %v5287, %v5291
      %v5293 = vrot.slane %v3808, 3
      %v5294 = vrot.slane %v3804, 4
      %v5295 = vor.u32 %v5293, %v5294
      %v5296 = vsel %vm3142, %v5291, %v5295
      %v5297 = vrot.slane %v3816, 3
      %v5298 = vrot.slane %v3812, 4
      %v5299 = vor.u32 %v5297, %v5298
      %v5300 = vsel %vm3142, %v5295, %v5299
      %v5301 = vrot.slane %v3824, 3
      %v5302 = vrot.slane %v3820, 4
      %v5303 = vor.u32 %v5301, %v5302
      %v5304 = vsel %vm3142, %v5299, %v5303
      %v5305 = vrot.slane %v3832, 3
      %v5306 = vrot.slane %v3828, 4
      %v5307 = vor.u32 %v5305, %v5306
      %v5308 = vsel %vm3142, %v5303, %v5307
      %v5309 = vrot.slane %v3840, 3
      %v5310 = vrot.slane %v3836, 4
      %v5311 = vor.u32 %v5309, %v5310
      %v5312 = vsel %vm3142, %v5307, %v5311
      %v5313 = vrot.slane %v3848, 3
      %v5314 = vrot.slane %v3844, 4
      %v5315 = vor.u32 %v5313, %v5314
      %v5316 = vsel %vm3142, %v5311, %v5315
      %v5318 = vshrl.u32 %v5248, 16
      %v5320 = vrot.slane %v5318, 3
      %v5321 = vshll.u32 %v5248, 16
      %v5323 = vrot.slane %v5321, 4
      %v5324 = vor.u32 %v5320, %v5323
      %v5325 = vsel %vm3142, %v5315, %v5324
      %v5330 = vunpack.c.l.b16 %v5242
      %v5331 = vunpack.c.l.b16 %v5243
      %v5332 = vunpack.c.l.b16 %v5244
      %v5333 = vunpack.c.l.b16 %v5245
      %v5334 = vpack.c.b16 %v5331, %v5330
      %v5335 = vpack.c.b16 %v5333, %v5332
      %v5339 = vsel %vm1726, %v5260, 0
      %v5342 = vsel %vm1726, %v5264, 0
      %v5345 = vsel %vm1726, %v5268, 0
      %v5348 = vsel %vm1726, %v5272, 0
      %v5351 = vsel %vm1726, %v5276, 0
      %v5354 = vsel %vm1726, %v5280, 0
      %v5357 = vsel %vm1726, %v5284, 0
      %v5360 = vsel %vm1726, %v5288, 0
      %v5363 = vsel %vm1726, %v5292, 0
      %v5366 = vsel %vm1726, %v5296, 0
      %v5369 = vsel %vm1726, %v5300, 0
      %v5372 = vsel %vm1726, %v5304, 0
      %v5375 = vsel %vm1726, %v5308, 0
      %v5378 = vsel %vm1726, %v5312, 0
      %v5381 = vsel %vm1726, %v5316, 0
      %v5384 = vsel %vm1726, %v5325, 0
      %5386 = vmatpush.bf16.msra.mxu0 0
      %5387 = vmatpush.bf16.msra.mxu0 0
      %5388 = vmatpush.bf16.msra.mxu0 0
      %5389 = vmatpush.bf16.msra.mxu0 0
      %5390 = vmatpush.bf16.msra.mxu0 0
      %5391 = vmatpush.bf16.msra.mxu0 0
      %5392 = vmatpush.bf16.msra.mxu0 %v5335
      %5393 = vmatpush.bf16.msra.mxu0 %v5334
      %5394 = vmatmul.bf16.gmra.mxu0 %v5339
      %v5395 = vpop.f32.mrf.mxu0
      %v5396 = vadd.f32 0.0, %v5395
      %v5397 = vpop.f32.mrf.mxu0
      %v5398 = vadd.f32 0.0, %v5397
      %5399 = vmatmul.bf16.gmra.mxu0 %v5342
      %v5400 = vpop.f32.mrf.mxu0
      %v5401 = vadd.f32 0.0, %v5400
      %v5402 = vpop.f32.mrf.mxu0
      %v5403 = vadd.f32 0.0, %v5402
      %5404 = vmatmul.bf16.gmra.mxu0 %v5345
      %v5405 = vpop.f32.mrf.mxu0
      %v5406 = vadd.f32 0.0, %v5405
      %v5407 = vpop.f32.mrf.mxu0
      %v5408 = vadd.f32 0.0, %v5407
      %5409 = vmatmul.bf16.gmra.mxu0 %v5348
      %v5410 = vpop.f32.mrf.mxu0
      %v5411 = vadd.f32 0.0, %v5410
      %v5412 = vpop.f32.mrf.mxu0
      %v5413 = vadd.f32 0.0, %v5412
      %5414 = vmatmul.bf16.gmra.mxu0 %v5351
      %v5415 = vpop.f32.mrf.mxu0
      %v5416 = vadd.f32 0.0, %v5415
      %v5417 = vpop.f32.mrf.mxu0
      %v5418 = vadd.f32 0.0, %v5417
      %5419 = vmatmul.bf16.gmra.mxu0 %v5354
      %v5420 = vpop.f32.mrf.mxu0
      %v5421 = vadd.f32 0.0, %v5420
      %v5422 = vpop.f32.mrf.mxu0
      %v5423 = vadd.f32 0.0, %v5422
      %5424 = vmatmul.bf16.gmra.mxu0 %v5357
      %v5425 = vpop.f32.mrf.mxu0
      %v5426 = vadd.f32 0.0, %v5425
      %v5427 = vpop.f32.mrf.mxu0
      %v5428 = vadd.f32 0.0, %v5427
      %5429 = vmatmul.bf16.gmra.mxu0 %v5360
      %v5430 = vpop.f32.mrf.mxu0
      %v5431 = vadd.f32 0.0, %v5430
      %v5432 = vpop.f32.mrf.mxu0
      %v5433 = vadd.f32 0.0, %v5432
      %5434 = vmatmul.bf16.gmra.mxu0 %v5363
      %v5435 = vpop.f32.mrf.mxu0
      %v5436 = vadd.f32 0.0, %v5435
      %v5437 = vpop.f32.mrf.mxu0
      %v5438 = vadd.f32 0.0, %v5437
      %5439 = vmatmul.bf16.gmra.mxu0 %v5366
      %v5440 = vpop.f32.mrf.mxu0
      %v5441 = vadd.f32 0.0, %v5440
      %v5442 = vpop.f32.mrf.mxu0
      %v5443 = vadd.f32 0.0, %v5442
      %5444 = vmatmul.bf16.gmra.mxu0 %v5369
      %v5445 = vpop.f32.mrf.mxu0
      %v5446 = vadd.f32 0.0, %v5445
      %v5447 = vpop.f32.mrf.mxu0
      %v5448 = vadd.f32 0.0, %v5447
      %5449 = vmatmul.bf16.gmra.mxu0 %v5372
      %v5450 = vpop.f32.mrf.mxu0
      %v5451 = vadd.f32 0.0, %v5450
      %v5452 = vpop.f32.mrf.mxu0
      %v5453 = vadd.f32 0.0, %v5452
      %5454 = vmatmul.bf16.gmra.mxu0 %v5375
      %v5455 = vpop.f32.mrf.mxu0
      %v5456 = vadd.f32 0.0, %v5455
      %v5457 = vpop.f32.mrf.mxu0
      %v5458 = vadd.f32 0.0, %v5457
      %5459 = vmatmul.bf16.gmra.mxu0 %v5378
      %v5460 = vpop.f32.mrf.mxu0
      %v5461 = vadd.f32 0.0, %v5460
      %v5462 = vpop.f32.mrf.mxu0
      %v5463 = vadd.f32 0.0, %v5462
      %5464 = vmatmul.bf16.gmra.mxu0 %v5381
      %v5465 = vpop.f32.mrf.mxu0
      %v5466 = vadd.f32 0.0, %v5465
      %v5467 = vpop.f32.mrf.mxu0
      %v5468 = vadd.f32 0.0, %v5467
      %5469 = vmatmul.bf16.gmra.mxu0 %v5384
      %v5470 = vpop.f32.mrf.mxu0
      %v5471 = vadd.f32 0.0, %v5470
      %v5472 = vpop.f32.mrf.mxu0
      %v5473 = vadd.f32 0.0, %v5472
      %5474 = vdwg.mxu0
      %v5475 = vadd.f32 %v5208, %v5396
      %v5476 = vadd.f32 %v5209, %v5398
      %v5477 = vadd.f32 %v5210, %v5401
      %v5478 = vadd.f32 %v5211, %v5403
      %v5479 = vadd.f32 %v5212, %v5406
      %v5480 = vadd.f32 %v5213, %v5408
      %v5481 = vadd.f32 %v5214, %v5411
      %v5482 = vadd.f32 %v5215, %v5413
      %v5483 = vadd.f32 %v5216, %v5416
      %v5484 = vadd.f32 %v5217, %v5418
      %v5485 = vadd.f32 %v5218, %v5421
      %v5486 = vadd.f32 %v5219, %v5423
      %v5487 = vadd.f32 %v5220, %v5426
      %v5488 = vadd.f32 %v5221, %v5428
      %v5489 = vadd.f32 %v5222, %v5431
      %v5490 = vadd.f32 %v5223, %v5433
      %v5491 = vadd.f32 %v5224, %v5436
      %v5492 = vadd.f32 %v5225, %v5438
      %v5493 = vadd.f32 %v5226, %v5441
      %v5494 = vadd.f32 %v5227, %v5443
      %v5495 = vadd.f32 %v5228, %v5446
      %v5496 = vadd.f32 %v5229, %v5448
      %v5497 = vadd.f32 %v5230, %v5451
      %v5498 = vadd.f32 %v5231, %v5453
      %v5499 = vadd.f32 %v5232, %v5456
      %v5500 = vadd.f32 %v5233, %v5458
      %v5501 = vadd.f32 %v5234, %v5461
      %v5502 = vadd.f32 %v5235, %v5463
      %v5503 = vadd.f32 %v5236, %v5466
      %v5504 = vadd.f32 %v5237, %v5468
      %v5505 = vadd.f32 %v5238, %v5471
      %v5506 = vadd.f32 %v5239, %v5473
      %v5507 = vld [vmem:[%s4] sm:$0x1]
      %v5509 = vperm.slane %v5507, 0
      %v5511 = vadd.f32 %v5475, %v5509
      %v5512 = vadd.f32 %v5476, %v5509
      %v5513 = vadd.f32 %v5477, %v5509
      %v5514 = vadd.f32 %v5478, %v5509
      %v5515 = vadd.f32 %v5479, %v5509
      %v5516 = vadd.f32 %v5480, %v5509
      %v5517 = vadd.f32 %v5481, %v5509
      %v5518 = vadd.f32 %v5482, %v5509
      %v5519 = vadd.f32 %v5483, %v5509
      %v5520 = vadd.f32 %v5484, %v5509
      %v5521 = vadd.f32 %v5485, %v5509
      %v5522 = vadd.f32 %v5486, %v5509
      %v5523 = vadd.f32 %v5487, %v5509
      %v5524 = vadd.f32 %v5488, %v5509
      %v5525 = vadd.f32 %v5489, %v5509
      %v5526 = vadd.f32 %v5490, %v5509
      %v5527 = vadd.f32 %v5491, %v5509
      %v5528 = vadd.f32 %v5492, %v5509
      %v5529 = vadd.f32 %v5493, %v5509
      %v5530 = vadd.f32 %v5494, %v5509
      %v5531 = vadd.f32 %v5495, %v5509
      %v5532 = vadd.f32 %v5496, %v5509
      %v5533 = vadd.f32 %v5497, %v5509
      %v5534 = vadd.f32 %v5498, %v5509
      %v5535 = vadd.f32 %v5499, %v5509
      %v5536 = vadd.f32 %v5500, %v5509
      %v5537 = vadd.f32 %v5501, %v5509
      %v5538 = vadd.f32 %v5502, %v5509
      %v5539 = vadd.f32 %v5503, %v5509
      %v5540 = vadd.f32 %v5504, %v5509
      %v5541 = vadd.f32 %v5505, %v5509
      %v5542 = vadd.f32 %v5506, %v5509
      %5575 = vrot.lane.b32.xlu0 %v1075, 96
      %v5576 = vpop.permute.xlu0 %5575
      %5577 = vrot.lane.b32.xlu0 %v1076, 96
      %v5578 = vpop.permute.xlu0 %5577
      %5579 = vrot.lane.b32.xlu0 %v1077, 96
      %v5580 = vpop.permute.xlu0 %5579
      %5581 = vrot.lane.b32.xlu0 %v1078, 96
      %v5582 = vpop.permute.xlu0 %5581
      %5583 = vrot.lane.b32.xlu0 %v1079, 96
      %v5584 = vpop.permute.xlu0 %5583
      %5585 = vrot.lane.b32.xlu0 %v1080, 96
      %v5586 = vpop.permute.xlu0 %5585
      %5587 = vrot.lane.b32.xlu0 %v1081, 96
      %v5588 = vpop.permute.xlu0 %5587
      %5589 = vrot.lane.b32.xlu0 %v1082, 96
      %v5590 = vpop.permute.xlu0 %5589
      %5591 = vrot.lane.b32.xlu0 %v1083, 96
      %v5592 = vpop.permute.xlu0 %5591
      %5593 = vrot.lane.b32.xlu0 %v1084, 96
      %v5594 = vpop.permute.xlu0 %5593
      %5595 = vrot.lane.b32.xlu0 %v1085, 96
      %v5596 = vpop.permute.xlu0 %5595
      %5597 = vrot.lane.b32.xlu0 %v1086, 96
      %v5598 = vpop.permute.xlu0 %5597
      %5599 = vrot.lane.b32.xlu0 %v1087, 96
      %v5600 = vpop.permute.xlu0 %5599
      %5601 = vrot.lane.b32.xlu0 %v1088, 96
      %v5602 = vpop.permute.xlu0 %5601
      %5603 = vrot.lane.b32.xlu0 %v1089, 96
      %v5604 = vpop.permute.xlu0 %5603
      %5605 = vrot.lane.b32.xlu0 %v1090, 96
      %v5606 = vpop.permute.xlu0 %5605
      %5607 = vrot.lane.b32.xlu0 %v1091, 96
      %v5608 = vpop.permute.xlu0 %5607
      %5609 = vrot.lane.b32.xlu0 %v1092, 96
      %v5610 = vpop.permute.xlu0 %5609
      %5611 = vrot.lane.b32.xlu0 %v1093, 96
      %v5612 = vpop.permute.xlu0 %5611
      %5613 = vrot.lane.b32.xlu0 %v1094, 96
      %v5614 = vpop.permute.xlu0 %5613
      %5615 = vrot.lane.b32.xlu0 %v1095, 96
      %v5616 = vpop.permute.xlu0 %5615
      %5617 = vrot.lane.b32.xlu0 %v1096, 96
      %v5618 = vpop.permute.xlu0 %5617
      %5619 = vrot.lane.b32.xlu0 %v1097, 96
      %v5620 = vpop.permute.xlu0 %5619
      %5621 = vrot.lane.b32.xlu0 %v1098, 96
      %v5622 = vpop.permute.xlu0 %5621
      %5623 = vrot.lane.b32.xlu0 %v1099, 96
      %v5624 = vpop.permute.xlu0 %5623
      %5625 = vrot.lane.b32.xlu0 %v1100, 96
      %v5626 = vpop.permute.xlu0 %5625
      %5627 = vrot.lane.b32.xlu0 %v1101, 96
      %v5628 = vpop.permute.xlu0 %5627
      %5629 = vrot.lane.b32.xlu0 %v1102, 96
      %v5630 = vpop.permute.xlu0 %5629
      %5631 = vrot.lane.b32.xlu0 %v1103, 96
      %v5632 = vpop.permute.xlu0 %5631
      %5633 = vrot.lane.b32.xlu0 %v1104, 96
      %v5634 = vpop.permute.xlu0 %5633
      %5635 = vrot.lane.b32.xlu0 %v1105, 96
      %v5636 = vpop.permute.xlu0 %5635
      %5637 = vrot.lane.b32.xlu0 %v1106, 96
      %v5638 = vpop.permute.xlu0 %5637
      %v5671 = vadd.f32 %v5511, %v5576
      %v5672 = vadd.f32 %v5512, %v5578
      %v5673 = vadd.f32 %v5513, %v5580
      %v5674 = vadd.f32 %v5514, %v5582
      %v5675 = vadd.f32 %v5515, %v5584
      %v5676 = vadd.f32 %v5516, %v5586
      %v5677 = vadd.f32 %v5517, %v5588
      %v5678 = vadd.f32 %v5518, %v5590
      %v5679 = vadd.f32 %v5519, %v5592
      %v5680 = vadd.f32 %v5520, %v5594
      %v5681 = vadd.f32 %v5521, %v5596
      %v5682 = vadd.f32 %v5522, %v5598
      %v5683 = vadd.f32 %v5523, %v5600
      %v5684 = vadd.f32 %v5524, %v5602
      %v5685 = vadd.f32 %v5525, %v5604
      %v5686 = vadd.f32 %v5526, %v5606
      %v5687 = vadd.f32 %v5527, %v5608
      %v5688 = vadd.f32 %v5528, %v5610
      %v5689 = vadd.f32 %v5529, %v5612
      %v5690 = vadd.f32 %v5530, %v5614
      %v5691 = vadd.f32 %v5531, %v5616
      %v5692 = vadd.f32 %v5532, %v5618
      %v5693 = vadd.f32 %v5533, %v5620
      %v5694 = vadd.f32 %v5534, %v5622
      %v5695 = vadd.f32 %v5535, %v5624
      %v5696 = vadd.f32 %v5536, %v5626
      %v5697 = vadd.f32 %v5537, %v5628
      %v5698 = vadd.f32 %v5538, %v5630
      %v5699 = vadd.f32 %v5539, %v5632
      %v5700 = vadd.f32 %v5540, %v5634
      %v5701 = vadd.f32 %v5541, %v5636
      %v5702 = vadd.f32 %v5542, %v5638
      %vm5703 = vcmp.ge.f32.partialorder %v5671, 0.0
      %vm5704 = vcmp.ge.f32.partialorder %v5672, 0.0
      %vm5705 = vcmp.ge.f32.partialorder %v5673, 0.0
      %vm5706 = vcmp.ge.f32.partialorder %v5674, 0.0
      %vm5707 = vcmp.ge.f32.partialorder %v5675, 0.0
      %vm5708 = vcmp.ge.f32.partialorder %v5676, 0.0
      %vm5709 = vcmp.ge.f32.partialorder %v5677, 0.0
      %vm5710 = vcmp.ge.f32.partialorder %v5678, 0.0
      %vm5711 = vcmp.ge.f32.partialorder %v5679, 0.0
      %vm5712 = vcmp.ge.f32.partialorder %v5680, 0.0
      %vm5713 = vcmp.ge.f32.partialorder %v5681, 0.0
      %vm5714 = vcmp.ge.f32.partialorder %v5682, 0.0
      %vm5715 = vcmp.ge.f32.partialorder %v5683, 0.0
      %vm5716 = vcmp.ge.f32.partialorder %v5684, 0.0
      %vm5717 = vcmp.ge.f32.partialorder %v5685, 0.0
      %vm5718 = vcmp.ge.f32.partialorder %v5686, 0.0
      %vm5719 = vcmp.ge.f32.partialorder %v5687, 0.0
      %vm5720 = vcmp.ge.f32.partialorder %v5688, 0.0
      %vm5721 = vcmp.ge.f32.partialorder %v5689, 0.0
      %vm5722 = vcmp.ge.f32.partialorder %v5690, 0.0
      %vm5723 = vcmp.ge.f32.partialorder %v5691, 0.0
      %vm5724 = vcmp.ge.f32.partialorder %v5692, 0.0
      %vm5725 = vcmp.ge.f32.partialorder %v5693, 0.0
      %vm5726 = vcmp.ge.f32.partialorder %v5694, 0.0
      %vm5727 = vcmp.ge.f32.partialorder %v5695, 0.0
      %vm5728 = vcmp.ge.f32.partialorder %v5696, 0.0
      %vm5729 = vcmp.ge.f32.partialorder %v5697, 0.0
      %vm5730 = vcmp.ge.f32.partialorder %v5698, 0.0
      %vm5731 = vcmp.ge.f32.partialorder %v5699, 0.0
      %vm5732 = vcmp.ge.f32.partialorder %v5700, 0.0
      %vm5733 = vcmp.ge.f32.partialorder %v5701, 0.0
      %vm5734 = vcmp.ge.f32.partialorder %v5702, 0.0
      %v5735 = vmul.f32 %v5671, 0.01
      %v5736 = vmul.f32 %v5672, 0.01
      %v5737 = vmul.f32 %v5673, 0.01
      %v5738 = vmul.f32 %v5674, 0.01
      %v5739 = vmul.f32 %v5675, 0.01
      %v5740 = vmul.f32 %v5676, 0.01
      %v5741 = vmul.f32 %v5677, 0.01
      %v5742 = vmul.f32 %v5678, 0.01
      %v5743 = vmul.f32 %v5679, 0.01
      %v5744 = vmul.f32 %v5680, 0.01
      %v5745 = vmul.f32 %v5681, 0.01
      %v5746 = vmul.f32 %v5682, 0.01
      %v5747 = vmul.f32 %v5683, 0.01
      %v5748 = vmul.f32 %v5684, 0.01
      %v5749 = vmul.f32 %v5685, 0.01
      %v5750 = vmul.f32 %v5686, 0.01
      %v5751 = vmul.f32 %v5687, 0.01
      %v5752 = vmul.f32 %v5688, 0.01
      %v5753 = vmul.f32 %v5689, 0.01
      %v5754 = vmul.f32 %v5690, 0.01
      %v5755 = vmul.f32 %v5691, 0.01
      %v5756 = vmul.f32 %v5692, 0.01
      %v5757 = vmul.f32 %v5693, 0.01
      %v5758 = vmul.f32 %v5694, 0.01
      %v5759 = vmul.f32 %v5695, 0.01
      %v5760 = vmul.f32 %v5696, 0.01
      %v5761 = vmul.f32 %v5697, 0.01
      %v5762 = vmul.f32 %v5698, 0.01
      %v5763 = vmul.f32 %v5699, 0.01
      %v5764 = vmul.f32 %v5700, 0.01
      %v5765 = vmul.f32 %v5701, 0.01
      %v5766 = vmul.f32 %v5702, 0.01
      %v5767 = vsel %vm5703, %v5671, %v5735
      %v5768 = vsel %vm5704, %v5672, %v5736
      %v5769 = vsel %vm5705, %v5673, %v5737
      %v5770 = vsel %vm5706, %v5674, %v5738
      %v5771 = vsel %vm5707, %v5675, %v5739
      %v5772 = vsel %vm5708, %v5676, %v5740
      %v5773 = vsel %vm5709, %v5677, %v5741
      %v5774 = vsel %vm5710, %v5678, %v5742
      %v5775 = vsel %vm5711, %v5679, %v5743
      %v5776 = vsel %vm5712, %v5680, %v5744
      %v5777 = vsel %vm5713, %v5681, %v5745
      %v5778 = vsel %vm5714, %v5682, %v5746
      %v5779 = vsel %vm5715, %v5683, %v5747
      %v5780 = vsel %vm5716, %v5684, %v5748
      %v5781 = vsel %vm5717, %v5685, %v5749
      %v5782 = vsel %vm5718, %v5686, %v5750
      %v5783 = vsel %vm5719, %v5687, %v5751
      %v5784 = vsel %vm5720, %v5688, %v5752
      %v5785 = vsel %vm5721, %v5689, %v5753
      %v5786 = vsel %vm5722, %v5690, %v5754
      %v5787 = vsel %vm5723, %v5691, %v5755
      %v5788 = vsel %vm5724, %v5692, %v5756
      %v5789 = vsel %vm5725, %v5693, %v5757
      %v5790 = vsel %vm5726, %v5694, %v5758
      %v5791 = vsel %vm5727, %v5695, %v5759
      %v5792 = vsel %vm5728, %v5696, %v5760
      %v5793 = vsel %vm5729, %v5697, %v5761
      %v5794 = vsel %vm5730, %v5698, %v5762
      %v5795 = vsel %vm5731, %v5699, %v5763
      %v5796 = vsel %vm5732, %v5700, %v5764
      %v5797 = vsel %vm5733, %v5701, %v5765
      %v5798 = vsel %vm5734, %v5702, %v5766
      %v5799 = vstv %s249
      %v5800 = vadd.s32 %v5799, %v1110
      %v5801 = vadd.s32 %v5799, %v1111
      %v5802 = vadd.s32 %v5799, %v1112
      %v5803 = vadd.s32 %v5799, %v1113
      %v5804 = vadd.s32 %v5799, %v1114
      %v5805 = vadd.s32 %v5799, %v1115
      %v5806 = vadd.s32 %v5799, %v1116
      %v5807 = vadd.s32 %v5799, %v1117
      %v5808 = vadd.s32 %v5799, %v1118
      %v5809 = vadd.s32 %v5799, %v1119
      %v5810 = vadd.s32 %v5799, %v1120
      %v5811 = vadd.s32 %v5799, %v1121
      %v5812 = vadd.s32 %v5799, %v1122
      %v5813 = vadd.s32 %v5799, %v1123
      %v5814 = vadd.s32 %v5799, %v1124
      %v5815 = vadd.s32 %v5799, %v1125
      %v5816 = vadd.s32 %v5799, %v1126
      %v5817 = vadd.s32 %v5799, %v1127
      %v5818 = vadd.s32 %v5799, %v1128
      %v5819 = vadd.s32 %v5799, %v1129
      %v5820 = vadd.s32 %v5799, %v1130
      %v5821 = vadd.s32 %v5799, %v1131
      %v5822 = vadd.s32 %v5799, %v1132
      %v5823 = vadd.s32 %v5799, %v1133
      %v5824 = vadd.s32 %v5799, %v1134
      %v5825 = vadd.s32 %v5799, %v1135
      %v5826 = vadd.s32 %v5799, %v1136
      %v5827 = vadd.s32 %v5799, %v1137
      %v5828 = vadd.s32 %v5799, %v1138
      %v5829 = vadd.s32 %v5799, %v1139
      %v5830 = vadd.s32 %v5799, %v1140
      %v5831 = vadd.s32 %v5799, %v1141
      %vm5832 = vcmp.lt.s32.totalorder %v5800, 838
      %vm5833 = vcmp.lt.s32.totalorder %v5801, 838
      %vm5834 = vcmp.lt.s32.totalorder %v5802, 838
      %vm5835 = vcmp.lt.s32.totalorder %v5803, 838
      %vm5836 = vcmp.lt.s32.totalorder %v5804, 838
      %vm5837 = vcmp.lt.s32.totalorder %v5805, 838
      %vm5838 = vcmp.lt.s32.totalorder %v5806, 838
      %vm5839 = vcmp.lt.s32.totalorder %v5807, 838
      %vm5840 = vcmp.lt.s32.totalorder %v5808, 838
      %vm5841 = vcmp.lt.s32.totalorder %v5809, 838
      %vm5842 = vcmp.lt.s32.totalorder %v5810, 838
      %vm5843 = vcmp.lt.s32.totalorder %v5811, 838
      %vm5844 = vcmp.lt.s32.totalorder %v5812, 838
      %vm5845 = vcmp.lt.s32.totalorder %v5813, 838
      %vm5846 = vcmp.lt.s32.totalorder %v5814, 838
      %vm5847 = vcmp.lt.s32.totalorder %v5815, 838
      %vm5848 = vcmp.lt.s32.totalorder %v5816, 838
      %vm5849 = vcmp.lt.s32.totalorder %v5817, 838
      %vm5850 = vcmp.lt.s32.totalorder %v5818, 838
      %vm5851 = vcmp.lt.s32.totalorder %v5819, 838
      %vm5852 = vcmp.lt.s32.totalorder %v5820, 838
      %vm5853 = vcmp.lt.s32.totalorder %v5821, 838
      %vm5854 = vcmp.lt.s32.totalorder %v5822, 838
      %vm5855 = vcmp.lt.s32.totalorder %v5823, 838
      %vm5856 = vcmp.lt.s32.totalorder %v5824, 838
      %vm5857 = vcmp.lt.s32.totalorder %v5825, 838
      %vm5858 = vcmp.lt.s32.totalorder %v5826, 838
      %vm5859 = vcmp.lt.s32.totalorder %v5827, 838
      %vm5860 = vcmp.lt.s32.totalorder %v5828, 838
      %vm5861 = vcmp.lt.s32.totalorder %v5829, 838
      %vm5862 = vcmp.lt.s32.totalorder %v5830, 838
      %vm5863 = vcmp.lt.s32.totalorder %v5831, 838
      %v5864 = vsel %vm5832, 1, 0
      %v5865 = vsel %vm5833, 1, 0
      %v5866 = vsel %vm5834, 1, 0
      %v5867 = vsel %vm5835, 1, 0
      %v5868 = vsel %vm5836, 1, 0
      %v5869 = vsel %vm5837, 1, 0
      %v5870 = vsel %vm5838, 1, 0
      %v5871 = vsel %vm5839, 1, 0
      %v5872 = vsel %vm5840, 1, 0
      %v5873 = vsel %vm5841, 1, 0
      %v5874 = vsel %vm5842, 1, 0
      %v5875 = vsel %vm5843, 1, 0
      %v5876 = vsel %vm5844, 1, 0
      %v5877 = vsel %vm5845, 1, 0
      %v5878 = vsel %vm5846, 1, 0
      %v5879 = vsel %vm5847, 1, 0
      %v5880 = vsel %vm5848, 1, 0
      %v5881 = vsel %vm5849, 1, 0
      %v5882 = vsel %vm5850, 1, 0
      %v5883 = vsel %vm5851, 1, 0
      %v5884 = vsel %vm5852, 1, 0
      %v5885 = vsel %vm5853, 1, 0
      %v5886 = vsel %vm5854, 1, 0
      %v5887 = vsel %vm5855, 1, 0
      %v5888 = vsel %vm5856, 1, 0
      %v5889 = vsel %vm5857, 1, 0
      %v5890 = vsel %vm5858, 1, 0
      %v5891 = vsel %vm5859, 1, 0
      %v5892 = vsel %vm5860, 1, 0
      %v5893 = vsel %vm5861, 1, 0
      %v5894 = vsel %vm5862, 1, 0
      %v5895 = vsel %vm5863, 1, 0
      %vm5896 = vcmp.eq.s32.totalorder %v5864, 1
      %vm5897 = vcmp.eq.s32.totalorder %v5865, 1
      %vm5898 = vcmp.eq.s32.totalorder %v5866, 1
      %vm5899 = vcmp.eq.s32.totalorder %v5867, 1
      %vm5900 = vcmp.eq.s32.totalorder %v5868, 1
      %vm5901 = vcmp.eq.s32.totalorder %v5869, 1
      %vm5902 = vcmp.eq.s32.totalorder %v5870, 1
      %vm5903 = vcmp.eq.s32.totalorder %v5871, 1
      %vm5904 = vcmp.eq.s32.totalorder %v5872, 1
      %vm5905 = vcmp.eq.s32.totalorder %v5873, 1
      %vm5906 = vcmp.eq.s32.totalorder %v5874, 1
      %vm5907 = vcmp.eq.s32.totalorder %v5875, 1
      %vm5908 = vcmp.eq.s32.totalorder %v5876, 1
      %vm5909 = vcmp.eq.s32.totalorder %v5877, 1
      %vm5910 = vcmp.eq.s32.totalorder %v5878, 1
      %vm5911 = vcmp.eq.s32.totalorder %v5879, 1
      %vm5912 = vcmp.eq.s32.totalorder %v5880, 1
      %vm5913 = vcmp.eq.s32.totalorder %v5881, 1
      %vm5914 = vcmp.eq.s32.totalorder %v5882, 1
      %vm5915 = vcmp.eq.s32.totalorder %v5883, 1
      %vm5916 = vcmp.eq.s32.totalorder %v5884, 1
      %vm5917 = vcmp.eq.s32.totalorder %v5885, 1
      %vm5918 = vcmp.eq.s32.totalorder %v5886, 1
      %vm5919 = vcmp.eq.s32.totalorder %v5887, 1
      %vm5920 = vcmp.eq.s32.totalorder %v5888, 1
      %vm5921 = vcmp.eq.s32.totalorder %v5889, 1
      %vm5922 = vcmp.eq.s32.totalorder %v5890, 1
      %vm5923 = vcmp.eq.s32.totalorder %v5891, 1
      %vm5924 = vcmp.eq.s32.totalorder %v5892, 1
      %vm5925 = vcmp.eq.s32.totalorder %v5893, 1
      %vm5926 = vcmp.eq.s32.totalorder %v5894, 1
      %vm5927 = vcmp.eq.s32.totalorder %v5895, 1
      %v5928 = vsel %vm5896, %v5767, 0.0
      %v5929 = vsel %vm5897, %v5768, 0.0
      %v5930 = vsel %vm5898, %v5769, 0.0
      %v5931 = vsel %vm5899, %v5770, 0.0
      %v5932 = vsel %vm5900, %v5771, 0.0
      %v5933 = vsel %vm5901, %v5772, 0.0
      %v5934 = vsel %vm5902, %v5773, 0.0
      %v5935 = vsel %vm5903, %v5774, 0.0
      %v5936 = vsel %vm5904, %v5775, 0.0
      %v5937 = vsel %vm5905, %v5776, 0.0
      %v5938 = vsel %vm5906, %v5777, 0.0
      %v5939 = vsel %vm5907, %v5778, 0.0
      %v5940 = vsel %vm5908, %v5779, 0.0
      %v5941 = vsel %vm5909, %v5780, 0.0
      %v5942 = vsel %vm5910, %v5781, 0.0
      %v5943 = vsel %vm5911, %v5782, 0.0
      %v5944 = vsel %vm5912, %v5783, 0.0
      %v5945 = vsel %vm5913, %v5784, 0.0
      %v5946 = vsel %vm5914, %v5785, 0.0
      %v5947 = vsel %vm5915, %v5786, 0.0
      %v5948 = vsel %vm5916, %v5787, 0.0
      %v5949 = vsel %vm5917, %v5788, 0.0
      %v5950 = vsel %vm5918, %v5789, 0.0
      %v5951 = vsel %vm5919, %v5790, 0.0
      %v5952 = vsel %vm5920, %v5791, 0.0
      %v5953 = vsel %vm5921, %v5792, 0.0
      %v5954 = vsel %vm5922, %v5793, 0.0
      %v5955 = vsel %vm5923, %v5794, 0.0
      %v5956 = vsel %vm5924, %v5795, 0.0
      %v5957 = vsel %vm5925, %v5796, 0.0
      %v5958 = vsel %vm5926, %v5797, 0.0
      %v5959 = vsel %vm5927, %v5798, 0.0
      %v5960 = vpack.c.bf16 %v5928, %v5928
      %v5961 = vpack.c.bf16 %v5929, %v5929
      %v5962 = vpack.c.bf16 %v5930, %v5930
      %v5963 = vpack.c.bf16 %v5931, %v5931
      %v5964 = vpack.c.bf16 %v5932, %v5932
      %v5965 = vpack.c.bf16 %v5933, %v5933
      %v5966 = vpack.c.bf16 %v5934, %v5934
      %v5967 = vpack.c.bf16 %v5935, %v5935
      %v5968 = vpack.c.bf16 %v5936, %v5936
      %v5969 = vpack.c.bf16 %v5937, %v5937
      %v5970 = vpack.c.bf16 %v5938, %v5938
      %v5971 = vpack.c.bf16 %v5939, %v5939
      %v5972 = vpack.c.bf16 %v5940, %v5940
      %v5973 = vpack.c.bf16 %v5941, %v5941
      %v5974 = vpack.c.bf16 %v5942, %v5942
      %v5975 = vpack.c.bf16 %v5943, %v5943
      %v5976 = vpack.c.bf16 %v5944, %v5944
      %v5977 = vpack.c.bf16 %v5945, %v5945
      %v5978 = vpack.c.bf16 %v5946, %v5946
      %v5979 = vpack.c.bf16 %v5947, %v5947
      %v5980 = vpack.c.bf16 %v5948, %v5948
      %v5981 = vpack.c.bf16 %v5949, %v5949
      %v5982 = vpack.c.bf16 %v5950, %v5950
      %v5983 = vpack.c.bf16 %v5951, %v5951
      %v5984 = vpack.c.bf16 %v5952, %v5952
      %v5985 = vpack.c.bf16 %v5953, %v5953
      %v5986 = vpack.c.bf16 %v5954, %v5954
      %v5987 = vpack.c.bf16 %v5955, %v5955
      %v5988 = vpack.c.bf16 %v5956, %v5956
      %v5989 = vpack.c.bf16 %v5957, %v5957
      %v5990 = vpack.c.bf16 %v5958, %v5958
      %v5991 = vpack.c.bf16 %v5959, %v5959
      %5992 = vst.msk [vmem:[%s246] sm:$0xf] %vm1519, %v5960
      %5993 = vst.msk [vmem:[%s246 + $0x4] sm:$0xf] %vm1519, %v5961
      %5994 = vst.msk [vmem:[%s246 + $0x8] sm:$0xf] %vm1519, %v5962
      %5995 = vst.msk [vmem:[%s246 + $0xc] sm:$0xf] %vm1519, %v5963
      %5996 = vst.msk [vmem:[%s246 + $0x10] sm:$0xf] %vm1519, %v5964
      %5997 = vst.msk [vmem:[%s246 + $0x14] sm:$0xf] %vm1519, %v5965
      %5998 = vst.msk [vmem:[%s246 + $0x18] sm:$0xf] %vm1519, %v5966
      %5999 = vst.msk [vmem:[%s246 + $0x1c] sm:$0xf] %vm1519, %v5967
      %6000 = vst.msk [vmem:[%s246 + $0x20] sm:$0xf] %vm1519, %v5968
      %6001 = vst.msk [vmem:[%s246 + $0x24] sm:$0xf] %vm1519, %v5969
      %6002 = vst.msk [vmem:[%s246 + $0x28] sm:$0xf] %vm1519, %v5970
      %6003 = vst.msk [vmem:[%s246 + $0x2c] sm:$0xf] %vm1519, %v5971
      %6004 = vst.msk [vmem:[%s246 + $0x30] sm:$0xf] %vm1519, %v5972
      %6005 = vst.msk [vmem:[%s246 + $0x34] sm:$0xf] %vm1519, %v5973
      %6006 = vst.msk [vmem:[%s246 + $0x38] sm:$0xf] %vm1519, %v5974
      %6007 = vst.msk [vmem:[%s246 + $0x3c] sm:$0xf] %vm1519, %v5975
      %6008 = vst.msk [vmem:[%s246 + $0x40] sm:$0xf] %vm1519, %v5976
      %6009 = vst.msk [vmem:[%s246 + $0x44] sm:$0xf] %vm1519, %v5977
      %6010 = vst.msk [vmem:[%s246 + $0x48] sm:$0xf] %vm1519, %v5978
      %6011 = vst.msk [vmem:[%s246 + $0x4c] sm:$0xf] %vm1519, %v5979
      %6012 = vst.msk [vmem:[%s246 + $0x50] sm:$0xf] %vm1519, %v5980
      %6013 = vst.msk [vmem:[%s246 + $0x54] sm:$0xf] %vm1519, %v5981
      %6014 = vst.msk [vmem:[%s246 + $0x58] sm:$0xf] %vm1519, %v5982
      %6015 = vst.msk [vmem:[%s246 + $0x5c] sm:$0xf] %vm1519, %v5983
      %6016 = vst.msk [vmem:[%s246 + $0x60] sm:$0xf] %vm1519, %v5984
      %6017 = vst.msk [vmem:[%s246 + $0x64] sm:$0xf] %vm1519, %v5985
      %6018 = vst.msk [vmem:[%s246 + $0x68] sm:$0xf] %vm1519, %v5986
      %6019 = vst.msk [vmem:[%s246 + $0x6c] sm:$0xf] %vm1519, %v5987
      %6020 = vst.msk [vmem:[%s246 + $0x70] sm:$0xf] %vm1519, %v5988
      %6021 = vst.msk [vmem:[%s246 + $0x74] sm:$0xf] %vm1519, %v5989
      %6022 = vst.msk [vmem:[%s246 + $0x78] sm:$0xf] %vm1519, %v5990
      %6023 = vst.msk [vmem:[%s246 + $0x7c] sm:$0xf] %vm1519, %v5991
      %s6024 = smul.u32 32, %s21
      %p6025 = scmp.lt.s32.totalorder %s20, 1
      %s6026 = scalar_select %p6025, %s20, 1
      %p6027 = scmp.lt.s32.totalorder %s6024, 127
      %s6028 = scalar_select %p6027, %s6024, 127
      %s6029 = smul.addr %s6026, 128
      %s6030 = sadd.s32 %s6028, %s6029
      %s6031 = smul.addr %s6030, 4
      %s6032 = scalar_lea.vmem %s5, %s6031
      // Predicated region
      $region41: #{tpu_custom_call.1} parent=39 // pred_check
        %p6033 = pneg %p158
      $region42: #{tpu_custom_call.1} parent=39 // pred_check_branch
        %6035 = sbr.rel (%p6033) target = $region44
      $region43: #{tpu_custom_call.1} parent=39 // pred_region
        %s6036 = smul.u32 32, %s21
      $region44: #{tpu_custom_call.1} parent=39 // pred_fallthru
        _
    $region40: #{tpu_custom_call.1} parent=5 // pred_fallthru
      _
    %p6037 = scmp.le.s32.totalorder 2, %s11
    // Predicated region
    $region45: #{tpu_custom_call.1} parent=5 // pred_check
      %p6038 = pneg %p6037
    $region46: #{tpu_custom_call.1} parent=5 // pred_check_branch
      %6040 = sbr.rel (%p6038) target = $region48
    $region47: #{tpu_custom_call.1} parent=5 // pred_region
      %s6041 = ssub.s32 %s11, 2
      // Predicated region
      $region49: #{tpu_custom_call.1} parent=47 // pred_check
        %p6042 = pneg %p164
      $region50: #{tpu_custom_call.1} parent=47 // pred_check_branch
        %6044 = sbr.rel (%p6042) target = $region52
      $region51: #{tpu_custom_call.1} parent=47 // pred_region
        %s6045 = smul.u32 32, %s23
        %p6046 = scmp.lt.s32.totalorder %s22, 1
        %s6047 = scalar_select %p6046, %s22, 1
        %p6048 = scmp.lt.s32.totalorder %s6045, 127
        %s6049 = scalar_select %p6048, %s6045, 127
        %s6050 = smul.addr %s6047, 128
        %s6051 = sadd.s32 %s6049, %s6050
        %s6052 = smul.addr %s6051, 4
        %s6053 = scalar_lea.vmem %s5, %s6052
      $region52: #{tpu_custom_call.1} parent=47 // pred_fallthru
        _
    $region48: #{tpu_custom_call.1} parent=5 // pred_fallthru
      _
  $region6: #{tpu_custom_call.1} parent=0 // loop_footer
    %s15 = sadd.s32 1, %s11
  $region7: #{tpu_custom_call.1} parent=0 // loop_footer_branch
    %10 = sbr.rel target = $region3
  $region8: #{tpu_custom_call.1} parent=0 // loop_exit
    _

</llo_original>
